<compile_context>
chip_gen: v6e
topology: v6e:2x2x1
jax: 0.10.0
libtpu: 0.0.40
codegen_flags: <defaults>
</compile_context>

<pallas_src>
import jax
import jax.numpy as jnp
from jax.experimental import pallas as pl
from jax.experimental.pallas import tpu as pltpu


def _sigmoid(v):
    return 1.0 / (1.0 + jnp.exp(-v))


def _softplus(v):
    return jnp.maximum(v, 0.0) + jnp.log(1.0 + jnp.exp(-jnp.abs(v)))


def _round_up(n, m):
    return (n + m - 1) // m * m


CHUNK = 8     # timesteps per unrolled recurrence chunk (one sublane group)
LANE = 128    # TPU lane width


def make_mamba_block(batch, seq, dim, d_state, d_conv, d_inner, eps=1e-6,
                     seq_tile=None, single_buffer_weights=True):
    """Build a pallas_call wrapper implementing MambaBlock.forward.

    Weights must be pre-transposed / fused / lane-128-padded by prepare_params.
    """
    d_inner_pad = _round_up(d_inner, LANE)

    if seq_tile is None:
        seq_tile = min(seq, 128)
    assert seq_tile % CHUNK == 0, "seq_tile must be a multiple of 8"
    assert seq % seq_tile == 0, "seq must be a multiple of seq_tile"
    n_seq_tiles = seq // seq_tile
    n_chunks = seq_tile // CHUNK
    hist = d_conv - 1
    assert 0 < hist < CHUNK <= seq_tile

    def kernel(x_ref, nw_ref, wi_ref, cw_ref, cb_ref,
               wx_ref, wdt_ref, bdt_ref, alogT_ref, d_ref, wo_ref,
               out_ref,
               xpad_s, xs_s, dt_s, b_s, c_s, z_s, h_s):
        s_idx = pl.program_id(1)

        # ---- fresh sequence: reset scan state and conv history ----
        @pl.when(s_idx == 0)
        def _():
            h_s[...] = jnp.zeros_like(h_s)
            xpad_s[0:CHUNK, :] = jnp.zeros((CHUNK, d_inner_pad), jnp.float32)

        x = x_ref[0]                                       # (seq_tile, dim) f32

        # ---- RMSNorm (f32) ----
        var = jnp.mean(x * x, axis=-1, keepdims=True)
        xn = x * jax.lax.rsqrt(var + eps) * nw_ref[...]

        # ---- fused in_proj: one MXU matmul, lane-aligned [x | z] split ----
        xz = jnp.dot(xn.astype(jnp.bfloat16), wi_ref[...],
                     preferred_element_type=jnp.float32)   # (seq_tile, 2*Dp)
        xc = xz[:, :d_inner_pad]
        z_s[...] = xz[:, d_inner_pad:]

        # ---- depthwise causal conv1d with cross-tile history in xpad_s ----
        xpad_s[CHUNK:CHUNK + seq_tile, :] = xc
        conv = jnp.zeros((seq_tile, d_inner_pad), jnp.float32) + cb_ref[...]
        for k in range(d_conv):                            # static unroll over taps
            conv = conv + (xpad_s[CHUNK - hist + k:CHUNK - hist + k + seq_tile, :]
                           * cw_ref[k:k + 1, :])
        # save this tile's tail as history for the next tile
        xpad_s[CHUNK - hist:CHUNK, :] = xc[seq_tile - hist:, :]
        xs = conv * _sigmoid(conv)                         # SiLU (f32)
        xs_s[...] = xs

        # ---- fused x_proj: lane-aligned [dt_in | B | C] segments ----
        xbc = jnp.dot(xs.astype(jnp.bfloat16), wx_ref[...],
                      preferred_element_type=jnp.float32)  # (seq_tile, Dp + 2*128)
        dt_in = xbc[:, :d_inner_pad]
        b_s[...] = xbc[:, d_inner_pad:d_inner_pad + LANE]  # lane-dense store
        c_s[...] = xbc[:, d_inner_pad + LANE:]             # lane-dense store

        # ---- dt_proj + softplus (f32 epilogue) ----
        dt_lin = jnp.dot(dt_in.astype(jnp.bfloat16), wdt_ref[...],
                         preferred_element_type=jnp.float32) + bdt_ref[...]
        dt_s[...] = _softplus(dt_lin)

        a_t = -jnp.exp(alogT_ref[...])                     # (d_state, Dp)
        d_row = d_ref[...]                                 # (1, Dp)

        def chunk_body(ci, h):
            base = pl.multiple_of(ci * CHUNK, CHUNK)
            dt_c = dt_s[pl.ds(base, CHUNK), :]             # (8, Dp)
            x_c = xs_s[pl.ds(base, CHUNK), :]              # (8, Dp)
            z_c = z_s[pl.ds(base, CHUNK), :]               # (8, Dp)
            b_c = b_s[pl.ds(base, CHUNK), :][:, :d_state]  # (8, S)
            c_c = c_s[pl.ds(base, CHUNK), :][:, :d_state]  # (8, S)

            # Bulk precompute (EUP exp + VALU outer products) off the serial path.
            # TODO(synk): cast the exp argument to bf16 on v6e/v7x; keep f32 on v5e.
            dA_c = jnp.exp(dt_c[:, None, :] * a_t[None, :, :])     # (8, S, Dp)
            dBx_c = b_c[:, :, None] * (dt_c * x_c)[:, None, :]     # (8, S, Dp)

            hs = []
            for i in range(CHUNK):                         # serial recurrence (unrolled)
                h = h * dA_c[i] + dBx_c[i]                 # (S, Dp)
                hs.append(h)
            h_stack = jnp.stack(hs, axis=0)                # (8, S, Dp)
            # bulk C*h contraction: no tiny M=1 MXU dots, no concatenate
            y_c = jnp.sum(c_c[:, :, None] * h_stack, axis=1) + d_row * x_c

            # fused gate + out_proj + residual (MXU filler during the scan)
            g_c = y_c * (z_c * _sigmoid(z_c))
            o_c = jnp.dot(g_c.astype(jnp.bfloat16), wo_ref[...],
                          preferred_element_type=jnp.float32)      # (8, dim)
            out_ref[0, pl.ds(base, CHUNK), :] = x_ref[0, pl.ds(base, CHUNK), :] + o_c
            return h

        h_s[...] = jax.lax.fori_loop(0, n_chunks, chunk_body, h_s[...])

    def weight_spec(shape):
        kwargs = {}
        if single_buffer_weights:
            # Constant across the grid -> no need to double-buffer the weights.
            kwargs["pipeline_mode"] = pl.Buffered(1)
        return pl.BlockSpec(shape, lambda b, s: (0, 0), **kwargs)

    def call(x, params):
        in_specs = [pl.BlockSpec((1, seq_tile, dim), lambda b, s: (b, s, 0))]
        in_specs += [weight_spec(tuple(p.shape)) for p in params]
        return pl.pallas_call(
            kernel,
            out_shape=jax.ShapeDtypeStruct((batch, seq, dim), jnp.float32),
            grid_spec=pltpu.PrefetchScalarGridSpec(
                num_scalar_prefetch=0,
                grid=(batch, n_seq_tiles),
                in_specs=in_specs,
                out_specs=pl.BlockSpec((1, seq_tile, dim), lambda b, s: (b, s, 0)),
                scratch_shapes=[
                    pltpu.VMEM((CHUNK + seq_tile, d_inner_pad), jnp.float32),  # conv in + history
                    pltpu.VMEM((seq_tile, d_inner_pad), jnp.float32),          # conv + SiLU acts
                    pltpu.VMEM((seq_tile, d_inner_pad), jnp.float32),          # dt
                    pltpu.VMEM((seq_tile, LANE), jnp.float32),                 # B (lane-padded)
                    pltpu.VMEM((seq_tile, LANE), jnp.float32),                 # C (lane-padded)
                    pltpu.VMEM((seq_tile, d_inner_pad), jnp.float32),          # z gate
                    pltpu.VMEM((d_state, d_inner_pad), jnp.float32),           # scan state h
                ],
            ),
            compiler_params=pltpu.CompilerParams(
                dimension_semantics=("parallel", "arbitrary"),  # batch across TCs
                vmem_limit_bytes=48 * 1024 * 1024),
        )(x, *params)

    return call


def prepare_params(W_in, conv_w, conv_b, W_x, W_dt, b_dt, A_log, D, W_out, norm_w,
                   dim, d_state, d_conv, d_inner):
    """Pre-transpose / fuse / lane-128-pad the PyTorch-layout weights (semantics unchanged)."""
    Dp = _round_up(d_inner, LANE)

    wi = jnp.zeros((dim, 2 * Dp), jnp.float32)
    wi = wi.at[:, :d_inner].set(W_in[:d_inner].T)                    # x half
    wi = wi.at[:, Dp:Dp + d_inner].set(W_in[d_inner:].T)             # z half

    cw = jnp.zeros((d_conv, Dp), jnp.float32).at[:, :d_inner].set(conv_w[:, 0, :].T)
    cb = jnp.zeros((1, Dp), jnp.float32).at[0, :d_inner].set(conv_b)

    wx = jnp.zeros((Dp, Dp + 2 * LANE), jnp.float32)
    wx = wx.at[:d_inner, :d_inner].set(W_x[:d_inner].T)                                 # dt
    wx = wx.at[:d_inner, Dp:Dp + d_state].set(W_x[d_inner:d_inner + d_state].T)         # B
    wx = wx.at[:d_inner, Dp + LANE:Dp + LANE + d_state].set(W_x[d_inner + d_state:].T)  # C

    wdt = jnp.zeros((Dp, Dp), jnp.float32).at[:d_inner, :d_inner].set(W_dt.T)
    bdt = jnp.zeros((1, Dp), jnp.float32).at[0, :d_inner].set(b_dt)
    alogT = jnp.zeros((d_state, Dp), jnp.float32).at[:, :d_inner].set(A_log.T)
    dpad = jnp.zeros((1, Dp), jnp.float32).at[0, :d_inner].set(D)
    wo = jnp.zeros((Dp, dim), jnp.float32).at[:d_inner, :].set(W_out.T)

    return (norm_w.reshape(1, dim),
            wi.astype(jnp.bfloat16),
            cw, cb,
            wx.astype(jnp.bfloat16),
            wdt.astype(jnp.bfloat16), bdt,
            alogT, dpad,
            wo.astype(jnp.bfloat16))


if __name__ == "__main__":
    batch, seq, dim = 2, 16, 32
    d_state, d_conv, expand = 16, 4, 2
    d_inner = expand * dim
    eps = 1e-6

    key = jax.random.PRNGKey(0)
    ks = jax.random.split(key, 8)
    x = jax.random.normal(ks[0], (batch, seq, dim), jnp.float32)

    # Deterministic synthetic parameters (shapes follow the PyTorch __init__).
    W_in = jax.random.normal(ks[1], (2 * d_inner, dim), jnp.float32) * 0.02
    conv_w = jax.random.normal(ks[2], (d_inner, 1, d_conv), jnp.float32) * 0.1
    conv_b = jax.random.normal(ks[3], (d_inner,), jnp.float32) * 0.1
    W_x = jax.random.normal(ks[4], (2 * d_state + d_inner, d_inner), jnp.float32) * 0.02
    W_dt = jax.random.normal(ks[5], (d_inner, d_inner), jnp.float32) * 0.02
    b_dt = jax.random.normal(ks[6], (d_inner,), jnp.float32) * 0.1
    W_out = jax.random.normal(ks[7], (dim, d_inner), jnp.float32) * 0.02
    A_log = jnp.log(jnp.tile(jnp.arange(1, d_state + 1, dtype=jnp.float32), (d_inner, 1)))
    D = jnp.ones((d_inner,), jnp.float32)
    norm_w = jnp.ones((dim,), jnp.float32)

    params = prepare_params(W_in, conv_w, conv_b, W_x, W_dt, b_dt, A_log, D,
                            W_out, norm_w, dim, d_state, d_conv, d_inner)

    # seq_tile=8 -> 2 sequence tiles per batch row: exercises the cross-tile
    # carry of the scan state h and the conv history.
    try:
        mamba = make_mamba_block(batch, seq, dim, d_state, d_conv, d_inner, eps,
                                 seq_tile=8, single_buffer_weights=True)
        out = jax.block_until_ready(mamba(x, params))
    except Exception:
        # Compatibility fallback: if this JAX build rejects pl.Buffered(1) for the
        # constant weight blocks, fall back to default (double) buffering.
        mamba = make_mamba_block(batch, seq, dim, d_state, d_conv, d_inner, eps,
                                 seq_tile=8, single_buffer_weights=False)
        out = jax.block_until_ready(mamba(x, params))

    # Pure-JAX f32 reference mirroring the PyTorch forward exactly.
    def reference(x):
        var = jnp.mean(x * x, axis=-1, keepdims=True)
        xn = x * jax.lax.rsqrt(var + eps) * norm_w
        xz = xn @ W_in.T
        xc, z = xz[..., :d_inner], xz[..., d_inner:]
        cwT = conv_w[:, 0, :].T
        xpad = jnp.pad(xc, ((0, 0), (d_conv - 1, 0), (0, 0)))
        conv = jnp.zeros((batch, seq, d_inner), jnp.float32) + conv_b
        for k in range(d_conv):
            conv = conv + xpad[:, k:k + seq, :] * cwT[k]
        xs = conv * jax.nn.sigmoid(conv)
        xpo = xs @ W_x.T
        dt_in = xpo[..., :d_inner]
        Bm = xpo[..., d_inner:d_inner + d_state]
        Cm = xpo[..., d_inner + d_state:]
        dt = jax.nn.softplus(dt_in @ W_dt.T + b_dt)
        A = -jnp.exp(A_log)                                   # (d_inner, d_state)
        h = jnp.zeros((batch, d_inner, d_state), jnp.float32)
        ys = []
        for t in range(seq):
            dA = jnp.exp(dt[:, t, :, None] * A[None])
            dB = dt[:, t, :, None] * Bm[:, t, None, :]
            h = h * dA + dB * xs[:, t, :, None]
            ys.append(jnp.sum(h * Cm[:, t, None, :], axis=-1) + D * xs[:, t, :])
        y = jnp.stack(ys, axis=1)
        y = y * (z * jax.nn.sigmoid(z))
        return x + y @ W_out.T

    ref = reference(x)
    max_err = float(jnp.max(jnp.abs(out - ref)))
    # bf16 MXU operands with f32 accumulation -> compare vs f32 reference at 1e-2.
    assert jnp.allclose(out, ref, rtol=1e-2, atol=1e-2), f"max abs err {max_err}"
    print("KERNEL_OK")
</pallas_src>

<mosaic_0001>
module attributes {stable_mosaic.version = 11 : i64} {
  func.func @kernel(%arg0: i32, %arg1: i32, %arg2: memref<1x8x32xf32, #tpu.memory_space<vmem>>, %arg3: memref<1x32xf32, #tpu.memory_space<vmem>>, %arg4: memref<32x256xbf16, #tpu.memory_space<vmem>>, %arg5: memref<4x128xf32, #tpu.memory_space<vmem>>, %arg6: memref<1x128xf32, #tpu.memory_space<vmem>>, %arg7: memref<128x384xbf16, #tpu.memory_space<vmem>>, %arg8: memref<128x128xbf16, #tpu.memory_space<vmem>>, %arg9: memref<1x128xf32, #tpu.memory_space<vmem>>, %arg10: memref<16x128xf32, #tpu.memory_space<vmem>>, %arg11: memref<1x128xf32, #tpu.memory_space<vmem>>, %arg12: memref<128x32xbf16, #tpu.memory_space<vmem>>, %arg13: memref<1x8x32xf32, #tpu.memory_space<vmem>>, %arg14: memref<16x128xf32, #tpu.memory_space<vmem>>, %arg15: memref<8x128xf32, #tpu.memory_space<vmem>>, %arg16: memref<8x128xf32, #tpu.memory_space<vmem>>, %arg17: memref<8x128xf32, #tpu.memory_space<vmem>>, %arg18: memref<8x128xf32, #tpu.memory_space<vmem>>, %arg19: memref<8x128xf32, #tpu.memory_space<vmem>>, %arg20: memref<16x128xf32, #tpu.memory_space<vmem>>) attributes {dimension_semantics = [#tpu.dimension_semantics<parallel>, #tpu.dimension_semantics<arbitrary>], iteration_bounds = array<i64: 2, 2>, scalar_prefetch = 0 : i64, scratch_operands = 7 : i64, tpu.core_type = #tpu.core_type<tc>, window_params = [{transform_indices = @transform_0, window_bounds = array<i64: 1, 8, 32>}, {pipeline_mode = #tpu.pipeline_mode<synchronous>, transform_indices = @transform_1, window_bounds = array<i64: 1, 32>}, {pipeline_mode = #tpu.pipeline_mode<synchronous>, transform_indices = @transform_2, window_bounds = array<i64: 32, 256>}, {pipeline_mode = #tpu.pipeline_mode<synchronous>, transform_indices = @transform_3, window_bounds = array<i64: 4, 128>}, {pipeline_mode = #tpu.pipeline_mode<synchronous>, transform_indices = @transform_4, window_bounds = array<i64: 1, 128>}, {pipeline_mode = #tpu.pipeline_mode<synchronous>, transform_indices = @transform_5, window_bounds = array<i64: 128, 384>}, {pipeline_mode = #tpu.pipeline_mode<synchronous>, transform_indices = @transform_6, window_bounds = array<i64: 128, 128>}, {pipeline_mode = #tpu.pipeline_mode<synchronous>, transform_indices = @transform_7, window_bounds = array<i64: 1, 128>}, {pipeline_mode = #tpu.pipeline_mode<synchronous>, transform_indices = @transform_8, window_bounds = array<i64: 16, 128>}, {pipeline_mode = #tpu.pipeline_mode<synchronous>, transform_indices = @transform_9, window_bounds = array<i64: 1, 128>}, {pipeline_mode = #tpu.pipeline_mode<synchronous>, transform_indices = @transform_10, window_bounds = array<i64: 128, 32>}, {transform_indices = @transform_11, window_bounds = array<i64: 1, 8, 32>}]} {
    %c0_i32 = arith.constant 0 : i32
    %0 = arith.cmpi eq, %arg1, %c0_i32 : i32
    %1 = arith.extui %0 : i1 to i32
    %c0_i32_0 = arith.constant 0 : i32
    %2 = arith.cmpi ne, %1, %c0_i32_0 : i32
    scf.if %2 {
      %cst_76 = arith.constant 0.000000e+00 : f32
      %202 = vector.broadcast %cst_76 : f32 to vector<16x128xf32>
      %c0_77 = arith.constant 0 : index
      %c0_78 = arith.constant 0 : index
      %203 = vector.load %arg20[%c0_77, %c0_78] : memref<16x128xf32, #tpu.memory_space<vmem>>, vector<16x128xf32>
      tpu.vector_store %arg20[%c0_77, %c0_78], %202 {strides = array<i32>} : memref<16x128xf32, #tpu.memory_space<vmem>>, vector<16x128xf32>,
      %cst_79 = arith.constant 0.000000e+00 : f32
      %204 = vector.broadcast %cst_79 : f32 to vector<8x128xf32>
      %c0_80 = arith.constant 0 : index
      %c0_81 = arith.constant 0 : index
      %205 = vector.load %arg14[%c0_80, %c0_81] : memref<16x128xf32, #tpu.memory_space<vmem>>, vector<8x128xf32>
      tpu.vector_store %arg14[%c0_80, %c0_81], %204 {strides = array<i32>} : memref<16x128xf32, #tpu.memory_space<vmem>>, vector<8x128xf32>,
    } else {
    }
    %c0 = arith.constant 0 : index
    %c0_1 = arith.constant 0 : index
    %c0_2 = arith.constant 0 : index
    %3 = vector.load %arg2[%c0, %c0_1, %c0_2] : memref<1x8x32xf32, #tpu.memory_space<vmem>>, vector<1x8x32xf32>
    %4 = vector.shape_cast %3 : vector<1x8x32xf32> to vector<8x32xf32>
    %5 = arith.mulf %4, %4 : vector<8x32xf32>
    %cst = arith.constant dense<0.000000e+00> : vector<8xf32>
    %6 = vector.multi_reduction <add>, %5, %cst [1] : vector<8x32xf32> to vector<8xf32>
    %7 = vector.shape_cast %6 : vector<8xf32> to vector<8x1xf32>
    %cst_3 = arith.constant 3.200000e+01 : f32
    %8 = vector.broadcast %cst_3 : f32 to vector<8x1xf32>
    %9 = arith.divf %7, %8 : vector<8x1xf32>
    %cst_4 = arith.constant 9.99999997E-7 : f32
    %10 = vector.broadcast %cst_4 : f32 to vector<8x1xf32>
    %11 = arith.addf %9, %10 : vector<8x1xf32>
    %12 = math.rsqrt %11 : vector<8x1xf32>
    %13 = vector.broadcast %12 : vector<8x1xf32> to vector<8x32xf32>
    %14 = arith.mulf %4, %13 : vector<8x32xf32>
    %c0_5 = arith.constant 0 : index
    %c0_6 = arith.constant 0 : index
    %15 = vector.load %arg3[%c0_5, %c0_6] : memref<1x32xf32, #tpu.memory_space<vmem>>, vector<1x32xf32>
    %16 = vector.broadcast %15 : vector<1x32xf32> to vector<8x32xf32>
    %17 = arith.mulf %14, %16 : vector<8x32xf32>
    %18 = arith.truncf %17 : vector<8x32xf32> to vector<8x32xbf16>
    %c0_7 = arith.constant 0 : index
    %c0_8 = arith.constant 0 : index
    %19 = vector.load %arg4[%c0_7, %c0_8] : memref<32x256xbf16, #tpu.memory_space<vmem>>, vector<32x256xbf16>
    %cst_9 = arith.constant dense<0.000000e+00> : vector<8x256xf32>
    %20 = tpu.matmul %18, %19, %cst_9 {dimension_numbers = #tpu.dot_dimension_numbers<[1], [0], [0], [1], [0, 0, 1, 1], [], []>} : vector<8x32xbf16>, vector<32x256xbf16>, vector<8x256xf32> -> vector<8x256xf32>
    %21 = vector.extract_strided_slice %20 {offsets = [0, 0], sizes = [8, 128], strides = [1, 1]} : vector<8x256xf32> to vector<8x128xf32>
    %22 = vector.extract_strided_slice %20 {offsets = [0, 128], sizes = [8, 128], strides = [1, 1]} : vector<8x256xf32> to vector<8x128xf32>
    %c0_10 = arith.constant 0 : index
    %c0_11 = arith.constant 0 : index
    %23 = vector.load %arg19[%c0_10, %c0_11] : memref<8x128xf32, #tpu.memory_space<vmem>>, vector<8x128xf32>
    tpu.vector_store %arg19[%c0_10, %c0_11], %22 {strides = array<i32>} : memref<8x128xf32, #tpu.memory_space<vmem>>, vector<8x128xf32>,
    %c8 = arith.constant 8 : index
    %c0_12 = arith.constant 0 : index
    %24 = vector.load %arg14[%c8, %c0_12] : memref<16x128xf32, #tpu.memory_space<vmem>>, vector<8x128xf32>
    tpu.vector_store %arg14[%c8, %c0_12], %21 {strides = array<i32>} : memref<16x128xf32, #tpu.memory_space<vmem>>, vector<8x128xf32>,
    %cst_13 = arith.constant 0.000000e+00 : f32
    %25 = vector.broadcast %cst_13 : f32 to vector<8x128xf32>
    %c0_14 = arith.constant 0 : index
    %c0_15 = arith.constant 0 : index
    %26 = vector.load %arg6[%c0_14, %c0_15] : memref<1x128xf32, #tpu.memory_space<vmem>>, vector<1x128xf32>
    %27 = vector.broadcast %26 : vector<1x128xf32> to vector<8x128xf32>
    %28 = arith.addf %25, %27 : vector<8x128xf32>
    %c5 = arith.constant 5 : index
    %c0_16 = arith.constant 0 : index
    %29 = vector.load %arg14[%c5, %c0_16] : memref<16x128xf32, #tpu.memory_space<vmem>>, vector<8x128xf32>
    %c0_17 = arith.constant 0 : index
    %c0_18 = arith.constant 0 : index
    %30 = vector.load %arg5[%c0_17, %c0_18] : memref<4x128xf32, #tpu.memory_space<vmem>>, vector<1x128xf32>
    %31 = vector.broadcast %30 : vector<1x128xf32> to vector<8x128xf32>
    %32 = arith.mulf %29, %31 : vector<8x128xf32>
    %33 = arith.addf %28, %32 : vector<8x128xf32>
    %c6 = arith.constant 6 : index
    %c0_19 = arith.constant 0 : index
    %34 = vector.load %arg14[%c6, %c0_19] : memref<16x128xf32, #tpu.memory_space<vmem>>, vector<8x128xf32>
    %c1 = arith.constant 1 : index
    %c0_20 = arith.constant 0 : index
    %35 = vector.load %arg5[%c1, %c0_20] : memref<4x128xf32, #tpu.memory_space<vmem>>, vector<1x128xf32>
    %36 = vector.broadcast %35 : vector<1x128xf32> to vector<8x128xf32>
    %37 = arith.mulf %34, %36 : vector<8x128xf32>
    %38 = arith.addf %33, %37 : vector<8x128xf32>
    %c7 = arith.constant 7 : index
    %c0_21 = arith.constant 0 : index
    %39 = vector.load %arg14[%c7, %c0_21] : memref<16x128xf32, #tpu.memory_space<vmem>>, vector<8x128xf32>
    %c2 = arith.constant 2 : index
    %c0_22 = arith.constant 0 : index
    %40 = vector.load %arg5[%c2, %c0_22] : memref<4x128xf32, #tpu.memory_space<vmem>>, vector<1x128xf32>
    %41 = vector.broadcast %40 : vector<1x128xf32> to vector<8x128xf32>
    %42 = arith.mulf %39, %41 : vector<8x128xf32>
    %43 = arith.addf %38, %42 : vector<8x128xf32>
    %c8_23 = arith.constant 8 : index
    %c0_24 = arith.constant 0 : index
    %44 = vector.load %arg14[%c8_23, %c0_24] : memref<16x128xf32, #tpu.memory_space<vmem>>, vector<8x128xf32>
    %c3 = arith.constant 3 : index
    %c0_25 = arith.constant 0 : index
    %45 = vector.load %arg5[%c3, %c0_25] : memref<4x128xf32, #tpu.memory_space<vmem>>, vector<1x128xf32>
    %46 = vector.broadcast %45 : vector<1x128xf32> to vector<8x128xf32>
    %47 = arith.mulf %44, %46 : vector<8x128xf32>
    %48 = arith.addf %43, %47 : vector<8x128xf32>
    %49 = vector.extract_strided_slice %21 {offsets = [5, 0], sizes = [3, 128], strides = [1, 1]} : vector<8x128xf32> to vector<3x128xf32>
    %c5_26 = arith.constant 5 : index
    %c0_27 = arith.constant 0 : index
    %50 = vector.load %arg14[%c5_26, %c0_27] : memref<16x128xf32, #tpu.memory_space<vmem>>, vector<3x128xf32>
    tpu.vector_store %arg14[%c5_26, %c0_27], %49 {strides = array<i32>} : memref<16x128xf32, #tpu.memory_space<vmem>>, vector<3x128xf32>,
    %cst_28 = arith.constant 0.000000e+00 : f32
    %51 = vector.broadcast %cst_28 : f32 to vector<8x128xf32>
    %52 = arith.subf %51, %48 : vector<8x128xf32>
    %53 = math.exp %52 : vector<8x128xf32>
    %cst_29 = arith.constant 1.000000e+00 : f32
    %54 = vector.broadcast %cst_29 : f32 to vector<8x128xf32>
    %55 = arith.addf %54, %53 : vector<8x128xf32>
    %cst_30 = arith.constant 1.000000e+00 : f32
    %56 = vector.broadcast %cst_30 : f32 to vector<8x128xf32>
    %57 = arith.divf %56, %55 : vector<8x128xf32>
    %58 = arith.mulf %48, %57 : vector<8x128xf32>
    %c0_31 = arith.constant 0 : index
    %c0_32 = arith.constant 0 : index
    %59 = vector.load %arg15[%c0_31, %c0_32] : memref<8x128xf32, #tpu.memory_space<vmem>>, vector<8x128xf32>
    tpu.vector_store %arg15[%c0_31, %c0_32], %58 {strides = array<i32>} : memref<8x128xf32, #tpu.memory_space<vmem>>, vector<8x128xf32>,
    %60 = arith.truncf %58 : vector<8x128xf32> to vector<8x128xbf16>
    %c0_33 = arith.constant 0 : index
    %c0_34 = arith.constant 0 : index
    %61 = vector.load %arg7[%c0_33, %c0_34] : memref<128x384xbf16, #tpu.memory_space<vmem>>, vector<128x384xbf16>
    %cst_35 = arith.constant dense<0.000000e+00> : vector<8x384xf32>
    %62 = tpu.matmul %60, %61, %cst_35 {dimension_numbers = #tpu.dot_dimension_numbers<[1], [0], [0], [1], [0, 0, 1, 1], [], []>} : vector<8x128xbf16>, vector<128x384xbf16>, vector<8x384xf32> -> vector<8x384xf32>
    %63 = vector.extract_strided_slice %62 {offsets = [0, 0], sizes = [8, 128], strides = [1, 1]} : vector<8x384xf32> to vector<8x128xf32>
    %64 = vector.extract_strided_slice %62 {offsets = [0, 128], sizes = [8, 128], strides = [1, 1]} : vector<8x384xf32> to vector<8x128xf32>
    %c0_36 = arith.constant 0 : index
    %c0_37 = arith.constant 0 : index
    %65 = vector.load %arg17[%c0_36, %c0_37] : memref<8x128xf32, #tpu.memory_space<vmem>>, vector<8x128xf32>
    tpu.vector_store %arg17[%c0_36, %c0_37], %64 {strides = array<i32>} : memref<8x128xf32, #tpu.memory_space<vmem>>, vector<8x128xf32>,
    %66 = vector.extract_strided_slice %62 {offsets = [0, 256], sizes = [8, 128], strides = [1, 1]} : vector<8x384xf32> to vector<8x128xf32>
    %c0_38 = arith.constant 0 : index
    %c0_39 = arith.constant 0 : index
    %67 = vector.load %arg18[%c0_38, %c0_39] : memref<8x128xf32, #tpu.memory_space<vmem>>, vector<8x128xf32>
    tpu.vector_store %arg18[%c0_38, %c0_39], %66 {strides = array<i32>} : memref<8x128xf32, #tpu.memory_space<vmem>>, vector<8x128xf32>,
    %68 = arith.truncf %63 : vector<8x128xf32> to vector<8x128xbf16>
    %c0_40 = arith.constant 0 : index
    %c0_41 = arith.constant 0 : index
    %69 = vector.load %arg8[%c0_40, %c0_41] : memref<128x128xbf16, #tpu.memory_space<vmem>>, vector<128x128xbf16>
    %cst_42 = arith.constant dense<0.000000e+00> : vector<8x128xf32>
    %70 = tpu.matmul %68, %69, %cst_42 {dimension_numbers = #tpu.dot_dimension_numbers<[1], [0], [0], [1], [0, 0, 1, 1], [], []>} : vector<8x128xbf16>, vector<128x128xbf16>, vector<8x128xf32> -> vector<8x128xf32>
    %c0_43 = arith.constant 0 : index
    %c0_44 = arith.constant 0 : index
    %71 = vector.load %arg9[%c0_43, %c0_44] : memref<1x128xf32, #tpu.memory_space<vmem>>, vector<1x128xf32>
    %72 = vector.broadcast %71 : vector<1x128xf32> to vector<8x128xf32>
    %73 = arith.addf %70, %72 : vector<8x128xf32>
    %cst_45 = arith.constant 0.000000e+00 : f32
    %74 = vector.broadcast %cst_45 : f32 to vector<8x128xf32>
    %75 = arith.maximumf %73, %74 : vector<8x128xf32>
    %76 = math.absf %73 : vector<8x128xf32>
    %cst_46 = arith.constant 0.000000e+00 : f32
    %77 = vector.broadcast %cst_46 : f32 to vector<8x128xf32>
    %78 = arith.subf %77, %76 : vector<8x128xf32>
    %79 = math.exp %78 : vector<8x128xf32>
    %cst_47 = arith.constant 1.000000e+00 : f32
    %80 = vector.broadcast %cst_47 : f32 to vector<8x128xf32>
    %81 = arith.addf %80, %79 : vector<8x128xf32>
    %82 = math.log %81 : vector<8x128xf32>
    %83 = arith.addf %75, %82 : vector<8x128xf32>
    %c0_48 = arith.constant 0 : index
    %c0_49 = arith.constant 0 : index
    %84 = vector.load %arg16[%c0_48, %c0_49] : memref<8x128xf32, #tpu.memory_space<vmem>>, vector<8x128xf32>
    tpu.vector_store %arg16[%c0_48, %c0_49], %83 {strides = array<i32>} : memref<8x128xf32, #tpu.memory_space<vmem>>, vector<8x128xf32>,
    %c0_50 = arith.constant 0 : index
    %c0_51 = arith.constant 0 : index
    %85 = vector.load %arg10[%c0_50, %c0_51] : memref<16x128xf32, #tpu.memory_space<vmem>>, vector<16x128xf32>
    %86 = math.exp %85 : vector<16x128xf32>
    %cst_52 = arith.constant 0.000000e+00 : f32
    %87 = vector.broadcast %cst_52 : f32 to vector<16x128xf32>
    %88 = arith.subf %87, %86 : vector<16x128xf32>
    %c0_53 = arith.constant 0 : index
    %c0_54 = arith.constant 0 : index
    %89 = vector.load %arg11[%c0_53, %c0_54] : memref<1x128xf32, #tpu.memory_space<vmem>>, vector<1x128xf32>
    %c0_55 = arith.constant 0 : index
    %c0_56 = arith.constant 0 : index
    %90 = vector.load %arg20[%c0_55, %c0_56] : memref<16x128xf32, #tpu.memory_space<vmem>>, vector<16x128xf32>
    %c0_i32_57 = arith.constant 0 : i32
    %c8_i32 = arith.constant 8 : i32
    %91 = arith.muli %c0_i32_57, %c8_i32 : i32
    %92 = tpu.assume_multiple %91, 8 : i32
    %93 = arith.index_cast %92 : i32 to index
    %c0_58 = arith.constant 0 : index
    %94 = vector.load %arg16[%93, %c0_58] : memref<8x128xf32, #tpu.memory_space<vmem>>, vector<8x128xf32>
    %95 = arith.index_cast %92 : i32 to index
    %c0_59 = arith.constant 0 : index
    %96 = vector.load %arg15[%95, %c0_59] : memref<8x128xf32, #tpu.memory_space<vmem>>, vector<8x128xf32>
    %97 = arith.index_cast %92 : i32 to index
    %c0_60 = arith.constant 0 : index
    %98 = vector.load %arg19[%97, %c0_60] : memref<8x128xf32, #tpu.memory_space<vmem>>, vector<8x128xf32>
    %99 = arith.index_cast %92 : i32 to index
    %c0_61 = arith.constant 0 : index
    %100 = vector.load %arg17[%99, %c0_61] : memref<8x128xf32, #tpu.memory_space<vmem>>, vector<8x128xf32>
    %101 = vector.extract_strided_slice %100 {offsets = [0, 0], sizes = [8, 16], strides = [1, 1]} : vector<8x128xf32> to vector<8x16xf32>
    %102 = arith.index_cast %92 : i32 to index
    %c0_62 = arith.constant 0 : index
    %103 = vector.load %arg18[%102, %c0_62] : memref<8x128xf32, #tpu.memory_space<vmem>>, vector<8x128xf32>
    %104 = vector.extract_strided_slice %103 {offsets = [0, 0], sizes = [8, 16], strides = [1, 1]} : vector<8x128xf32> to vector<8x16xf32>
    %105 = vector.shape_cast %94 : vector<8x128xf32> to vector<8x1x128xf32>
    %106 = vector.shape_cast %88 : vector<16x128xf32> to vector<1x16x128xf32>
    %107 = vector.broadcast %105 : vector<8x1x128xf32> to vector<8x16x128xf32>
    %108 = vector.broadcast %106 : vector<1x16x128xf32> to vector<8x16x128xf32>
    %109 = arith.mulf %107, %108 : vector<8x16x128xf32>
    %110 = math.exp %109 : vector<8x16x128xf32>
    %111 = vector.shape_cast %101 : vector<8x16xf32> to vector<8x16x1xf32>
    %112 = arith.mulf %94, %96 : vector<8x128xf32>
    %113 = vector.shape_cast %112 : vector<8x128xf32> to vector<8x1x128xf32>
    %114 = vector.broadcast %111 : vector<8x16x1xf32> to vector<8x16x128xf32>
    %115 = vector.broadcast %113 : vector<8x1x128xf32> to vector<8x16x128xf32>
    %116 = arith.mulf %114, %115 : vector<8x16x128xf32>
    %117 = vector.extract_strided_slice %110 {offsets = [0, 0, 0], sizes = [1, 16, 128], strides = [1, 1, 1]} : vector<8x16x128xf32> to vector<1x16x128xf32>
    %118 = vector.shape_cast %117 : vector<1x16x128xf32> to vector<16x128xf32>
    %119 = arith.mulf %90, %118 : vector<16x128xf32>
    %120 = vector.extract_strided_slice %116 {offsets = [0, 0, 0], sizes = [1, 16, 128], strides = [1, 1, 1]} : vector<8x16x128xf32> to vector<1x16x128xf32>
    %121 = vector.shape_cast %120 : vector<1x16x128xf32> to vector<16x128xf32>
    %122 = arith.addf %119, %121 : vector<16x128xf32>
    %123 = vector.extract_strided_slice %110 {offsets = [1, 0, 0], sizes = [1, 16, 128], strides = [1, 1, 1]} : vector<8x16x128xf32> to vector<1x16x128xf32>
    %124 = vector.shape_cast %123 : vector<1x16x128xf32> to vector<16x128xf32>
    %125 = arith.mulf %122, %124 : vector<16x128xf32>
    %126 = vector.extract_strided_slice %116 {offsets = [1, 0, 0], sizes = [1, 16, 128], strides = [1, 1, 1]} : vector<8x16x128xf32> to vector<1x16x128xf32>
    %127 = vector.shape_cast %126 : vector<1x16x128xf32> to vector<16x128xf32>
    %128 = arith.addf %125, %127 : vector<16x128xf32>
    %129 = vector.extract_strided_slice %110 {offsets = [2, 0, 0], sizes = [1, 16, 128], strides = [1, 1, 1]} : vector<8x16x128xf32> to vector<1x16x128xf32>
    %130 = vector.shape_cast %129 : vector<1x16x128xf32> to vector<16x128xf32>
    %131 = arith.mulf %128, %130 : vector<16x128xf32>
    %132 = vector.extract_strided_slice %116 {offsets = [2, 0, 0], sizes = [1, 16, 128], strides = [1, 1, 1]} : vector<8x16x128xf32> to vector<1x16x128xf32>
    %133 = vector.shape_cast %132 : vector<1x16x128xf32> to vector<16x128xf32>
    %134 = arith.addf %131, %133 : vector<16x128xf32>
    %135 = vector.extract_strided_slice %110 {offsets = [3, 0, 0], sizes = [1, 16, 128], strides = [1, 1, 1]} : vector<8x16x128xf32> to vector<1x16x128xf32>
    %136 = vector.shape_cast %135 : vector<1x16x128xf32> to vector<16x128xf32>
    %137 = arith.mulf %134, %136 : vector<16x128xf32>
    %138 = vector.extract_strided_slice %116 {offsets = [3, 0, 0], sizes = [1, 16, 128], strides = [1, 1, 1]} : vector<8x16x128xf32> to vector<1x16x128xf32>
    %139 = vector.shape_cast %138 : vector<1x16x128xf32> to vector<16x128xf32>
    %140 = arith.addf %137, %139 : vector<16x128xf32>
    %141 = vector.extract_strided_slice %110 {offsets = [4, 0, 0], sizes = [1, 16, 128], strides = [1, 1, 1]} : vector<8x16x128xf32> to vector<1x16x128xf32>
    %142 = vector.shape_cast %141 : vector<1x16x128xf32> to vector<16x128xf32>
    %143 = arith.mulf %140, %142 : vector<16x128xf32>
    %144 = vector.extract_strided_slice %116 {offsets = [4, 0, 0], sizes = [1, 16, 128], strides = [1, 1, 1]} : vector<8x16x128xf32> to vector<1x16x128xf32>
    %145 = vector.shape_cast %144 : vector<1x16x128xf32> to vector<16x128xf32>
    %146 = arith.addf %143, %145 : vector<16x128xf32>
    %147 = vector.extract_strided_slice %110 {offsets = [5, 0, 0], sizes = [1, 16, 128], strides = [1, 1, 1]} : vector<8x16x128xf32> to vector<1x16x128xf32>
    %148 = vector.shape_cast %147 : vector<1x16x128xf32> to vector<16x128xf32>
    %149 = arith.mulf %146, %148 : vector<16x128xf32>
    %150 = vector.extract_strided_slice %116 {offsets = [5, 0, 0], sizes = [1, 16, 128], strides = [1, 1, 1]} : vector<8x16x128xf32> to vector<1x16x128xf32>
    %151 = vector.shape_cast %150 : vector<1x16x128xf32> to vector<16x128xf32>
    %152 = arith.addf %149, %151 : vector<16x128xf32>
    %153 = vector.extract_strided_slice %110 {offsets = [6, 0, 0], sizes = [1, 16, 128], strides = [1, 1, 1]} : vector<8x16x128xf32> to vector<1x16x128xf32>
    %154 = vector.shape_cast %153 : vector<1x16x128xf32> to vector<16x128xf32>
    %155 = arith.mulf %152, %154 : vector<16x128xf32>
    %156 = vector.extract_strided_slice %116 {offsets = [6, 0, 0], sizes = [1, 16, 128], strides = [1, 1, 1]} : vector<8x16x128xf32> to vector<1x16x128xf32>
    %157 = vector.shape_cast %156 : vector<1x16x128xf32> to vector<16x128xf32>
    %158 = arith.addf %155, %157 : vector<16x128xf32>
    %159 = vector.extract_strided_slice %110 {offsets = [7, 0, 0], sizes = [1, 16, 128], strides = [1, 1, 1]} : vector<8x16x128xf32> to vector<1x16x128xf32>
    %160 = vector.shape_cast %159 : vector<1x16x128xf32> to vector<16x128xf32>
    %161 = arith.mulf %158, %160 : vector<16x128xf32>
    %162 = vector.extract_strided_slice %116 {offsets = [7, 0, 0], sizes = [1, 16, 128], strides = [1, 1, 1]} : vector<8x16x128xf32> to vector<1x16x128xf32>
    %163 = vector.shape_cast %162 : vector<1x16x128xf32> to vector<16x128xf32>
    %164 = arith.addf %161, %163 : vector<16x128xf32>
    %165 = vector.shape_cast %122 : vector<16x128xf32> to vector<1x16x128xf32>
    %166 = vector.shape_cast %128 : vector<16x128xf32> to vector<1x16x128xf32>
    %167 = vector.shape_cast %134 : vector<16x128xf32> to vector<1x16x128xf32>
    %168 = vector.shape_cast %140 : vector<16x128xf32> to vector<1x16x128xf32>
    %169 = vector.shape_cast %146 : vector<16x128xf32> to vector<1x16x128xf32>
    %170 = vector.shape_cast %152 : vector<16x128xf32> to vector<1x16x128xf32>
    %171 = vector.shape_cast %158 : vector<16x128xf32> to vector<1x16x128xf32>
    %172 = vector.shape_cast %164 : vector<16x128xf32> to vector<1x16x128xf32>
    %173 = tpu.concatenate %165, %166, %167, %168, %169, %170, %171, %172 in 0 : vector<1x16x128xf32>, vector<1x16x128xf32>, vector<1x16x128xf32>, vector<1x16x128xf32>, vector<1x16x128xf32>, vector<1x16x128xf32>, vector<1x16x128xf32>, vector<1x16x128xf32> -> vector<8x16x128xf32>
    %174 = vector.shape_cast %104 : vector<8x16xf32> to vector<8x16x1xf32>
    %175 = vector.broadcast %174 : vector<8x16x1xf32> to vector<8x16x128xf32>
    %176 = arith.mulf %175, %173 : vector<8x16x128xf32>
    %cst_63 = arith.constant dense<0.000000e+00> : vector<8x128xf32>
    %177 = vector.multi_reduction <add>, %176, %cst_63 [1] : vector<8x16x128xf32> to vector<8x128xf32>
    %178 = vector.broadcast %89 : vector<1x128xf32> to vector<8x128xf32>
    %179 = arith.mulf %178, %96 : vector<8x128xf32>
    %180 = arith.addf %177, %179 : vector<8x128xf32>
    %cst_64 = arith.constant 0.000000e+00 : f32
    %181 = vector.broadcast %cst_64 : f32 to vector<8x128xf32>
    %182 = arith.subf %181, %98 : vector<8x128xf32>
    %183 = math.exp %182 : vector<8x128xf32>
    %cst_65 = arith.constant 1.000000e+00 : f32
    %184 = vector.broadcast %cst_65 : f32 to vector<8x128xf32>
    %185 = arith.addf %184, %183 : vector<8x128xf32>
    %cst_66 = arith.constant 1.000000e+00 : f32
    %186 = vector.broadcast %cst_66 : f32 to vector<8x128xf32>
    %187 = arith.divf %186, %185 : vector<8x128xf32>
    %188 = arith.mulf %98, %187 : vector<8x128xf32>
    %189 = arith.mulf %180, %188 : vector<8x128xf32>
    %190 = arith.truncf %189 : vector<8x128xf32> to vector<8x128xbf16>
    %c0_67 = arith.constant 0 : index
    %c0_68 = arith.constant 0 : index
    %191 = vector.load %arg12[%c0_67, %c0_68] : memref<128x32xbf16, #tpu.memory_space<vmem>>, vector<128x32xbf16>
    %cst_69 = arith.constant dense<0.000000e+00> : vector<8x32xf32>
    %192 = tpu.matmul %190, %191, %cst_69 {dimension_numbers = #tpu.dot_dimension_numbers<[1], [0], [0], [1], [0, 0, 1, 1], [], []>} : vector<8x128xbf16>, vector<128x32xbf16>, vector<8x32xf32> -> vector<8x32xf32>
    %c0_70 = arith.constant 0 : index
    %193 = arith.index_cast %92 : i32 to index
    %c0_71 = arith.constant 0 : index
    %194 = vector.load %arg2[%c0_70, %193, %c0_71] : memref<1x8x32xf32, #tpu.memory_space<vmem>>, vector<1x8x32xf32>
    %195 = vector.shape_cast %194 : vector<1x8x32xf32> to vector<8x32xf32>
    %196 = arith.addf %195, %192 : vector<8x32xf32>
    %c0_72 = arith.constant 0 : index
    %197 = arith.index_cast %92 : i32 to index
    %c0_73 = arith.constant 0 : index
    %198 = vector.load %arg13[%c0_72, %197, %c0_73] : memref<1x8x32xf32, #tpu.memory_space<vmem>>, vector<1x8x32xf32>
    %199 = vector.shape_cast %198 : vector<1x8x32xf32> to vector<8x32xf32>
    %200 = vector.shape_cast %196 : vector<8x32xf32> to vector<1x8x32xf32>
    tpu.vector_store %arg13[%c0_72, %197, %c0_73], %200 {strides = array<i32>} : memref<1x8x32xf32, #tpu.memory_space<vmem>>, vector<1x8x32xf32>,
    %c1_i32 = arith.constant 1 : i32
    %c0_74 = arith.constant 0 : index
    %c0_75 = arith.constant 0 : index
    %201 = vector.load %arg20[%c0_74, %c0_75] : memref<16x128xf32, #tpu.memory_space<vmem>>, vector<16x128xf32>
    tpu.vector_store %arg20[%c0_74, %c0_75], %164 {strides = array<i32>} : memref<16x128xf32, #tpu.memory_space<vmem>>, vector<16x128xf32>,
    return
  }
  func.func @transform_0(%arg0: i32, %arg1: i32) -> (i32, i32, i32) {
    %c0_i32 = arith.constant 0 : i32
    %c0_i32_0 = arith.constant 0 : i32
    return %arg0, %arg1, %c0_i32 : i32, i32, i32
  }
  func.func @transform_1(%arg0: i32, %arg1: i32) -> (i32, i32) {
    %c0_i32 = arith.constant 0 : i32
    %c0_i32_0 = arith.constant 0 : i32
    %c0_i32_1 = arith.constant 0 : i32
    return %c0_i32, %c0_i32_0 : i32, i32
  }
  func.func @transform_2(%arg0: i32, %arg1: i32) -> (i32, i32) {
    %c0_i32 = arith.constant 0 : i32
    %c0_i32_0 = arith.constant 0 : i32
    %c0_i32_1 = arith.constant 0 : i32
    return %c0_i32, %c0_i32_0 : i32, i32
  }
  func.func @transform_3(%arg0: i32, %arg1: i32) -> (i32, i32) {
    %c0_i32 = arith.constant 0 : i32
    %c0_i32_0 = arith.constant 0 : i32
    %c0_i32_1 = arith.constant 0 : i32
    return %c0_i32, %c0_i32_0 : i32, i32
  }
  func.func @transform_4(%arg0: i32, %arg1: i32) -> (i32, i32) {
    %c0_i32 = arith.constant 0 : i32
    %c0_i32_0 = arith.constant 0 : i32
    %c0_i32_1 = arith.constant 0 : i32
    return %c0_i32, %c0_i32_0 : i32, i32
  }
  func.func @transform_5(%arg0: i32, %arg1: i32) -> (i32, i32) {
    %c0_i32 = arith.constant 0 : i32
    %c0_i32_0 = arith.constant 0 : i32
    %c0_i32_1 = arith.constant 0 : i32
    return %c0_i32, %c0_i32_0 : i32, i32
  }
  func.func @transform_6(%arg0: i32, %arg1: i32) -> (i32, i32) {
    %c0_i32 = arith.constant 0 : i32
    %c0_i32_0 = arith.constant 0 : i32
    %c0_i32_1 = arith.constant 0 : i32
    return %c0_i32, %c0_i32_0 : i32, i32
  }
  func.func @transform_7(%arg0: i32, %arg1: i32) -> (i32, i32) {
    %c0_i32 = arith.constant 0 : i32
    %c0_i32_0 = arith.constant 0 : i32
    %c0_i32_1 = arith.constant 0 : i32
    return %c0_i32, %c0_i32_0 : i32, i32
  }
  func.func @transform_8(%arg0: i32, %arg1: i32) -> (i32, i32) {
    %c0_i32 = arith.constant 0 : i32
    %c0_i32_0 = arith.constant 0 : i32
    %c0_i32_1 = arith.constant 0 : i32
    return %c0_i32, %c0_i32_0 : i32, i32
  }
  func.func @transform_9(%arg0: i32, %arg1: i32) -> (i32, i32) {
    %c0_i32 = arith.constant 0 : i32
    %c0_i32_0 = arith.constant 0 : i32
    %c0_i32_1 = arith.constant 0 : i32
    return %c0_i32, %c0_i32_0 : i32, i32
  }
  func.func @transform_10(%arg0: i32, %arg1: i32) -> (i32, i32) {
    %c0_i32 = arith.constant 0 : i32
    %c0_i32_0 = arith.constant 0 : i32
    %c0_i32_1 = arith.constant 0 : i32
    return %c0_i32, %c0_i32_0 : i32, i32
  }
  func.func @transform_11(%arg0: i32, %arg1: i32) -> (i32, i32, i32) {
    %c0_i32 = arith.constant 0 : i32
    %c0_i32_0 = arith.constant 0 : i32
    return %arg0, %arg1, %c0_i32 : i32, i32, i32
  }
}

module attributes {stable_mosaic.version = 11 : i64} {
  func.func @kernel(%arg0: i32, %arg1: i32, %arg2: memref<1x8x32xf32, #tpu.memory_space<vmem>>, %arg3: memref<1x32xf32, #tpu.memory_space<vmem>>, %arg4: memref<32x256xbf16, #tpu.memory_space<vmem>>, %arg5: memref<4x128xf32, #tpu.memory_space<vmem>>, %arg6: memref<1x128xf32, #tpu.memory_space<vmem>>, %arg7: memref<128x384xbf16, #tpu.memory_space<vmem>>, %arg8: memref<128x128xbf16, #tpu.memory_space<vmem>>, %arg9: memref<1x128xf32, #tpu.memory_space<vmem>>, %arg10: memref<16x128xf32, #tpu.memory_space<vmem>>, %arg11: memref<1x128xf32, #tpu.memory_space<vmem>>, %arg12: memref<128x32xbf16, #tpu.memory_space<vmem>>, %arg13: memref<1x8x32xf32, #tpu.memory_space<vmem>>, %arg14: memref<16x128xf32, #tpu.memory_space<vmem>>, %arg15: memref<8x128xf32, #tpu.memory_space<vmem>>, %arg16: memref<8x128xf32, #tpu.memory_space<vmem>>, %arg17: memref<8x128xf32, #tpu.memory_space<vmem>>, %arg18: memref<8x128xf32, #tpu.memory_space<vmem>>, %arg19: memref<8x128xf32, #tpu.memory_space<vmem>>, %arg20: memref<16x128xf32, #tpu.memory_space<vmem>>) attributes {dimension_semantics = [#tpu.dimension_semantics<parallel>, #tpu.dimension_semantics<arbitrary>], iteration_bounds = array<i64: 2, 2>, scalar_prefetch = 0 : i64, scratch_operands = 7 : i64, tpu.core_type = #tpu.core_type<tc>, window_params = [{transform_indices = @transform_0, window_bounds = array<i64: 1, 8, 32>}, {pipeline_mode = #tpu.pipeline_mode<synchronous>, transform_indices = @transform_1, window_bounds = array<i64: 1, 32>}, {pipeline_mode = #tpu.pipeline_mode<synchronous>, transform_indices = @transform_2, window_bounds = array<i64: 32, 256>}, {pipeline_mode = #tpu.pipeline_mode<synchronous>, transform_indices = @transform_3, window_bounds = array<i64: 4, 128>}, {pipeline_mode = #tpu.pipeline_mode<synchronous>, transform_indices = @transform_4, window_bounds = array<i64: 1, 128>}, {pipeline_mode = #tpu.pipeline_mode<synchronous>, transform_indices = @transform_5, window_bounds = array<i64: 128, 384>}, {pipeline_mode = #tpu.pipeline_mode<synchronous>, transform_indices = @transform_6, window_bounds = array<i64: 128, 128>}, {pipeline_mode = #tpu.pipeline_mode<synchronous>, transform_indices = @transform_7, window_bounds = array<i64: 1, 128>}, {pipeline_mode = #tpu.pipeline_mode<synchronous>, transform_indices = @transform_8, window_bounds = array<i64: 16, 128>}, {pipeline_mode = #tpu.pipeline_mode<synchronous>, transform_indices = @transform_9, window_bounds = array<i64: 1, 128>}, {pipeline_mode = #tpu.pipeline_mode<synchronous>, transform_indices = @transform_10, window_bounds = array<i64: 128, 32>}, {transform_indices = @transform_11, window_bounds = array<i64: 1, 8, 32>}]} {
    %c0_i32 = arith.constant 0 : i32
    %0 = arith.cmpi eq, %arg1, %c0_i32 : i32
    %1 = arith.extui %0 : i1 to i32
    %c0_i32_0 = arith.constant 0 : i32
    %2 = arith.cmpi ne, %1, %c0_i32_0 : i32
    scf.if %2 {
      %cst_76 = arith.constant 0.000000e+00 : f32
      %202 = vector.broadcast %cst_76 : f32 to vector<16x128xf32>
      %c0_77 = arith.constant 0 : index
      %c0_78 = arith.constant 0 : index
      %203 = vector.load %arg20[%c0_77, %c0_78] : memref<16x128xf32, #tpu.memory_space<vmem>>, vector<16x128xf32>
      tpu.vector_store %arg20[%c0_77, %c0_78], %202 {strides = array<i32>} : memref<16x128xf32, #tpu.memory_space<vmem>>, vector<16x128xf32>,
      %cst_79 = arith.constant 0.000000e+00 : f32
      %204 = vector.broadcast %cst_79 : f32 to vector<8x128xf32>
      %c0_80 = arith.constant 0 : index
      %c0_81 = arith.constant 0 : index
      %205 = vector.load %arg14[%c0_80, %c0_81] : memref<16x128xf32, #tpu.memory_space<vmem>>, vector<8x128xf32>
      tpu.vector_store %arg14[%c0_80, %c0_81], %204 {strides = array<i32>} : memref<16x128xf32, #tpu.memory_space<vmem>>, vector<8x128xf32>,
    } else {
    }
    %c0 = arith.constant 0 : index
    %c0_1 = arith.constant 0 : index
    %c0_2 = arith.constant 0 : index
    %3 = vector.load %arg2[%c0, %c0_1, %c0_2] : memref<1x8x32xf32, #tpu.memory_space<vmem>>, vector<1x8x32xf32>
    %4 = vector.shape_cast %3 : vector<1x8x32xf32> to vector<8x32xf32>
    %5 = arith.mulf %4, %4 : vector<8x32xf32>
    %cst = arith.constant dense<0.000000e+00> : vector<8xf32>
    %6 = vector.multi_reduction <add>, %5, %cst [1] : vector<8x32xf32> to vector<8xf32>
    %7 = vector.shape_cast %6 : vector<8xf32> to vector<8x1xf32>
    %cst_3 = arith.constant 3.200000e+01 : f32
    %8 = vector.broadcast %cst_3 : f32 to vector<8x1xf32>
    %9 = arith.divf %7, %8 : vector<8x1xf32>
    %cst_4 = arith.constant 9.99999997E-7 : f32
    %10 = vector.broadcast %cst_4 : f32 to vector<8x1xf32>
    %11 = arith.addf %9, %10 : vector<8x1xf32>
    %12 = math.rsqrt %11 : vector<8x1xf32>
    %13 = vector.broadcast %12 : vector<8x1xf32> to vector<8x32xf32>
    %14 = arith.mulf %4, %13 : vector<8x32xf32>
    %c0_5 = arith.constant 0 : index
    %c0_6 = arith.constant 0 : index
    %15 = vector.load %arg3[%c0_5, %c0_6] : memref<1x32xf32, #tpu.memory_space<vmem>>, vector<1x32xf32>
    %16 = vector.broadcast %15 : vector<1x32xf32> to vector<8x32xf32>
    %17 = arith.mulf %14, %16 : vector<8x32xf32>
    %18 = arith.truncf %17 : vector<8x32xf32> to vector<8x32xbf16>
    %c0_7 = arith.constant 0 : index
    %c0_8 = arith.constant 0 : index
    %19 = vector.load %arg4[%c0_7, %c0_8] : memref<32x256xbf16, #tpu.memory_space<vmem>>, vector<32x256xbf16>
    %cst_9 = arith.constant dense<0.000000e+00> : vector<8x256xf32>
    %20 = tpu.matmul %18, %19, %cst_9 {dimension_numbers = #tpu.dot_dimension_numbers<[1], [0], [0], [1], [0, 0, 1, 1], [], []>} : vector<8x32xbf16>, vector<32x256xbf16>, vector<8x256xf32> -> vector<8x256xf32>
    %21 = vector.extract_strided_slice %20 {offsets = [0, 0], sizes = [8, 128], strides = [1, 1]} : vector<8x256xf32> to vector<8x128xf32>
    %22 = vector.extract_strided_slice %20 {offsets = [0, 128], sizes = [8, 128], strides = [1, 1]} : vector<8x256xf32> to vector<8x128xf32>
    %c0_10 = arith.constant 0 : index
    %c0_11 = arith.constant 0 : index
    %23 = vector.load %arg19[%c0_10, %c0_11] : memref<8x128xf32, #tpu.memory_space<vmem>>, vector<8x128xf32>
    tpu.vector_store %arg19[%c0_10, %c0_11], %22 {strides = array<i32>} : memref<8x128xf32, #tpu.memory_space<vmem>>, vector<8x128xf32>,
    %c8 = arith.constant 8 : index
    %c0_12 = arith.constant 0 : index
    %24 = vector.load %arg14[%c8, %c0_12] : memref<16x128xf32, #tpu.memory_space<vmem>>, vector<8x128xf32>
    tpu.vector_store %arg14[%c8, %c0_12], %21 {strides = array<i32>} : memref<16x128xf32, #tpu.memory_space<vmem>>, vector<8x128xf32>,
    %cst_13 = arith.constant 0.000000e+00 : f32
    %25 = vector.broadcast %cst_13 : f32 to vector<8x128xf32>
    %c0_14 = arith.constant 0 : index
    %c0_15 = arith.constant 0 : index
    %26 = vector.load %arg6[%c0_14, %c0_15] : memref<1x128xf32, #tpu.memory_space<vmem>>, vector<1x128xf32>
    %27 = vector.broadcast %26 : vector<1x128xf32> to vector<8x128xf32>
    %28 = arith.addf %25, %27 : vector<8x128xf32>
    %c5 = arith.constant 5 : index
    %c0_16 = arith.constant 0 : index
    %29 = vector.load %arg14[%c5, %c0_16] : memref<16x128xf32, #tpu.memory_space<vmem>>, vector<8x128xf32>
    %c0_17 = arith.constant 0 : index
    %c0_18 = arith.constant 0 : index
    %30 = vector.load %arg5[%c0_17, %c0_18] : memref<4x128xf32, #tpu.memory_space<vmem>>, vector<1x128xf32>
    %31 = vector.broadcast %30 : vector<1x128xf32> to vector<8x128xf32>
    %32 = arith.mulf %29, %31 : vector<8x128xf32>
    %33 = arith.addf %28, %32 : vector<8x128xf32>
    %c6 = arith.constant 6 : index
    %c0_19 = arith.constant 0 : index
    %34 = vector.load %arg14[%c6, %c0_19] : memref<16x128xf32, #tpu.memory_space<vmem>>, vector<8x128xf32>
    %c1 = arith.constant 1 : index
    %c0_20 = arith.constant 0 : index
    %35 = vector.load %arg5[%c1, %c0_20] : memref<4x128xf32, #tpu.memory_space<vmem>>, vector<1x128xf32>
    %36 = vector.broadcast %35 : vector<1x128xf32> to vector<8x128xf32>
    %37 = arith.mulf %34, %36 : vector<8x128xf32>
    %38 = arith.addf %33, %37 : vector<8x128xf32>
    %c7 = arith.constant 7 : index
    %c0_21 = arith.constant 0 : index
    %39 = vector.load %arg14[%c7, %c0_21] : memref<16x128xf32, #tpu.memory_space<vmem>>, vector<8x128xf32>
    %c2 = arith.constant 2 : index
    %c0_22 = arith.constant 0 : index
    %40 = vector.load %arg5[%c2, %c0_22] : memref<4x128xf32, #tpu.memory_space<vmem>>, vector<1x128xf32>
    %41 = vector.broadcast %40 : vector<1x128xf32> to vector<8x128xf32>
    %42 = arith.mulf %39, %41 : vector<8x128xf32>
    %43 = arith.addf %38, %42 : vector<8x128xf32>
    %c8_23 = arith.constant 8 : index
    %c0_24 = arith.constant 0 : index
    %44 = vector.load %arg14[%c8_23, %c0_24] : memref<16x128xf32, #tpu.memory_space<vmem>>, vector<8x128xf32>
    %c3 = arith.constant 3 : index
    %c0_25 = arith.constant 0 : index
    %45 = vector.load %arg5[%c3, %c0_25] : memref<4x128xf32, #tpu.memory_space<vmem>>, vector<1x128xf32>
    %46 = vector.broadcast %45 : vector<1x128xf32> to vector<8x128xf32>
    %47 = arith.mulf %44, %46 : vector<8x128xf32>
    %48 = arith.addf %43, %47 : vector<8x128xf32>
    %49 = vector.extract_strided_slice %21 {offsets = [5, 0], sizes = [3, 128], strides = [1, 1]} : vector<8x128xf32> to vector<3x128xf32>
    %c5_26 = arith.constant 5 : index
    %c0_27 = arith.constant 0 : index
    %50 = vector.load %arg14[%c5_26, %c0_27] : memref<16x128xf32, #tpu.memory_space<vmem>>, vector<3x128xf32>
    tpu.vector_store %arg14[%c5_26, %c0_27], %49 {strides = array<i32>} : memref<16x128xf32, #tpu.memory_space<vmem>>, vector<3x128xf32>,
    %cst_28 = arith.constant 0.000000e+00 : f32
    %51 = vector.broadcast %cst_28 : f32 to vector<8x128xf32>
    %52 = arith.subf %51, %48 : vector<8x128xf32>
    %53 = math.exp %52 : vector<8x128xf32>
    %cst_29 = arith.constant 1.000000e+00 : f32
    %54 = vector.broadcast %cst_29 : f32 to vector<8x128xf32>
    %55 = arith.addf %54, %53 : vector<8x128xf32>
    %cst_30 = arith.constant 1.000000e+00 : f32
    %56 = vector.broadcast %cst_30 : f32 to vector<8x128xf32>
    %57 = arith.divf %56, %55 : vector<8x128xf32>
    %58 = arith.mulf %48, %57 : vector<8x128xf32>
    %c0_31 = arith.constant 0 : index
    %c0_32 = arith.constant 0 : index
    %59 = vector.load %arg15[%c0_31, %c0_32] : memref<8x128xf32, #tpu.memory_space<vmem>>, vector<8x128xf32>
    tpu.vector_store %arg15[%c0_31, %c0_32], %58 {strides = array<i32>} : memref<8x128xf32, #tpu.memory_space<vmem>>, vector<8x128xf32>,
    %60 = arith.truncf %58 : vector<8x128xf32> to vector<8x128xbf16>
    %c0_33 = arith.constant 0 : index
    %c0_34 = arith.constant 0 : index
    %61 = vector.load %arg7[%c0_33, %c0_34] : memref<128x384xbf16, #tpu.memory_space<vmem>>, vector<128x384xbf16>
    %cst_35 = arith.constant dense<0.000000e+00> : vector<8x384xf32>
    %62 = tpu.matmul %60, %61, %cst_35 {dimension_numbers = #tpu.dot_dimension_numbers<[1], [0], [0], [1], [0, 0, 1, 1], [], []>} : vector<8x128xbf16>, vector<128x384xbf16>, vector<8x384xf32> -> vector<8x384xf32>
    %63 = vector.extract_strided_slice %62 {offsets = [0, 0], sizes = [8, 128], strides = [1, 1]} : vector<8x384xf32> to vector<8x128xf32>
    %64 = vector.extract_strided_slice %62 {offsets = [0, 128], sizes = [8, 128], strides = [1, 1]} : vector<8x384xf32> to vector<8x128xf32>
    %c0_36 = arith.constant 0 : index
    %c0_37 = arith.constant 0 : index
    %65 = vector.load %arg17[%c0_36, %c0_37] : memref<8x128xf32, #tpu.memory_space<vmem>>, vector<8x128xf32>
    tpu.vector_store %arg17[%c0_36, %c0_37], %64 {strides = array<i32>} : memref<8x128xf32, #tpu.memory_space<vmem>>, vector<8x128xf32>,
    %66 = vector.extract_strided_slice %62 {offsets = [0, 256], sizes = [8, 128], strides = [1, 1]} : vector<8x384xf32> to vector<8x128xf32>
    %c0_38 = arith.constant 0 : index
    %c0_39 = arith.constant 0 : index
    %67 = vector.load %arg18[%c0_38, %c0_39] : memref<8x128xf32, #tpu.memory_space<vmem>>, vector<8x128xf32>
    tpu.vector_store %arg18[%c0_38, %c0_39], %66 {strides = array<i32>} : memref<8x128xf32, #tpu.memory_space<vmem>>, vector<8x128xf32>,
    %68 = arith.truncf %63 : vector<8x128xf32> to vector<8x128xbf16>
    %c0_40 = arith.constant 0 : index
    %c0_41 = arith.constant 0 : index
    %69 = vector.load %arg8[%c0_40, %c0_41] : memref<128x128xbf16, #tpu.memory_space<vmem>>, vector<128x128xbf16>
    %cst_42 = arith.constant dense<0.000000e+00> : vector<8x128xf32>
    %70 = tpu.matmul %68, %69, %cst_42 {dimension_numbers = #tpu.dot_dimension_numbers<[1], [0], [0], [1], [0, 0, 1, 1], [], []>} : vector<8x128xbf16>, vector<128x128xbf16>, vector<8x128xf32> -> vector<8x128xf32>
    %c0_43 = arith.constant 0 : index
    %c0_44 = arith.constant 0 : index
    %71 = vector.load %arg9[%c0_43, %c0_44] : memref<1x128xf32, #tpu.memory_space<vmem>>, vector<1x128xf32>
    %72 = vector.broadcast %71 : vector<1x128xf32> to vector<8x128xf32>
    %73 = arith.addf %70, %72 : vector<8x128xf32>
    %cst_45 = arith.constant 0.000000e+00 : f32
    %74 = vector.broadcast %cst_45 : f32 to vector<8x128xf32>
    %75 = arith.maximumf %73, %74 : vector<8x128xf32>
    %76 = math.absf %73 : vector<8x128xf32>
    %cst_46 = arith.constant 0.000000e+00 : f32
    %77 = vector.broadcast %cst_46 : f32 to vector<8x128xf32>
    %78 = arith.subf %77, %76 : vector<8x128xf32>
    %79 = math.exp %78 : vector<8x128xf32>
    %cst_47 = arith.constant 1.000000e+00 : f32
    %80 = vector.broadcast %cst_47 : f32 to vector<8x128xf32>
    %81 = arith.addf %80, %79 : vector<8x128xf32>
    %82 = math.log %81 : vector<8x128xf32>
    %83 = arith.addf %75, %82 : vector<8x128xf32>
    %c0_48 = arith.constant 0 : index
    %c0_49 = arith.constant 0 : index
    %84 = vector.load %arg16[%c0_48, %c0_49] : memref<8x128xf32, #tpu.memory_space<vmem>>, vector<8x128xf32>
    tpu.vector_store %arg16[%c0_48, %c0_49], %83 {strides = array<i32>} : memref<8x128xf32, #tpu.memory_space<vmem>>, vector<8x128xf32>,
    %c0_50 = arith.constant 0 : index
    %c0_51 = arith.constant 0 : index
    %85 = vector.load %arg10[%c0_50, %c0_51] : memref<16x128xf32, #tpu.memory_space<vmem>>, vector<16x128xf32>
    %86 = math.exp %85 : vector<16x128xf32>
    %cst_52 = arith.constant 0.000000e+00 : f32
    %87 = vector.broadcast %cst_52 : f32 to vector<16x128xf32>
    %88 = arith.subf %87, %86 : vector<16x128xf32>
    %c0_53 = arith.constant 0 : index
    %c0_54 = arith.constant 0 : index
    %89 = vector.load %arg11[%c0_53, %c0_54] : memref<1x128xf32, #tpu.memory_space<vmem>>, vector<1x128xf32>
    %c0_55 = arith.constant 0 : index
    %c0_56 = arith.constant 0 : index
    %90 = vector.load %arg20[%c0_55, %c0_56] : memref<16x128xf32, #tpu.memory_space<vmem>>, vector<16x128xf32>
    %c0_i32_57 = arith.constant 0 : i32
    %c8_i32 = arith.constant 8 : i32
    %91 = arith.muli %c0_i32_57, %c8_i32 : i32
    %92 = tpu.assume_multiple %91, 8 : i32
    %93 = arith.index_cast %92 : i32 to index
    %c0_58 = arith.constant 0 : index
    %94 = vector.load %arg16[%93, %c0_58] : memref<8x128xf32, #tpu.memory_space<vmem>>, vector<8x128xf32>
    %95 = arith.index_cast %92 : i32 to index
    %c0_59 = arith.constant 0 : index
    %96 = vector.load %arg15[%95, %c0_59] : memref<8x128xf32, #tpu.memory_space<vmem>>, vector<8x128xf32>
    %97 = arith.index_cast %92 : i32 to index
    %c0_60 = arith.constant 0 : index
    %98 = vector.load %arg19[%97, %c0_60] : memref<8x128xf32, #tpu.memory_space<vmem>>, vector<8x128xf32>
    %99 = arith.index_cast %92 : i32 to index
    %c0_61 = arith.constant 0 : index
    %100 = vector.load %arg17[%99, %c0_61] : memref<8x128xf32, #tpu.memory_space<vmem>>, vector<8x128xf32>
    %101 = vector.extract_strided_slice %100 {offsets = [0, 0], sizes = [8, 16], strides = [1, 1]} : vector<8x128xf32> to vector<8x16xf32>
    %102 = arith.index_cast %92 : i32 to index
    %c0_62 = arith.constant 0 : index
    %103 = vector.load %arg18[%102, %c0_62] : memref<8x128xf32, #tpu.memory_space<vmem>>, vector<8x128xf32>
    %104 = vector.extract_strided_slice %103 {offsets = [0, 0], sizes = [8, 16], strides = [1, 1]} : vector<8x128xf32> to vector<8x16xf32>
    %105 = vector.shape_cast %94 : vector<8x128xf32> to vector<8x1x128xf32>
    %106 = vector.shape_cast %88 : vector<16x128xf32> to vector<1x16x128xf32>
    %107 = vector.broadcast %105 : vector<8x1x128xf32> to vector<8x16x128xf32>
    %108 = vector.broadcast %106 : vector<1x16x128xf32> to vector<8x16x128xf32>
    %109 = arith.mulf %107, %108 : vector<8x16x128xf32>
    %110 = math.exp %109 : vector<8x16x128xf32>
    %111 = vector.shape_cast %101 : vector<8x16xf32> to vector<8x16x1xf32>
    %112 = arith.mulf %94, %96 : vector<8x128xf32>
    %113 = vector.shape_cast %112 : vector<8x128xf32> to vector<8x1x128xf32>
    %114 = vector.broadcast %111 : vector<8x16x1xf32> to vector<8x16x128xf32>
    %115 = vector.broadcast %113 : vector<8x1x128xf32> to vector<8x16x128xf32>
    %116 = arith.mulf %114, %115 : vector<8x16x128xf32>
    %117 = vector.extract_strided_slice %110 {offsets = [0, 0, 0], sizes = [1, 16, 128], strides = [1, 1, 1]} : vector<8x16x128xf32> to vector<1x16x128xf32>
    %118 = vector.shape_cast %117 : vector<1x16x128xf32> to vector<16x128xf32>
    %119 = arith.mulf %90, %118 : vector<16x128xf32>
    %120 = vector.extract_strided_slice %116 {offsets = [0, 0, 0], sizes = [1, 16, 128], strides = [1, 1, 1]} : vector<8x16x128xf32> to vector<1x16x128xf32>
    %121 = vector.shape_cast %120 : vector<1x16x128xf32> to vector<16x128xf32>
    %122 = arith.addf %119, %121 : vector<16x128xf32>
    %123 = vector.extract_strided_slice %110 {offsets = [1, 0, 0], sizes = [1, 16, 128], strides = [1, 1, 1]} : vector<8x16x128xf32> to vector<1x16x128xf32>
    %124 = vector.shape_cast %123 : vector<1x16x128xf32> to vector<16x128xf32>
    %125 = arith.mulf %122, %124 : vector<16x128xf32>
    %126 = vector.extract_strided_slice %116 {offsets = [1, 0, 0], sizes = [1, 16, 128], strides = [1, 1, 1]} : vector<8x16x128xf32> to vector<1x16x128xf32>
    %127 = vector.shape_cast %126 : vector<1x16x128xf32> to vector<16x128xf32>
    %128 = arith.addf %125, %127 : vector<16x128xf32>
    %129 = vector.extract_strided_slice %110 {offsets = [2, 0, 0], sizes = [1, 16, 128], strides = [1, 1, 1]} : vector<8x16x128xf32> to vector<1x16x128xf32>
    %130 = vector.shape_cast %129 : vector<1x16x128xf32> to vector<16x128xf32>
    %131 = arith.mulf %128, %130 : vector<16x128xf32>
    %132 = vector.extract_strided_slice %116 {offsets = [2, 0, 0], sizes = [1, 16, 128], strides = [1, 1, 1]} : vector<8x16x128xf32> to vector<1x16x128xf32>
    %133 = vector.shape_cast %132 : vector<1x16x128xf32> to vector<16x128xf32>
    %134 = arith.addf %131, %133 : vector<16x128xf32>
    %135 = vector.extract_strided_slice %110 {offsets = [3, 0, 0], sizes = [1, 16, 128], strides = [1, 1, 1]} : vector<8x16x128xf32> to vector<1x16x128xf32>
    %136 = vector.shape_cast %135 : vector<1x16x128xf32> to vector<16x128xf32>
    %137 = arith.mulf %134, %136 : vector<16x128xf32>
    %138 = vector.extract_strided_slice %116 {offsets = [3, 0, 0], sizes = [1, 16, 128], strides = [1, 1, 1]} : vector<8x16x128xf32> to vector<1x16x128xf32>
    %139 = vector.shape_cast %138 : vector<1x16x128xf32> to vector<16x128xf32>
    %140 = arith.addf %137, %139 : vector<16x128xf32>
    %141 = vector.extract_strided_slice %110 {offsets = [4, 0, 0], sizes = [1, 16, 128], strides = [1, 1, 1]} : vector<8x16x128xf32> to vector<1x16x128xf32>
    %142 = vector.shape_cast %141 : vector<1x16x128xf32> to vector<16x128xf32>
    %143 = arith.mulf %140, %142 : vector<16x128xf32>
    %144 = vector.extract_strided_slice %116 {offsets = [4, 0, 0], sizes = [1, 16, 128], strides = [1, 1, 1]} : vector<8x16x128xf32> to vector<1x16x128xf32>
    %145 = vector.shape_cast %144 : vector<1x16x128xf32> to vector<16x128xf32>
    %146 = arith.addf %143, %145 : vector<16x128xf32>
    %147 = vector.extract_strided_slice %110 {offsets = [5, 0, 0], sizes = [1, 16, 128], strides = [1, 1, 1]} : vector<8x16x128xf32> to vector<1x16x128xf32>
    %148 = vector.shape_cast %147 : vector<1x16x128xf32> to vector<16x128xf32>
    %149 = arith.mulf %146, %148 : vector<16x128xf32>
    %150 = vector.extract_strided_slice %116 {offsets = [5, 0, 0], sizes = [1, 16, 128], strides = [1, 1, 1]} : vector<8x16x128xf32> to vector<1x16x128xf32>
    %151 = vector.shape_cast %150 : vector<1x16x128xf32> to vector<16x128xf32>
    %152 = arith.addf %149, %151 : vector<16x128xf32>
    %153 = vector.extract_strided_slice %110 {offsets = [6, 0, 0], sizes = [1, 16, 128], strides = [1, 1, 1]} : vector<8x16x128xf32> to vector<1x16x128xf32>
    %154 = vector.shape_cast %153 : vector<1x16x128xf32> to vector<16x128xf32>
    %155 = arith.mulf %152, %154 : vector<16x128xf32>
    %156 = vector.extract_strided_slice %116 {offsets = [6, 0, 0], sizes = [1, 16, 128], strides = [1, 1, 1]} : vector<8x16x128xf32> to vector<1x16x128xf32>
    %157 = vector.shape_cast %156 : vector<1x16x128xf32> to vector<16x128xf32>
    %158 = arith.addf %155, %157 : vector<16x128xf32>
    %159 = vector.extract_strided_slice %110 {offsets = [7, 0, 0], sizes = [1, 16, 128], strides = [1, 1, 1]} : vector<8x16x128xf32> to vector<1x16x128xf32>
    %160 = vector.shape_cast %159 : vector<1x16x128xf32> to vector<16x128xf32>
    %161 = arith.mulf %158, %160 : vector<16x128xf32>
    %162 = vector.extract_strided_slice %116 {offsets = [7, 0, 0], sizes = [1, 16, 128], strides = [1, 1, 1]} : vector<8x16x128xf32> to vector<1x16x128xf32>
    %163 = vector.shape_cast %162 : vector<1x16x128xf32> to vector<16x128xf32>
    %164 = arith.addf %161, %163 : vector<16x128xf32>
    %165 = vector.shape_cast %122 : vector<16x128xf32> to vector<1x16x128xf32>
    %166 = vector.shape_cast %128 : vector<16x128xf32> to vector<1x16x128xf32>
    %167 = vector.shape_cast %134 : vector<16x128xf32> to vector<1x16x128xf32>
    %168 = vector.shape_cast %140 : vector<16x128xf32> to vector<1x16x128xf32>
    %169 = vector.shape_cast %146 : vector<16x128xf32> to vector<1x16x128xf32>
    %170 = vector.shape_cast %152 : vector<16x128xf32> to vector<1x16x128xf32>
    %171 = vector.shape_cast %158 : vector<16x128xf32> to vector<1x16x128xf32>
    %172 = vector.shape_cast %164 : vector<16x128xf32> to vector<1x16x128xf32>
    %173 = tpu.concatenate %165, %166, %167, %168, %169, %170, %171, %172 in 0 : vector<1x16x128xf32>, vector<1x16x128xf32>, vector<1x16x128xf32>, vector<1x16x128xf32>, vector<1x16x128xf32>, vector<1x16x128xf32>, vector<1x16x128xf32>, vector<1x16x128xf32> -> vector<8x16x128xf32>
    %174 = vector.shape_cast %104 : vector<8x16xf32> to vector<8x16x1xf32>
    %175 = vector.broadcast %174 : vector<8x16x1xf32> to vector<8x16x128xf32>
    %176 = arith.mulf %175, %173 : vector<8x16x128xf32>
    %cst_63 = arith.constant dense<0.000000e+00> : vector<8x128xf32>
    %177 = vector.multi_reduction <add>, %176, %cst_63 [1] : vector<8x16x128xf32> to vector<8x128xf32>
    %178 = vector.broadcast %89 : vector<1x128xf32> to vector<8x128xf32>
    %179 = arith.mulf %178, %96 : vector<8x128xf32>
    %180 = arith.addf %177, %179 : vector<8x128xf32>
    %cst_64 = arith.constant 0.000000e+00 : f32
    %181 = vector.broadcast %cst_64 : f32 to vector<8x128xf32>
    %182 = arith.subf %181, %98 : vector<8x128xf32>
    %183 = math.exp %182 : vector<8x128xf32>
    %cst_65 = arith.constant 1.000000e+00 : f32
    %184 = vector.broadcast %cst_65 : f32 to vector<8x128xf32>
    %185 = arith.addf %184, %183 : vector<8x128xf32>
    %cst_66 = arith.constant 1.000000e+00 : f32
    %186 = vector.broadcast %cst_66 : f32 to vector<8x128xf32>
    %187 = arith.divf %186, %185 : vector<8x128xf32>
    %188 = arith.mulf %98, %187 : vector<8x128xf32>
    %189 = arith.mulf %180, %188 : vector<8x128xf32>
    %190 = arith.truncf %189 : vector<8x128xf32> to vector<8x128xbf16>
    %c0_67 = arith.constant 0 : index
    %c0_68 = arith.constant 0 : index
    %191 = vector.load %arg12[%c0_67, %c0_68] : memref<128x32xbf16, #tpu.memory_space<vmem>>, vector<128x32xbf16>
    %cst_69 = arith.constant dense<0.000000e+00> : vector<8x32xf32>
    %192 = tpu.matmul %190, %191, %cst_69 {dimension_numbers = #tpu.dot_dimension_numbers<[1], [0], [0], [1], [0, 0, 1, 1], [], []>} : vector<8x128xbf16>, vector<128x32xbf16>, vector<8x32xf32> -> vector<8x32xf32>
    %c0_70 = arith.constant 0 : index
    %193 = arith.index_cast %92 : i32 to index
    %c0_71 = arith.constant 0 : index
    %194 = vector.load %arg2[%c0_70, %193, %c0_71] : memref<1x8x32xf32, #tpu.memory_space<vmem>>, vector<1x8x32xf32>
    %195 = vector.shape_cast %194 : vector<1x8x32xf32> to vector<8x32xf32>
    %196 = arith.addf %195, %192 : vector<8x32xf32>
    %c0_72 = arith.constant 0 : index
    %197 = arith.index_cast %92 : i32 to index
    %c0_73 = arith.constant 0 : index
    %198 = vector.load %arg13[%c0_72, %197, %c0_73] : memref<1x8x32xf32, #tpu.memory_space<vmem>>, vector<1x8x32xf32>
    %199 = vector.shape_cast %198 : vector<1x8x32xf32> to vector<8x32xf32>
    %200 = vector.shape_cast %196 : vector<8x32xf32> to vector<1x8x32xf32>
    tpu.vector_store %arg13[%c0_72, %197, %c0_73], %200 {strides = array<i32>} : memref<1x8x32xf32, #tpu.memory_space<vmem>>, vector<1x8x32xf32>,
    %c1_i32 = arith.constant 1 : i32
    %c0_74 = arith.constant 0 : index
    %c0_75 = arith.constant 0 : index
    %201 = vector.load %arg20[%c0_74, %c0_75] : memref<16x128xf32, #tpu.memory_space<vmem>>, vector<16x128xf32>
    tpu.vector_store %arg20[%c0_74, %c0_75], %164 {strides = array<i32>} : memref<16x128xf32, #tpu.memory_space<vmem>>, vector<16x128xf32>,
    return
  }
  func.func @transform_0(%arg0: i32, %arg1: i32) -> (i32, i32, i32) {
    %c0_i32 = arith.constant 0 : i32
    %c0_i32_0 = arith.constant 0 : i32
    return %arg0, %arg1, %c0_i32 : i32, i32, i32
  }
  func.func @transform_1(%arg0: i32, %arg1: i32) -> (i32, i32) {
    %c0_i32 = arith.constant 0 : i32
    %c0_i32_0 = arith.constant 0 : i32
    %c0_i32_1 = arith.constant 0 : i32
    return %c0_i32, %c0_i32_0 : i32, i32
  }
  func.func @transform_2(%arg0: i32, %arg1: i32) -> (i32, i32) {
    %c0_i32 = arith.constant 0 : i32
    %c0_i32_0 = arith.constant 0 : i32
    %c0_i32_1 = arith.constant 0 : i32
    return %c0_i32, %c0_i32_0 : i32, i32
  }
  func.func @transform_3(%arg0: i32, %arg1: i32) -> (i32, i32) {
    %c0_i32 = arith.constant 0 : i32
    %c0_i32_0 = arith.constant 0 : i32
    %c0_i32_1 = arith.constant 0 : i32
    return %c0_i32, %c0_i32_0 : i32, i32
  }
  func.func @transform_4(%arg0: i32, %arg1: i32) -> (i32, i32) {
    %c0_i32 = arith.constant 0 : i32
    %c0_i32_0 = arith.constant 0 : i32
    %c0_i32_1 = arith.constant 0 : i32
    return %c0_i32, %c0_i32_0 : i32, i32
  }
  func.func @transform_5(%arg0: i32, %arg1: i32) -> (i32, i32) {
    %c0_i32 = arith.constant 0 : i32
    %c0_i32_0 = arith.constant 0 : i32
    %c0_i32_1 = arith.constant 0 : i32
    return %c0_i32, %c0_i32_0 : i32, i32
  }
  func.func @transform_6(%arg0: i32, %arg1: i32) -> (i32, i32) {
    %c0_i32 = arith.constant 0 : i32
    %c0_i32_0 = arith.constant 0 : i32
    %c0_i32_1 = arith.constant 0 : i32
    return %c0_i32, %c0_i32_0 : i32, i32
  }
  func.func @transform_7(%arg0: i32, %arg1: i32) -> (i32, i32) {
    %c0_i32 = arith.constant 0 : i32
    %c0_i32_0 = arith.constant 0 : i32
    %c0_i32_1 = arith.constant 0 : i32
    return %c0_i32, %c0_i32_0 : i32, i32
  }
  func.func @transform_8(%arg0: i32, %arg1: i32) -> (i32, i32) {
    %c0_i32 = arith.constant 0 : i32
    %c0_i32_0 = arith.constant 0 : i32
    %c0_i32_1 = arith.constant 0 : i32
    return %c0_i32, %c0_i32_0 : i32, i32
  }
  func.func @transform_9(%arg0: i32, %arg1: i32) -> (i32, i32) {
    %c0_i32 = arith.constant 0 : i32
    %c0_i32_0 = arith.constant 0 : i32
    %c0_i32_1 = arith.constant 0 : i32
    return %c0_i32, %c0_i32_0 : i32, i32
  }
  func.func @transform_10(%arg0: i32, %arg1: i32) -> (i32, i32) {
    %c0_i32 = arith.constant 0 : i32
    %c0_i32_0 = arith.constant 0 : i32
    %c0_i32_1 = arith.constant 0 : i32
    return %c0_i32, %c0_i32_0 : i32, i32
  }
  func.func @transform_11(%arg0: i32, %arg1: i32) -> (i32, i32, i32) {
    %c0_i32 = arith.constant 0 : i32
    %c0_i32_0 = arith.constant 0 : i32
    return %arg0, %arg1, %c0_i32 : i32, i32, i32
  }
}

</mosaic_0001>

<llo_original>
// kernel: tpu_custom_call.1
$region0: #{tpu_custom_call.1}
  #allocation0 [shape = 'u32[]', space=smem, size = 0x4, offset = 0x4, fixed_abs, tag = 'smem constant byte address 0x4 - core index']
  #allocation1 [shape = 'u32[144,128]{1,0:T(1,128)}', space=vmem, size = 0x12000, scoped, tag = 'internal scratch']
  #allocation2 [shape = 'f32[16,128]{1,0:T(8,128)}', space=vmem, size = 0x2000, scoped, tag = 'scratch operand']
  #allocation3 [shape = 'f32[8,128]{1,0:T(8,128)}', space=vmem, size = 0x1000, scoped, tag = 'scratch operand']
  #allocation4 [shape = 'f32[8,128]{1,0:T(8,128)}', space=vmem, size = 0x1000, scoped, tag = 'scratch operand']
  #allocation5 [shape = 'f32[8,128]{1,0:T(8,128)}', space=vmem, size = 0x1000, scoped, tag = 'scratch operand']
  #allocation6 [shape = 'f32[8,128]{1,0:T(8,128)}', space=vmem, size = 0x1000, scoped, tag = 'scratch operand']
  #allocation7 [shape = 'f32[8,128]{1,0:T(8,128)}', space=vmem, size = 0x1000, scoped, tag = 'scratch operand']
  #allocation8 [shape = 'f32[16,128]{1,0:T(8,128)}', space=vmem, size = 0x2000, scoped, tag = 'scratch operand']
  %s0 = inlined_call_operand.hbm [shape: f32[2,16,32], index: 0, kind: input, shape index: {}]
  %s1 = inlined_call_operand.vmem [shape: f32[1,32], index: 1, kind: input, shape index: {}]
  %s2 = inlined_call_operand.hbm [shape: bf16[32,256], index: 2, kind: input, shape index: {}]
  %s3 = inlined_call_operand.hbm [shape: f32[4,128], index: 3, kind: input, shape index: {}]
  %s4 = inlined_call_operand.vmem [shape: f32[1,128], index: 4, kind: input, shape index: {}]
  %s5 = inlined_call_operand.hbm [shape: bf16[128,384], index: 5, kind: input, shape index: {}]
  %s6 = inlined_call_operand.vmem [shape: bf16[128,128], index: 6, kind: input, shape index: {}]
  %s7 = inlined_call_operand.hbm [shape: f32[1,128], index: 7, kind: input, shape index: {}]
  %s8 = inlined_call_operand.vmem [shape: f32[16,128], index: 8, kind: input, shape index: {}]
  %s9 = inlined_call_operand.hbm [shape: f32[1,128], index: 9, kind: input, shape index: {}]
  %s10 = inlined_call_operand.vmem [shape: bf16[128,32], index: 10, kind: input, shape index: {}]
  %s11 = inlined_call_operand.hbm [shape: f32[2,16,32], index: 11, kind: output, shape index: {}]
  %s12 = sld [smem:[#allocation0]]
  $region105: #{tpu_custom_call.1} parent=0
    _
  %s14 = ssub.s32 1, %s12
  %s15 = scalar_select 0, %s14, %s12
  $region1: #{tpu_custom_call.1} parent=0
    #allocation9 [shape = 'u8[8192]{0}', space=vmem, size = 0x2000, scoped, tag = 'input window, operand 0']
    #allocation10 [shape = 's32[2]{0}', space=sflag, size = 0x8, scoped, tag = 'scoped memory for tpu_custom_call.1']
    #allocation11 [shape = 's32[2]{0}', space=sflag, size = 0x8, scoped, tag = 'scoped memory for tpu_custom_call.1']
    #allocation12 [shape = 'u8[16384]{0}', space=vmem, size = 0x4000, scoped, tag = 'input window, operand 2, single buffered']
    #allocation13 [shape = 's32[1]{0}', space=sflag, size = 0x4, scoped, tag = 'scoped memory for tpu_custom_call.1']
    #allocation14 [shape = 'u8[2048]{0}', space=vmem, size = 0x800, scoped, tag = 'input window, operand 3, single buffered']
    #allocation15 [shape = 'u8[98304]{0}', space=vmem, size = 0x18000, scoped, tag = 'input window, operand 5, single buffered']
    #allocation16 [shape = 's32[1]{0}', space=sflag, size = 0x4, scoped, tag = 'scoped memory for tpu_custom_call.1']
    #allocation17 [shape = 'u8[512]{0}', space=vmem, size = 0x400, scoped, tag = 'input window, operand 7, single buffered']
    #allocation18 [shape = 'u8[512]{0}', space=vmem, size = 0x400, scoped, tag = 'input window, operand 9, single buffered']
    #allocation19 [shape = 's32[1]{0}', space=sflag, size = 0x4, scoped, tag = 'scoped memory for tpu_custom_call.1']
    #allocation20 [shape = 'u8[8192]{0}', space=vmem, size = 0x2000, scoped, tag = 'output window, operand 0']
    %16 = vsyncpa [#allocation10], 0
    %s17 = scalar_lea.sflag [#allocation10], 1
    %18 = vsyncpa %s17, 0
    %19 = vsyncpa [#allocation13], 0
    %20 = vsyncpa [#allocation16], 0
    %21 = vsyncpa [#allocation19], 0
    %22 = vsyncpa [#allocation11], 0
    %s23 = scalar_lea.sflag [#allocation11], 1
    %24 = vsyncpa %s23, 0
    loop: start=0, step=1, limit=6
    $region2: #{tpu_custom_call.1} parent=1 // loop_pre_header
      _
    $region3: #{tpu_custom_call.1} parent=1 // loop_header
      %s26 = sphi 0, %s30
      %p27 = scmp.ge.s32.totalorder %s26, 6
      %s33 = sphi 0, %s45
      %s34 = sphi 0, %s41
      %s35 = sphi 0, %s33
      %s36 = sphi 0, %s34
      %s37 = sphi 0, %s35
      %s38 = sphi 0, %s36
      %s50 = sphi 0, %s52
      %s53 = sphi 0, %s50
      %s54 = sphi 0, %s53
      %s70 = sphi 0, %s54
      %s74 = sphi 0, %s74
      %s76 = sphi 0, %s74
      %s77 = sphi 0, %s76
      %s91 = sphi 0, %s77
      %s95 = sphi 0, %s95
      %s97 = sphi 0, %s95
      %s98 = sphi 0, %s97
      %s112 = sphi 0, %s98
      %s116 = sphi 0, %s116
      %s118 = sphi 0, %s116
      %s119 = sphi 0, %s118
      %s133 = sphi 0, %s119
      %s137 = sphi 0, %s137
      %s139 = sphi 0, %s137
      %s140 = sphi 0, %s139
      %s154 = sphi 0, %s140
      %s158 = sphi 0, %s158
      %s160 = sphi 0, %s158
      %s161 = sphi 0, %s160
      %s175 = sphi 0, %s161
      %s179 = sphi 0, %s179
      %s181 = sphi 0, %s179
      %s182 = sphi 0, %s181
      %s196 = sphi 0, %s182
      %s200 = sphi 0, %s200
      %s202 = sphi 0, %s200
      %s203 = sphi 0, %s202
      %s217 = sphi 0, %s203
      %s221 = sphi 0, %s221
      %s223 = sphi 0, %s221
      %s224 = sphi 0, %s223
      %s238 = sphi 0, %s224
      %s242 = sphi 0, %s242
      %s244 = sphi 0, %s242
      %s245 = sphi 0, %s244
      %s259 = sphi 0, %s245
      %s263 = sphi 0, %s263
      %s265 = sphi 0, %s263
      %s266 = sphi 0, %s265
      %s280 = sphi 0, %s266
      %s288 = sphi 0, %s290
      %s291 = sphi 0, %s288
      %s292 = sphi 0, %s291
      %s308 = sphi 0, %s292
    $region4: #{tpu_custom_call.1} parent=1 // loop_header_branch
      %29 = sbr.rel (%p27) target = $region8
    $region5: #{tpu_custom_call.1} parent=1 // loop_body
      %s31 = ssub.s32 %s26, 1
      %s32 = ssub.s32 %s26, 2
      %s39 = sadd.s32 1, %s34
      %p40 = scmp.ge.s32.totalorder %s39, 2
      %s41 = scalar_select %p40, 0, %s39
      %s42 = sadd.s32 1, %s33
      %s43 = scalar_select %p40, %s42, %s33
      %p44 = scmp.ge.s32.totalorder %s43, 2
      %s45 = scalar_select %p44, 0, %s43
      %s46 = ssub.s32 %s33, %s45
      %s47 = ssub.s32 %s34, %s41
      %s48 = sor.u32 %s46, %s47
      %p49 = scmp.eq.s32.totalorder %s48, 0
      %s51 = sadd.s32 %s50, 1
      %s52 = scalar_select %p49, %s50, %s51
      %p55 = pneg %p49
      %p56 = scmp.eq.s32.totalorder %s26, 3
      %p57 = por %p55, %p56
      %p58 = scmp.ne.s32.totalorder %s50, %s53
      %p59 = scmp.eq.s32.totalorder %s26, 0
      %p60 = por %p58, %p59
      %p61 = scmp.ne.s32.totalorder %s50, %s53
      %p62 = scmp.eq.s32.totalorder %s31, 3
      %p63 = por %p61, %p62
      %p64 = scmp.ne.s32.totalorder %s53, %s54
      %p65 = scmp.eq.s32.totalorder %s31, 0
      %p66 = por %p64, %p65
      %p67 = scmp.ne.s32.totalorder %s53, %s54
      %p68 = scmp.eq.s32.totalorder %s32, 3
      %p69 = por %p67, %p68
      %p71 = scmp.ne.s32.totalorder %s54, %s70
      %p72 = scmp.eq.s32.totalorder %s32, 0
      %p73 = por %p71, %p72
      %s75 = sadd.s32 %s74, 1
      %p78 = scmp.eq.s32.totalorder %s26, 3
      %p79 = scmp.ne.s32.totalorder %s74, %s76
      %p80 = scmp.eq.s32.totalorder %s26, 0
      %p81 = por %p79, %p80
      %p82 = scmp.ne.s32.totalorder %s74, %s76
      %p83 = scmp.eq.s32.totalorder %s31, 3
      %p84 = por %p82, %p83
      %p85 = scmp.ne.s32.totalorder %s76, %s77
      %p86 = scmp.eq.s32.totalorder %s31, 0
      %p87 = por %p85, %p86
      %p88 = scmp.ne.s32.totalorder %s76, %s77
      %p89 = scmp.eq.s32.totalorder %s32, 3
      %p90 = por %p88, %p89
      %p92 = scmp.ne.s32.totalorder %s77, %s91
      %p93 = scmp.eq.s32.totalorder %s32, 0
      %p94 = por %p92, %p93
      %s96 = sadd.s32 %s95, 1
      %p99 = scmp.eq.s32.totalorder %s26, 3
      %p100 = scmp.ne.s32.totalorder %s95, %s97
      %p101 = scmp.eq.s32.totalorder %s26, 0
      %p102 = por %p100, %p101
      %p103 = scmp.ne.s32.totalorder %s95, %s97
      %p104 = scmp.eq.s32.totalorder %s31, 3
      %p105 = por %p103, %p104
      %p106 = scmp.ne.s32.totalorder %s97, %s98
      %p107 = scmp.eq.s32.totalorder %s31, 0
      %p108 = por %p106, %p107
      %p109 = scmp.ne.s32.totalorder %s97, %s98
      %p110 = scmp.eq.s32.totalorder %s32, 3
      %p111 = por %p109, %p110
      %p113 = scmp.ne.s32.totalorder %s98, %s112
      %p114 = scmp.eq.s32.totalorder %s32, 0
      %p115 = por %p113, %p114
      %s117 = sadd.s32 %s116, 1
      %p120 = scmp.eq.s32.totalorder %s26, 3
      %p121 = scmp.ne.s32.totalorder %s116, %s118
      %p122 = scmp.eq.s32.totalorder %s26, 0
      %p123 = por %p121, %p122
      %p124 = scmp.ne.s32.totalorder %s116, %s118
      %p125 = scmp.eq.s32.totalorder %s31, 3
      %p126 = por %p124, %p125
      %p127 = scmp.ne.s32.totalorder %s118, %s119
      %p128 = scmp.eq.s32.totalorder %s31, 0
      %p129 = por %p127, %p128
      %p130 = scmp.ne.s32.totalorder %s118, %s119
      %p131 = scmp.eq.s32.totalorder %s32, 3
      %p132 = por %p130, %p131
      %p134 = scmp.ne.s32.totalorder %s119, %s133
      %p135 = scmp.eq.s32.totalorder %s32, 0
      %p136 = por %p134, %p135
      %s138 = sadd.s32 %s137, 1
      %p141 = scmp.eq.s32.totalorder %s26, 3
      %p142 = scmp.ne.s32.totalorder %s137, %s139
      %p143 = scmp.eq.s32.totalorder %s26, 0
      %p144 = por %p142, %p143
      %p145 = scmp.ne.s32.totalorder %s137, %s139
      %p146 = scmp.eq.s32.totalorder %s31, 3
      %p147 = por %p145, %p146
      %p148 = scmp.ne.s32.totalorder %s139, %s140
      %p149 = scmp.eq.s32.totalorder %s31, 0
      %p150 = por %p148, %p149
      %p151 = scmp.ne.s32.totalorder %s139, %s140
      %p152 = scmp.eq.s32.totalorder %s32, 3
      %p153 = por %p151, %p152
      %p155 = scmp.ne.s32.totalorder %s140, %s154
      %p156 = scmp.eq.s32.totalorder %s32, 0
      %p157 = por %p155, %p156
      %s159 = sadd.s32 %s158, 1
      %p162 = scmp.eq.s32.totalorder %s26, 3
      %p163 = scmp.ne.s32.totalorder %s158, %s160
      %p164 = scmp.eq.s32.totalorder %s26, 0
      %p165 = por %p163, %p164
      %p166 = scmp.ne.s32.totalorder %s158, %s160
      %p167 = scmp.eq.s32.totalorder %s31, 3
      %p168 = por %p166, %p167
      %p169 = scmp.ne.s32.totalorder %s160, %s161
      %p170 = scmp.eq.s32.totalorder %s31, 0
      %p171 = por %p169, %p170
      %p172 = scmp.ne.s32.totalorder %s160, %s161
      %p173 = scmp.eq.s32.totalorder %s32, 3
      %p174 = por %p172, %p173
      %p176 = scmp.ne.s32.totalorder %s161, %s175
      %p177 = scmp.eq.s32.totalorder %s32, 0
      %p178 = por %p176, %p177
      %s180 = sadd.s32 %s179, 1
      %p183 = scmp.eq.s32.totalorder %s26, 3
      %p184 = scmp.ne.s32.totalorder %s179, %s181
      %p185 = scmp.eq.s32.totalorder %s26, 0
      %p186 = por %p184, %p185
      %p187 = scmp.ne.s32.totalorder %s179, %s181
      %p188 = scmp.eq.s32.totalorder %s31, 3
      %p189 = por %p187, %p188
      %p190 = scmp.ne.s32.totalorder %s181, %s182
      %p191 = scmp.eq.s32.totalorder %s31, 0
      %p192 = por %p190, %p191
      %p193 = scmp.ne.s32.totalorder %s181, %s182
      %p194 = scmp.eq.s32.totalorder %s32, 3
      %p195 = por %p193, %p194
      %p197 = scmp.ne.s32.totalorder %s182, %s196
      %p198 = scmp.eq.s32.totalorder %s32, 0
      %p199 = por %p197, %p198
      %s201 = sadd.s32 %s200, 1
      %p204 = scmp.eq.s32.totalorder %s26, 3
      %p205 = scmp.ne.s32.totalorder %s200, %s202
      %p206 = scmp.eq.s32.totalorder %s26, 0
      %p207 = por %p205, %p206
      %p208 = scmp.ne.s32.totalorder %s200, %s202
      %p209 = scmp.eq.s32.totalorder %s31, 3
      %p210 = por %p208, %p209
      %p211 = scmp.ne.s32.totalorder %s202, %s203
      %p212 = scmp.eq.s32.totalorder %s31, 0
      %p213 = por %p211, %p212
      %p214 = scmp.ne.s32.totalorder %s202, %s203
      %p215 = scmp.eq.s32.totalorder %s32, 3
      %p216 = por %p214, %p215
      %p218 = scmp.ne.s32.totalorder %s203, %s217
      %p219 = scmp.eq.s32.totalorder %s32, 0
      %p220 = por %p218, %p219
      %s222 = sadd.s32 %s221, 1
      %p225 = scmp.eq.s32.totalorder %s26, 3
      %p226 = scmp.ne.s32.totalorder %s221, %s223
      %p227 = scmp.eq.s32.totalorder %s26, 0
      %p228 = por %p226, %p227
      %p229 = scmp.ne.s32.totalorder %s221, %s223
      %p230 = scmp.eq.s32.totalorder %s31, 3
      %p231 = por %p229, %p230
      %p232 = scmp.ne.s32.totalorder %s223, %s224
      %p233 = scmp.eq.s32.totalorder %s31, 0
      %p234 = por %p232, %p233
      %p235 = scmp.ne.s32.totalorder %s223, %s224
      %p236 = scmp.eq.s32.totalorder %s32, 3
      %p237 = por %p235, %p236
      %p239 = scmp.ne.s32.totalorder %s224, %s238
      %p240 = scmp.eq.s32.totalorder %s32, 0
      %p241 = por %p239, %p240
      %s243 = sadd.s32 %s242, 1
      %p246 = scmp.eq.s32.totalorder %s26, 3
      %p247 = scmp.ne.s32.totalorder %s242, %s244
      %p248 = scmp.eq.s32.totalorder %s26, 0
      %p249 = por %p247, %p248
      %p250 = scmp.ne.s32.totalorder %s242, %s244
      %p251 = scmp.eq.s32.totalorder %s31, 3
      %p252 = por %p250, %p251
      %p253 = scmp.ne.s32.totalorder %s244, %s245
      %p254 = scmp.eq.s32.totalorder %s31, 0
      %p255 = por %p253, %p254
      %p256 = scmp.ne.s32.totalorder %s244, %s245
      %p257 = scmp.eq.s32.totalorder %s32, 3
      %p258 = por %p256, %p257
      %p260 = scmp.ne.s32.totalorder %s245, %s259
      %p261 = scmp.eq.s32.totalorder %s32, 0
      %p262 = por %p260, %p261
      %s264 = sadd.s32 %s263, 1
      %p267 = scmp.eq.s32.totalorder %s26, 3
      %p268 = scmp.ne.s32.totalorder %s263, %s265
      %p269 = scmp.eq.s32.totalorder %s26, 0
      %p270 = por %p268, %p269
      %p271 = scmp.ne.s32.totalorder %s263, %s265
      %p272 = scmp.eq.s32.totalorder %s31, 3
      %p273 = por %p271, %p272
      %p274 = scmp.ne.s32.totalorder %s265, %s266
      %p275 = scmp.eq.s32.totalorder %s31, 0
      %p276 = por %p274, %p275
      %p277 = scmp.ne.s32.totalorder %s265, %s266
      %p278 = scmp.eq.s32.totalorder %s32, 3
      %p279 = por %p277, %p278
      %p281 = scmp.ne.s32.totalorder %s266, %s280
      %p282 = scmp.eq.s32.totalorder %s32, 0
      %p283 = por %p281, %p282
      %s284 = ssub.s32 %s33, %s45
      %s285 = ssub.s32 %s34, %s41
      %s286 = sor.u32 %s284, %s285
      %p287 = scmp.eq.s32.totalorder %s286, 0
      %s289 = sadd.s32 %s288, 1
      %s290 = scalar_select %p287, %s288, %s289
      %p293 = pneg %p287
      %p294 = scmp.eq.s32.totalorder %s26, 3
      %p295 = por %p293, %p294
      %p296 = scmp.ne.s32.totalorder %s288, %s291
      %p297 = scmp.eq.s32.totalorder %s26, 0
      %p298 = por %p296, %p297
      %p299 = scmp.ne.s32.totalorder %s288, %s291
      %p300 = scmp.eq.s32.totalorder %s31, 3
      %p301 = por %p299, %p300
      %p302 = scmp.ne.s32.totalorder %s291, %s292
      %p303 = scmp.eq.s32.totalorder %s31, 0
      %p304 = por %p302, %p303
      %p305 = scmp.ne.s32.totalorder %s291, %s292
      %p306 = scmp.eq.s32.totalorder %s32, 3
      %p307 = por %p305, %p306
      %p309 = scmp.ne.s32.totalorder %s292, %s308
      %p310 = scmp.eq.s32.totalorder %s32, 0
      %p311 = por %p309, %p310
      %p312 = scmp.le.s32.totalorder 1, %s26
      %p313 = scmp.lt.s32.totalorder %s26, 5
      %p314 = pnand %p312, %p313
      %p315 = pneg %p314
      // Predicated region
      $region9: #{tpu_custom_call.1} parent=5 // pred_check
        _
      $region10: #{tpu_custom_call.1} parent=5 // pred_check_branch
        %317 = sbr.rel (%p314) target = $region12
      $region11: #{tpu_custom_call.1} parent=5 // pred_region
        %s318 = ssub.s32 %s26, 1
        // Predicated region
        $region13: #{tpu_custom_call.1} parent=11 // pred_check
          %p319 = pneg %p87
        $region14: #{tpu_custom_call.1} parent=11 // pred_check_branch
          %321 = sbr.rel (%p319) target = $region16
        $region15: #{tpu_custom_call.1} parent=11 // pred_region
          _
        $region16: #{tpu_custom_call.1} parent=11 // pred_fallthru
          _
        // Predicated region
        $region17: #{tpu_custom_call.1} parent=11 // pred_check
          %p322 = pneg %p108
        $region18: #{tpu_custom_call.1} parent=11 // pred_check_branch
          %324 = sbr.rel (%p322) target = $region20
        $region19: #{tpu_custom_call.1} parent=11 // pred_region
          %s326 = ssub.s32 512, 512
          %327 = vsyncadd [#allocation13], %s326
          %s328 = sshll.u32 [#allocation12], 4
          %s329 = int_to_ptr.vmem [resolvable:$true] %s328
          %334 = dma.hbm_to_vmem [thread:$0]  %s2, 512, %s329, [#allocation13], 128, 128, 8
        $region20: #{tpu_custom_call.1} parent=11 // pred_fallthru
          _
        // Predicated region
        $region21: #{tpu_custom_call.1} parent=11 // pred_check
          %p335 = pneg %p129
        $region22: #{tpu_custom_call.1} parent=11 // pred_check_branch
          %337 = sbr.rel (%p335) target = $region24
        $region23: #{tpu_custom_call.1} parent=11 // pred_region
          %s339 = ssub.s32 64, 64
          %340 = vsyncadd [#allocation13], %s339
          %s342 = sshll.u32 [#allocation14], 4
          %s343 = int_to_ptr.vmem [resolvable:$true] %s342
          %345 = dma.hbm_to_vmem [thread:$0]  %s3, 64, %s343, [#allocation13]
        $region24: #{tpu_custom_call.1} parent=11 // pred_fallthru
          _
        // Predicated region
        $region25: #{tpu_custom_call.1} parent=11 // pred_check
          %p346 = pneg %p150
        $region26: #{tpu_custom_call.1} parent=11 // pred_check_branch
          %348 = sbr.rel (%p346) target = $region28
        $region27: #{tpu_custom_call.1} parent=11 // pred_region
          _
        $region28: #{tpu_custom_call.1} parent=11 // pred_fallthru
          _
        // Predicated region
        $region29: #{tpu_custom_call.1} parent=11 // pred_check
          %p349 = pneg %p171
        $region30: #{tpu_custom_call.1} parent=11 // pred_check_branch
          %351 = sbr.rel (%p349) target = $region32
        $region31: #{tpu_custom_call.1} parent=11 // pred_region
          %s353 = ssub.s32 3072, 3072
          %354 = vsyncadd [#allocation16], %s353
          %s355 = sshll.u32 [#allocation15], 4
          %s356 = int_to_ptr.vmem [resolvable:$true] %s355
          %361 = dma.hbm_to_vmem [thread:$0]  %s5, 3072, %s356, [#allocation16], 192, 192, 12
        $region32: #{tpu_custom_call.1} parent=11 // pred_fallthru
          _
        // Predicated region
        $region33: #{tpu_custom_call.1} parent=11 // pred_check
          %p362 = pneg %p192
        $region34: #{tpu_custom_call.1} parent=11 // pred_check_branch
          %364 = sbr.rel (%p362) target = $region36
        $region35: #{tpu_custom_call.1} parent=11 // pred_region
          _
        $region36: #{tpu_custom_call.1} parent=11 // pred_fallthru
          _
        // Predicated region
        $region37: #{tpu_custom_call.1} parent=11 // pred_check
          %p365 = pneg %p213
        $region38: #{tpu_custom_call.1} parent=11 // pred_check_branch
          %367 = sbr.rel (%p365) target = $region40
        $region39: #{tpu_custom_call.1} parent=11 // pred_region
          %s369 = ssub.s32 16, 16
          %370 = vsyncadd [#allocation16], %s369
          %s372 = sshll.u32 [#allocation17], 4
          %s373 = int_to_ptr.vmem [resolvable:$true] %s372
          %375 = dma.hbm_to_vmem [thread:$0]  %s7, 16, %s373, [#allocation16]
        $region40: #{tpu_custom_call.1} parent=11 // pred_fallthru
          _
        // Predicated region
        $region41: #{tpu_custom_call.1} parent=11 // pred_check
          %p376 = pneg %p234
        $region42: #{tpu_custom_call.1} parent=11 // pred_check_branch
          %378 = sbr.rel (%p376) target = $region44
        $region43: #{tpu_custom_call.1} parent=11 // pred_region
          _
        $region44: #{tpu_custom_call.1} parent=11 // pred_fallthru
          _
        // Predicated region
        $region45: #{tpu_custom_call.1} parent=11 // pred_check
          %p379 = pneg %p255
        $region46: #{tpu_custom_call.1} parent=11 // pred_check_branch
          %381 = sbr.rel (%p379) target = $region48
        $region47: #{tpu_custom_call.1} parent=11 // pred_region
          %s383 = ssub.s32 16, 16
          %384 = vsyncadd [#allocation19], %s383
          %s386 = sshll.u32 [#allocation18], 4
          %s387 = int_to_ptr.vmem [resolvable:$true] %s386
          %389 = dma.hbm_to_vmem [thread:$0]  %s9, 16, %s387, [#allocation19]
        $region48: #{tpu_custom_call.1} parent=11 // pred_fallthru
          _
        // Predicated region
        $region49: #{tpu_custom_call.1} parent=11 // pred_check
          %p390 = pneg %p276
        $region50: #{tpu_custom_call.1} parent=11 // pred_check_branch
          %392 = sbr.rel (%p390) target = $region52
        $region51: #{tpu_custom_call.1} parent=11 // pred_region
          _
        $region52: #{tpu_custom_call.1} parent=11 // pred_fallthru
          _
      $region12: #{tpu_custom_call.1} parent=5 // pred_fallthru
        _
      %p393 = scmp.lt.s32.totalorder %s26, 4
      // Predicated region
      $region53: #{tpu_custom_call.1} parent=5 // pred_check
        %p394 = pneg %p393
      $region54: #{tpu_custom_call.1} parent=5 // pred_check_branch
        %396 = sbr.rel (%p394) target = $region56
      $region55: #{tpu_custom_call.1} parent=5 // pred_region
        // Predicated region
        $region57: #{tpu_custom_call.1} parent=55 // pred_check
          %p397 = pneg %p60
        $region58: #{tpu_custom_call.1} parent=55 // pred_check_branch
          %399 = sbr.rel (%p397) target = $region60
        $region59: #{tpu_custom_call.1} parent=55 // pred_region
          %s400 = sand.u32 %s50, 1
          %s401 = scalar_lea.sflag [#allocation10], %s400
          %s402 = sand.u32 %s50, 1
          %s403 = smul.addr %s402, 8
          %s404 = scalar_lea.vmem [#allocation9], %s403
          %s406 = ssub.s32 128, 128
          %407 = vsyncadd %s401, %s406
          %s408 = smul.addr %s33, 2
          %s409 = sadd.s32 %s34, %s408
          %s410 = smul.addr %s409, 128
          %s411 = scalar_lea.hbm %s0, %s410
          %s413 = sshll.u32 %s404, 4
          %s414 = int_to_ptr.vmem [resolvable:$true] %s413
          %416 = dma.hbm_to_vmem [thread:$0]  %s411, 128, %s414, %s401
        $region60: #{tpu_custom_call.1} parent=55 // pred_fallthru
          _
      $region56: #{tpu_custom_call.1} parent=5 // pred_fallthru
        _
      %p417 = scmp.le.s32.totalorder 1, %s26
      %p418 = scmp.lt.s32.totalorder %s26, 5
      %p419 = pnand %p417, %p418
      %p420 = pneg %p419
      // Predicated region
      $region61: #{tpu_custom_call.1} parent=5 // pred_check
        _
      $region62: #{tpu_custom_call.1} parent=5 // pred_check_branch
        %422 = sbr.rel (%p419) target = $region64
      $region63: #{tpu_custom_call.1} parent=5 // pred_region
        %s423 = ssub.s32 %s26, 1
        %s424 = sand.u32 %s53, 1
        %s425 = scalar_lea.sflag [#allocation10], %s424
        %s426 = sand.u32 %s53, 1
        %s427 = smul.addr %s426, 8
        %s428 = scalar_lea.vmem [#allocation9], %s427
        // Predicated region
        $region65: #{tpu_custom_call.1} parent=63 // pred_check
          %p429 = pneg %p66
        $region66: #{tpu_custom_call.1} parent=63 // pred_check_branch
          %431 = sbr.rel (%p429) target = $region68
        $region67: #{tpu_custom_call.1} parent=63 // pred_region
          %432 = dma.done %s425, 128
        $region68: #{tpu_custom_call.1} parent=63 // pred_fallthru
          _
        // Predicated region
        $region69: #{tpu_custom_call.1} parent=63 // pred_check
          %p433 = pneg %p108
        $region70: #{tpu_custom_call.1} parent=63 // pred_check_branch
          %435 = sbr.rel (%p433) target = $region72
        $region71: #{tpu_custom_call.1} parent=63 // pred_region
          %436 = dma.done [#allocation13], 512
        $region72: #{tpu_custom_call.1} parent=63 // pred_fallthru
          _
        // Predicated region
        $region73: #{tpu_custom_call.1} parent=63 // pred_check
          %p437 = pneg %p129
        $region74: #{tpu_custom_call.1} parent=63 // pred_check_branch
          %439 = sbr.rel (%p437) target = $region76
        $region75: #{tpu_custom_call.1} parent=63 // pred_region
          %440 = dma.done [#allocation13], 64
        $region76: #{tpu_custom_call.1} parent=63 // pred_fallthru
          _
        // Predicated region
        $region77: #{tpu_custom_call.1} parent=63 // pred_check
          %p441 = pneg %p171
        $region78: #{tpu_custom_call.1} parent=63 // pred_check_branch
          %443 = sbr.rel (%p441) target = $region80
        $region79: #{tpu_custom_call.1} parent=63 // pred_region
          %444 = dma.done [#allocation16], 3072
        $region80: #{tpu_custom_call.1} parent=63 // pred_fallthru
          _
        // Predicated region
        $region81: #{tpu_custom_call.1} parent=63 // pred_check
          %p445 = pneg %p213
        $region82: #{tpu_custom_call.1} parent=63 // pred_check_branch
          %447 = sbr.rel (%p445) target = $region84
        $region83: #{tpu_custom_call.1} parent=63 // pred_region
          %448 = dma.done [#allocation16], 16
        $region84: #{tpu_custom_call.1} parent=63 // pred_fallthru
          _
        // Predicated region
        $region85: #{tpu_custom_call.1} parent=63 // pred_check
          %p449 = pneg %p255
        $region86: #{tpu_custom_call.1} parent=63 // pred_check_branch
          %451 = sbr.rel (%p449) target = $region88
        $region87: #{tpu_custom_call.1} parent=63 // pred_region
          %452 = dma.done [#allocation19], 16
        $region88: #{tpu_custom_call.1} parent=63 // pred_fallthru
          _
        %s453 = sand.u32 %s53, 1
        %s454 = scalar_lea.sflag [#allocation10], %s453
        %s455 = sand.u32 %s53, 1
        %s456 = smul.addr %s455, 8
        %s457 = scalar_lea.vmem [#allocation9], %s456
        %p458 = pneg %p66
        %p459 = pneg %p63
        %p460 = pneg %p87
        %p461 = pneg %p84
        %p462 = pneg %p108
        %p463 = pneg %p105
        %p464 = pneg %p129
        %p465 = pneg %p126
        %p466 = pneg %p150
        %p467 = pneg %p147
        %p468 = pneg %p171
        %p469 = pneg %p168
        %p470 = pneg %p192
        %p471 = pneg %p189
        %p472 = pneg %p213
        %p473 = pneg %p210
        %p474 = pneg %p234
        %p475 = pneg %p231
        %p476 = pneg %p255
        %p477 = pneg %p252
        %p478 = pneg %p276
        %p479 = pneg %p273
        %p480 = pneg %p304
        %p481 = pneg %p301
        %s482 = sand.u32 %s291, 1
        %s483 = scalar_lea.sflag [#allocation11], %s482
        %s484 = sand.u32 %s291, 1
        %s485 = smul.addr %s484, 8
        %s486 = scalar_lea.vmem [#allocation20], %s485
        %p488 = scmp.eq.s32.totalorder %s36, 0
        // Predicated region
        $region89: #{tpu_custom_call.1} parent=63 // pred_check
          %p489 = pneg %p488
        $region90: #{tpu_custom_call.1} parent=63 // pred_check_branch
          %491 = sbr.rel (%p489) target = $region92
        $region91: #{tpu_custom_call.1} parent=63 // pred_region
          %492 = vst [vmem:[#allocation8] sm:$0xff] 0.0
          %493 = vst [vmem:[#allocation8 + $0x8] sm:$0xff] 0.0
          %494 = vst [vmem:[#allocation2] sm:$0xff] 0.0
        $region92: #{tpu_custom_call.1} parent=63 // pred_fallthru
          _
        %v495 = vld [vmem:[%s428] sm:$0xff]
        %v496 = vmul.f32 %v495, %v495
        %vm497 = vcmask 261120
        %v498 = vsel %vm497, %v496, 0.0
        %499 = vadd.xlane.f32.xlu0 %v498
        %v500 = vpop.xlane.xlu0 %499
        %v501 = vrcp.pop 32.0
        %v502 = vmul.f32 %v500, %v501
        %v503 = vadd.f32 %v502, 1e-06
        %v504 = vrsqrt.pop %v503
        %v505 = vmul.f32 %v495, %v504
        %v506 = vld [vmem:[%s1] sm:$0x1]
        %v508 = vlaneseq
        %v509 = vshrl.u32 %v508, 7
        %v510 = vsub.s32 0, %v509
        %v511 = vrot.slane %v506, %v510
        %v513 = vmul.f32 %v505, %v511
        %v514 = vpack.c.bf16 %v513, %v513
        %v515 = vld [vmem:[#allocation12] sm:$0xff]
        %v516 = vld [vmem:[#allocation12 + $0x8] sm:$0xff]
        %v517 = vld [vmem:[#allocation12 + $0x10] sm:$0xff]
        %v518 = vld [vmem:[#allocation12 + $0x18] sm:$0xff]
        %v523 = vunpack.c.l.b16 %v515
        %v524 = vunpack.c.h.b16 %v515
        %v525 = vunpack.c.l.b16 %v516
        %v526 = vunpack.c.h.b16 %v516
        %v527 = vunpack.c.l.b16 %v517
        %v528 = vunpack.c.h.b16 %v517
        %v529 = vunpack.c.l.b16 %v518
        %v530 = vunpack.c.h.b16 %v518
        %v531 = vpack.c.b16 %v525, %v523
        %v532 = vpack.c.b16 %v526, %v524
        %v533 = vpack.c.b16 %v529, %v527
        %v534 = vpack.c.b16 %v530, %v528
        %v540 = vsel %vm497, %v514, 0
        %542 = vmatprep.subr.bf16.mxu0 0
        %543 = vmatpush1.bf16.msra.mxu0 0
        %544 = vmatprep.subr.bf16.mxu0 0
        %545 = vmatpush1.bf16.msra.mxu0 0
        %546 = vmatprep.subr.bf16.mxu0 0
        %547 = vmatpush1.bf16.msra.mxu0 0
        %548 = vmatprep.subr.bf16.mxu0 0
        %549 = vmatpush1.bf16.msra.mxu0 0
        %550 = vmatprep.subr.bf16.mxu0 0
        %551 = vmatpush1.bf16.msra.mxu0 0
        %552 = vmatprep.subr.bf16.mxu0 0
        %553 = vmatpush1.bf16.msra.mxu0 0
        %554 = vmatprep.subr.bf16.mxu0 %v534
        %555 = vmatpush1.bf16.msra.mxu0 %v533
        %556 = vmatprep.subr.bf16.mxu0 %v532
        %557 = vmatpush1.bf16.msra.mxu0 %v531
        %558 = vmatprep.subr.bf16.mxu0 0
        %559 = vmatpush2.bf16.msra.mxu0 0
        %560 = vmatprep.subr.bf16.mxu0 0
        %561 = vmatpush2.bf16.msra.mxu0 0
        %562 = vmatprep.subr.bf16.mxu0 0
        %563 = vmatpush2.bf16.msra.mxu0 0
        %564 = vmatprep.subr.bf16.mxu0 0
        %565 = vmatpush2.bf16.msra.mxu0 0
        %566 = vmatprep.subr.bf16.mxu0 0
        %567 = vmatpush2.bf16.msra.mxu0 0
        %568 = vmatprep.subr.bf16.mxu0 0
        %569 = vmatpush2.bf16.msra.mxu0 0
        %570 = vmatprep.subr.bf16.mxu0 0
        %571 = vmatpush2.bf16.msra.mxu0 0
        %572 = vmatprep.subr.bf16.mxu0 0
        %573 = vmatpush2.bf16.msra.mxu0 0
        %574 = vmatprep.mubr.bf16.mxu0 0
        %575 = vmatmul.mubr.bf16.gmra.mxu0 %v540
        %v576 = vpop.f32.mrf.mxu0
        %v577 = vadd.f32 0.0, %v576
        %v578 = vpop.f32.mrf.mxu0
        %v579 = vadd.f32 0.0, %v578
        %v580 = vpop.f32.mrf.mxu0
        %v581 = vpop.f32.mrf.mxu0
        %582 = vdwg.mxu0
        %583 = vst [vmem:[#allocation7] sm:$0xff] %v579
        %584 = vst [vmem:[#allocation2 + $0x8] sm:$0xff] %v577
        %v585 = vld [vmem:[%s4] sm:$0x1]
        %v587 = vlaneseq
        %v588 = vshrl.u32 %v587, 7
        %v589 = vsub.s32 0, %v588
        %v590 = vrot.slane %v585, %v589
        %v592 = vadd.f32 %v590, 0.0
        %v593 = vld [vmem:[#allocation2 + $0x5] sm:$0xff]
        %v594 = vld [vmem:[#allocation14] sm:$0x1]
        %v595 = vlaneseq
        %v596 = vshrl.u32 %v595, 7
        %v597 = vsub.s32 0, %v596
        %v598 = vrot.slane %v594, %v597
        %v599 = vmul.f32 %v593, %v598
        %v600 = vadd.f32 %v592, %v599
        %v601 = vld [vmem:[#allocation2 + $0x6] sm:$0xff]
        %v602 = vld [vmem:[#allocation14 + $0x1] sm:$0x1]
        %v603 = vlaneseq
        %v604 = vshrl.u32 %v603, 7
        %v605 = vsub.s32 0, %v604
        %v606 = vrot.slane %v602, %v605
        %v607 = vmul.f32 %v601, %v606
        %v608 = vadd.f32 %v600, %v607
        %v609 = vld [vmem:[#allocation2 + $0x7] sm:$0xff]
        %v610 = vld [vmem:[#allocation14 + $0x2] sm:$0x1]
        %v611 = vlaneseq
        %v612 = vshrl.u32 %v611, 7
        %v613 = vsub.s32 0, %v612
        %v614 = vrot.slane %v610, %v613
        %v615 = vmul.f32 %v609, %v614
        %v616 = vadd.f32 %v608, %v615
        %v617 = vld [vmem:[#allocation2 + $0x8] sm:$0xff]
        %v618 = vld [vmem:[#allocation14 + $0x3] sm:$0x1]
        %v619 = vlaneseq
        %v620 = vshrl.u32 %v619, 7
        %v621 = vsub.s32 0, %v620
        %v622 = vrot.slane %v618, %v621
        %v623 = vmul.f32 %v617, %v622
        %v624 = vadd.f32 %v616, %v623
        %625 = vst [vmem:[#allocation2] sm:$0xe0] %v577
        %v626 = vsub.f32 0.0, %v624
        %v627 = vmul.f32 %v626, 1.442695
        %v628 = vpow.pop %v627
        %v629 = vadd.f32 %v628, 1.0
        %v630 = vrcp.pop %v629
        %v631 = vmul.f32 1.0, %v630
        %v632 = vmul.f32 %v624, %v631
        %633 = vst [vmem:[#allocation3] sm:$0xff] %v632
        %v634 = vpack.c.bf16 %v632, %v632
        %v635 = vld [vmem:[#allocation15] sm:$0xff]
        %v636 = vld [vmem:[#allocation15 + $0x8] sm:$0xf]
        %v637 = vld [vmem:[#allocation15 + $0xc] sm:$0xff]
        %v638 = vld [vmem:[#allocation15 + $0x14] sm:$0xf]
        %v639 = vld [vmem:[#allocation15 + $0x18] sm:$0xff]
        %v640 = vld [vmem:[#allocation15 + $0x20] sm:$0xf]
        %v641 = vld [vmem:[#allocation15 + $0x24] sm:$0xff]
        %v642 = vld [vmem:[#allocation15 + $0x2c] sm:$0xf]
        %v643 = vld [vmem:[#allocation15 + $0x30] sm:$0xff]
        %v644 = vld [vmem:[#allocation15 + $0x38] sm:$0xf]
        %v645 = vld [vmem:[#allocation15 + $0x3c] sm:$0xff]
        %v646 = vld [vmem:[#allocation15 + $0x44] sm:$0xf]
        %v647 = vld [vmem:[#allocation15 + $0x48] sm:$0xff]
        %v648 = vld [vmem:[#allocation15 + $0x50] sm:$0xf]
        %v649 = vld [vmem:[#allocation15 + $0x54] sm:$0xff]
        %v650 = vld [vmem:[#allocation15 + $0x5c] sm:$0xf]
        %v651 = vld [vmem:[#allocation15 + $0x60] sm:$0xff]
        %v652 = vld [vmem:[#allocation15 + $0x68] sm:$0xf]
        %v653 = vld [vmem:[#allocation15 + $0x6c] sm:$0xff]
        %v654 = vld [vmem:[#allocation15 + $0x74] sm:$0xf]
        %v655 = vld [vmem:[#allocation15 + $0x78] sm:$0xff]
        %v656 = vld [vmem:[#allocation15 + $0x80] sm:$0xf]
        %v657 = vld [vmem:[#allocation15 + $0x84] sm:$0xff]
        %v658 = vld [vmem:[#allocation15 + $0x8c] sm:$0xf]
        %v659 = vld [vmem:[#allocation15 + $0x90] sm:$0xff]
        %v660 = vld [vmem:[#allocation15 + $0x98] sm:$0xf]
        %v661 = vld [vmem:[#allocation15 + $0x9c] sm:$0xff]
        %v662 = vld [vmem:[#allocation15 + $0xa4] sm:$0xf]
        %v663 = vld [vmem:[#allocation15 + $0xa8] sm:$0xff]
        %v664 = vld [vmem:[#allocation15 + $0xb0] sm:$0xf]
        %v665 = vld [vmem:[#allocation15 + $0xb4] sm:$0xff]
        %v666 = vld [vmem:[#allocation15 + $0xbc] sm:$0xf]
        %v699 = vunpack.c.l.b16 %v635
        %v700 = vunpack.c.h.b16 %v635
        %v701 = vunpack.c.l.b16 %v636
        %v702 = vunpack.c.l.b16 %v637
        %v703 = vunpack.c.h.b16 %v637
        %v704 = vunpack.c.l.b16 %v638
        %v705 = vunpack.c.l.b16 %v639
        %v706 = vunpack.c.h.b16 %v639
        %v707 = vunpack.c.l.b16 %v640
        %v708 = vunpack.c.l.b16 %v641
        %v709 = vunpack.c.h.b16 %v641
        %v710 = vunpack.c.l.b16 %v642
        %v711 = vunpack.c.l.b16 %v643
        %v712 = vunpack.c.h.b16 %v643
        %v713 = vunpack.c.l.b16 %v644
        %v714 = vunpack.c.l.b16 %v645
        %v715 = vunpack.c.h.b16 %v645
        %v716 = vunpack.c.l.b16 %v646
        %v717 = vunpack.c.l.b16 %v647
        %v718 = vunpack.c.h.b16 %v647
        %v719 = vunpack.c.l.b16 %v648
        %v720 = vunpack.c.l.b16 %v649
        %v721 = vunpack.c.h.b16 %v649
        %v722 = vunpack.c.l.b16 %v650
        %v723 = vunpack.c.l.b16 %v651
        %v724 = vunpack.c.h.b16 %v651
        %v725 = vunpack.c.l.b16 %v652
        %v726 = vunpack.c.l.b16 %v653
        %v727 = vunpack.c.h.b16 %v653
        %v728 = vunpack.c.l.b16 %v654
        %v729 = vunpack.c.l.b16 %v655
        %v730 = vunpack.c.h.b16 %v655
        %v731 = vunpack.c.l.b16 %v656
        %v732 = vunpack.c.l.b16 %v657
        %v733 = vunpack.c.h.b16 %v657
        %v734 = vunpack.c.l.b16 %v658
        %v735 = vunpack.c.l.b16 %v659
        %v736 = vunpack.c.h.b16 %v659
        %v737 = vunpack.c.l.b16 %v660
        %v738 = vunpack.c.l.b16 %v661
        %v739 = vunpack.c.h.b16 %v661
        %v740 = vunpack.c.l.b16 %v662
        %v741 = vunpack.c.l.b16 %v663
        %v742 = vunpack.c.h.b16 %v663
        %v743 = vunpack.c.l.b16 %v664
        %v744 = vunpack.c.l.b16 %v665
        %v745 = vunpack.c.h.b16 %v665
        %v746 = vunpack.c.l.b16 %v666
        %v747 = vpack.c.b16 %v702, %v699
        %v748 = vpack.c.b16 %v703, %v700
        %v749 = vpack.c.b16 %v704, %v701
        %v750 = vpack.c.b16 %v708, %v705
        %v751 = vpack.c.b16 %v709, %v706
        %v752 = vpack.c.b16 %v710, %v707
        %v753 = vpack.c.b16 %v714, %v711
        %v754 = vpack.c.b16 %v715, %v712
        %v755 = vpack.c.b16 %v716, %v713
        %v756 = vpack.c.b16 %v720, %v717
        %v757 = vpack.c.b16 %v721, %v718
        %v758 = vpack.c.b16 %v722, %v719
        %v759 = vpack.c.b16 %v726, %v723
        %v760 = vpack.c.b16 %v727, %v724
        %v761 = vpack.c.b16 %v728, %v725
        %v762 = vpack.c.b16 %v732, %v729
        %v763 = vpack.c.b16 %v733, %v730
        %v764 = vpack.c.b16 %v734, %v731
        %v765 = vpack.c.b16 %v738, %v735
        %v766 = vpack.c.b16 %v739, %v736
        %v767 = vpack.c.b16 %v740, %v737
        %v768 = vpack.c.b16 %v744, %v741
        %v769 = vpack.c.b16 %v745, %v742
        %v770 = vpack.c.b16 %v746, %v743
        %795 = vmatprep.subr.bf16.mxu0 %v769
        %796 = vmatpush1.bf16.msra.mxu0 %v768
        %797 = vmatprep.subr.bf16.mxu0 %v766
        %798 = vmatpush1.bf16.msra.mxu0 %v765
        %799 = vmatprep.subr.bf16.mxu0 %v763
        %800 = vmatpush1.bf16.msra.mxu0 %v762
        %801 = vmatprep.subr.bf16.mxu0 %v760
        %802 = vmatpush1.bf16.msra.mxu0 %v759
        %803 = vmatprep.subr.bf16.mxu0 %v757
        %804 = vmatpush1.bf16.msra.mxu0 %v756
        %805 = vmatprep.subr.bf16.mxu0 %v754
        %806 = vmatpush1.bf16.msra.mxu0 %v753
        %807 = vmatprep.subr.bf16.mxu0 %v751
        %808 = vmatpush1.bf16.msra.mxu0 %v750
        %809 = vmatprep.subr.bf16.mxu0 %v748
        %810 = vmatpush1.bf16.msra.mxu0 %v747
        %811 = vmatprep.subr.bf16.mxu0 0
        %812 = vmatpush2.bf16.msra.mxu0 0
        %813 = vmatprep.subr.bf16.mxu0 0
        %814 = vmatpush2.bf16.msra.mxu0 0
        %815 = vmatprep.subr.bf16.mxu0 0
        %816 = vmatpush2.bf16.msra.mxu0 0
        %817 = vmatprep.subr.bf16.mxu0 0
        %818 = vmatpush2.bf16.msra.mxu0 0
        %819 = vmatprep.subr.bf16.mxu0 0
        %820 = vmatpush2.bf16.msra.mxu0 0
        %821 = vmatprep.subr.bf16.mxu0 0
        %822 = vmatpush2.bf16.msra.mxu0 0
        %823 = vmatprep.subr.bf16.mxu0 0
        %824 = vmatpush2.bf16.msra.mxu0 0
        %825 = vmatprep.subr.bf16.mxu0 0
        %826 = vmatpush2.bf16.msra.mxu0 0
        %827 = vmatprep.mubr.bf16.mxu0 0
        %828 = vmatmul.mubr.bf16.gmra.mxu0 %v634
        %v829 = vpop.f32.mrf.mxu0
        %v830 = vadd.f32 0.0, %v829
        %v831 = vpop.f32.mrf.mxu0
        %v832 = vadd.f32 0.0, %v831
        %v833 = vpop.f32.mrf.mxu0
        %v834 = vpop.f32.mrf.mxu0
        %835 = vdwg.mxu0
        %836 = vmatprep.subr.bf16.mxu0 0
        %837 = vmatpush1.bf16.msra.mxu0 %v770
        %838 = vmatprep.subr.bf16.mxu0 0
        %839 = vmatpush1.bf16.msra.mxu0 %v767
        %840 = vmatprep.subr.bf16.mxu0 0
        %841 = vmatpush1.bf16.msra.mxu0 %v764
        %842 = vmatprep.subr.bf16.mxu0 0
        %843 = vmatpush1.bf16.msra.mxu0 %v761
        %844 = vmatprep.subr.bf16.mxu0 0
        %845 = vmatpush1.bf16.msra.mxu0 %v758
        %846 = vmatprep.subr.bf16.mxu0 0
        %847 = vmatpush1.bf16.msra.mxu0 %v755
        %848 = vmatprep.subr.bf16.mxu0 0
        %849 = vmatpush1.bf16.msra.mxu0 %v752
        %850 = vmatprep.subr.bf16.mxu0 0
        %851 = vmatpush1.bf16.msra.mxu0 %v749
        %852 = vmatprep.subr.bf16.mxu0 0
        %853 = vmatpush2.bf16.msra.mxu0 0
        %854 = vmatprep.subr.bf16.mxu0 0
        %855 = vmatpush2.bf16.msra.mxu0 0
        %856 = vmatprep.subr.bf16.mxu0 0
        %857 = vmatpush2.bf16.msra.mxu0 0
        %858 = vmatprep.subr.bf16.mxu0 0
        %859 = vmatpush2.bf16.msra.mxu0 0
        %860 = vmatprep.subr.bf16.mxu0 0
        %861 = vmatpush2.bf16.msra.mxu0 0
        %862 = vmatprep.subr.bf16.mxu0 0
        %863 = vmatpush2.bf16.msra.mxu0 0
        %864 = vmatprep.subr.bf16.mxu0 0
        %865 = vmatpush2.bf16.msra.mxu0 0
        %866 = vmatprep.subr.bf16.mxu0 0
        %867 = vmatpush2.bf16.msra.mxu0 0
        %868 = vmatprep.mubr.bf16.mxu0 0
        %869 = vmatmul.mubr.bf16.gmra.mxu0 %v634
        %v870 = vpop.f32.mrf.mxu0
        %v871 = vadd.f32 0.0, %v870
        %v872 = vpop.f32.mrf.mxu0
        %v873 = vpop.f32.mrf.mxu0
        %v874 = vpop.f32.mrf.mxu0
        %875 = vdwg.mxu0
        %876 = vst [vmem:[#allocation5] sm:$0xff] %v832
        %877 = vst [vmem:[#allocation6] sm:$0xff] %v871
        %v878 = vpack.c.bf16 %v830, %v830
        %v879 = vld [vmem:[%s6] sm:$0xf]
        %v880 = vld [vmem:[%s6 + $0x4] sm:$0xf]
        %v881 = vld [vmem:[%s6 + $0x8] sm:$0xf]
        %v882 = vld [vmem:[%s6 + $0xc] sm:$0xf]
        %v883 = vld [vmem:[%s6 + $0x10] sm:$0xf]
        %v884 = vld [vmem:[%s6 + $0x14] sm:$0xf]
        %v885 = vld [vmem:[%s6 + $0x18] sm:$0xf]
        %v886 = vld [vmem:[%s6 + $0x1c] sm:$0xf]
        %v887 = vld [vmem:[%s6 + $0x20] sm:$0xf]
        %v888 = vld [vmem:[%s6 + $0x24] sm:$0xf]
        %v889 = vld [vmem:[%s6 + $0x28] sm:$0xf]
        %v890 = vld [vmem:[%s6 + $0x2c] sm:$0xf]
        %v891 = vld [vmem:[%s6 + $0x30] sm:$0xf]
        %v892 = vld [vmem:[%s6 + $0x34] sm:$0xf]
        %v893 = vld [vmem:[%s6 + $0x38] sm:$0xf]
        %v894 = vld [vmem:[%s6 + $0x3c] sm:$0xf]
        %v895 = vld [vmem:[#allocation17] sm:$0x1]
        %v897 = vlaneseq
        %v898 = vshrl.u32 %v897, 7
        %v899 = vsub.s32 0, %v898
        %v900 = vrot.slane %v895, %v899
        %v918 = vunpack.c.l.b16 %v879
        %v919 = vunpack.c.l.b16 %v880
        %v920 = vunpack.c.l.b16 %v881
        %v921 = vunpack.c.l.b16 %v882
        %v922 = vunpack.c.l.b16 %v883
        %v923 = vunpack.c.l.b16 %v884
        %v924 = vunpack.c.l.b16 %v885
        %v925 = vunpack.c.l.b16 %v886
        %v926 = vunpack.c.l.b16 %v887
        %v927 = vunpack.c.l.b16 %v888
        %v928 = vunpack.c.l.b16 %v889
        %v929 = vunpack.c.l.b16 %v890
        %v930 = vunpack.c.l.b16 %v891
        %v931 = vunpack.c.l.b16 %v892
        %v932 = vunpack.c.l.b16 %v893
        %v933 = vunpack.c.l.b16 %v894
        %v934 = vpack.c.b16 %v919, %v918
        %v935 = vpack.c.b16 %v921, %v920
        %v936 = vpack.c.b16 %v923, %v922
        %v937 = vpack.c.b16 %v925, %v924
        %v938 = vpack.c.b16 %v927, %v926
        %v939 = vpack.c.b16 %v929, %v928
        %v940 = vpack.c.b16 %v931, %v930
        %v941 = vpack.c.b16 %v933, %v932
        %950 = vmatprep.subr.bf16.mxu0 0
        %951 = vmatpush1.bf16.msra.mxu0 %v941
        %952 = vmatprep.subr.bf16.mxu0 0
        %953 = vmatpush1.bf16.msra.mxu0 %v940
        %954 = vmatprep.subr.bf16.mxu0 0
        %955 = vmatpush1.bf16.msra.mxu0 %v939
        %956 = vmatprep.subr.bf16.mxu0 0
        %957 = vmatpush1.bf16.msra.mxu0 %v938
        %958 = vmatprep.subr.bf16.mxu0 0
        %959 = vmatpush1.bf16.msra.mxu0 %v937
        %960 = vmatprep.subr.bf16.mxu0 0
        %961 = vmatpush1.bf16.msra.mxu0 %v936
        %962 = vmatprep.subr.bf16.mxu0 0
        %963 = vmatpush1.bf16.msra.mxu0 %v935
        %964 = vmatprep.subr.bf16.mxu0 0
        %965 = vmatpush1.bf16.msra.mxu0 %v934
        %966 = vmatprep.subr.bf16.mxu0 0
        %967 = vmatpush2.bf16.msra.mxu0 0
        %968 = vmatprep.subr.bf16.mxu0 0
        %969 = vmatpush2.bf16.msra.mxu0 0
        %970 = vmatprep.subr.bf16.mxu0 0
        %971 = vmatpush2.bf16.msra.mxu0 0
        %972 = vmatprep.subr.bf16.mxu0 0
        %973 = vmatpush2.bf16.msra.mxu0 0
        %974 = vmatprep.subr.bf16.mxu0 0
        %975 = vmatpush2.bf16.msra.mxu0 0
        %976 = vmatprep.subr.bf16.mxu0 0
        %977 = vmatpush2.bf16.msra.mxu0 0
        %978 = vmatprep.subr.bf16.mxu0 0
        %979 = vmatpush2.bf16.msra.mxu0 0
        %980 = vmatprep.subr.bf16.mxu0 0
        %981 = vmatpush2.bf16.msra.mxu0 0
        %982 = vmatprep.mubr.bf16.mxu0 0
        %983 = vmatmul.mubr.bf16.gmra.mxu0 %v878
        %v984 = vpop.f32.mrf.mxu0
        %v985 = vadd.f32 %v900, %v984
        %v986 = vpop.f32.mrf.mxu0
        %v987 = vpop.f32.mrf.mxu0
        %v988 = vpop.f32.mrf.mxu0
        %989 = vdwg.mxu0
        %v990 = vmax.f32 %v985, 0.0
        %v991 = vand.u32 2147483647, %v985
        %v992 = vsub.f32 0.0, %v991
        %v993 = vmul.f32 %v992, 1.442695
        %v994 = vpow.pop %v993
        %v995 = vadd.f32 %v994, 1.0
        %v996 = vlog2.pop %v995
        %v997 = vmul.f32 %v996, 0.6931472
        %v998 = vadd.f32 %v990, %v997
        %999 = vst [vmem:[#allocation4] sm:$0xff] %v998
        %v1000 = vld [vmem:[%s8] sm:$0xff]
        %v1001 = vld [vmem:[%s8 + $0x8] sm:$0xff]
        %v1002 = vmul.f32 %v1000, 1.442695
        %v1003 = vpow.pop %v1002
        %v1004 = vmul.f32 %v1001, 1.442695
        %v1005 = vpow.pop %v1004
        %v1006 = vsub.f32 0.0, %v1003
        %v1007 = vsub.f32 0.0, %v1005
        %v1008 = vld [vmem:[#allocation18] sm:$0x1]
        %v1009 = vld [vmem:[#allocation8] sm:$0xff]
        %v1010 = vld [vmem:[#allocation8 + $0x8] sm:$0xff]
        %v1011 = vld [vmem:[#allocation4] sm:$0xff]
        %v1012 = vld [vmem:[#allocation3] sm:$0xff]
        %v1013 = vld [vmem:[#allocation7] sm:$0xff]
        %v1014 = vld [vmem:[#allocation5] sm:$0xff]
        %v1015 = vld [vmem:[#allocation6] sm:$0xff]
        %v1017 = vcombine.high %v1011, %v1011
        %v1019 = vunpack.c.l.s4 1966171168
        %v1020 = vunpack.c.0.s8 %v1019
        %v1021 = vlaneseq
        %v1022 = vshrl.u32 %v1021, 7
        %v1023 = vsub.s32 %v1020, %v1022
        %v1024 = vrot.slane %v1011, %v1023
        %v1026 = vunpack.c.l.s4 1966171168
        %v1027 = vunpack.c.0.s8 %v1026
        %v1028 = vlaneseq
        %v1029 = vshrl.u32 %v1028, 7
        %v1030 = vsub.s32 %v1027, %v1029
        %v1031 = vrot.slane %v1017, %v1030
        %v1032 = vcombine.high %v1024, %v1024
        %v1033 = vcombine.high %v1031, %v1031
        %v1035 = vunpack.c.l.s4 1966171168
        %v1036 = vunpack.c.0.s8 %v1035
        %v1037 = vlaneseq
        %v1038 = vshrl.u32 %v1037, 7
        %v1039 = vsub.s32 %v1036, %v1038
        %v1040 = vrot.slane %v1024, %v1039
        %v1042 = vunpack.c.l.s4 1966171168
        %v1043 = vunpack.c.0.s8 %v1042
        %v1044 = vlaneseq
        %v1045 = vshrl.u32 %v1044, 7
        %v1046 = vsub.s32 %v1043, %v1045
        %v1047 = vrot.slane %v1031, %v1046
        %v1049 = vunpack.c.l.s4 1966171168
        %v1050 = vunpack.c.0.s8 %v1049
        %v1051 = vlaneseq
        %v1052 = vshrl.u32 %v1051, 7
        %v1053 = vsub.s32 %v1050, %v1052
        %v1054 = vrot.slane %v1032, %v1053
        %v1056 = vunpack.c.l.s4 1966171168
        %v1057 = vunpack.c.0.s8 %v1056
        %v1058 = vlaneseq
        %v1059 = vshrl.u32 %v1058, 7
        %v1060 = vsub.s32 %v1057, %v1059
        %v1061 = vrot.slane %v1033, %v1060
        %v1062 = vcombine.high %v1040, %v1040
        %v1063 = vcombine.high %v1047, %v1047
        %v1064 = vcombine.high %v1054, %v1054
        %v1065 = vcombine.high %v1061, %v1061
        %v1066 = vlaneseq
        %v1067 = vshrl.u32 %v1066, 7
        %v1068 = vsub.s32 0, %v1067
        %v1069 = vrot.slane %v1040, %v1068
        %v1070 = vlaneseq
        %v1071 = vshrl.u32 %v1070, 7
        %v1072 = vsub.s32 0, %v1071
        %v1073 = vrot.slane %v1054, %v1072
        %v1074 = vlaneseq
        %v1075 = vshrl.u32 %v1074, 7
        %v1076 = vsub.s32 0, %v1075
        %v1077 = vrot.slane %v1062, %v1076
        %v1078 = vlaneseq
        %v1079 = vshrl.u32 %v1078, 7
        %v1080 = vsub.s32 0, %v1079
        %v1081 = vrot.slane %v1064, %v1080
        %v1082 = vlaneseq
        %v1083 = vshrl.u32 %v1082, 7
        %v1084 = vsub.s32 0, %v1083
        %v1085 = vrot.slane %v1047, %v1084
        %v1086 = vlaneseq
        %v1087 = vshrl.u32 %v1086, 7
        %v1088 = vsub.s32 0, %v1087
        %v1089 = vrot.slane %v1061, %v1088
        %v1090 = vlaneseq
        %v1091 = vshrl.u32 %v1090, 7
        %v1092 = vsub.s32 0, %v1091
        %v1093 = vrot.slane %v1063, %v1092
        %v1094 = vlaneseq
        %v1095 = vshrl.u32 %v1094, 7
        %v1096 = vsub.s32 0, %v1095
        %v1097 = vrot.slane %v1065, %v1096
        %v1106 = vmul.f32 %v1069, %v1006
        %v1107 = vmul.f32 %v1069, %v1007
        %v1108 = vmul.f32 %v1073, %v1006
        %v1109 = vmul.f32 %v1073, %v1007
        %v1110 = vmul.f32 %v1077, %v1006
        %v1111 = vmul.f32 %v1077, %v1007
        %v1112 = vmul.f32 %v1081, %v1006
        %v1113 = vmul.f32 %v1081, %v1007
        %v1114 = vmul.f32 %v1085, %v1006
        %v1115 = vmul.f32 %v1085, %v1007
        %v1116 = vmul.f32 %v1089, %v1006
        %v1117 = vmul.f32 %v1089, %v1007
        %v1118 = vmul.f32 %v1093, %v1006
        %v1119 = vmul.f32 %v1093, %v1007
        %v1120 = vmul.f32 %v1097, %v1006
        %v1121 = vmul.f32 %v1097, %v1007
        %v1122 = vmul.f32 %v1106, 1.442695
        %v1123 = vpow.pop %v1122
        %v1124 = vmul.f32 %v1107, 1.442695
        %v1125 = vpow.pop %v1124
        %v1126 = vmul.f32 %v1108, 1.442695
        %v1127 = vpow.pop %v1126
        %v1128 = vmul.f32 %v1109, 1.442695
        %v1129 = vpow.pop %v1128
        %v1130 = vmul.f32 %v1110, 1.442695
        %v1131 = vpow.pop %v1130
        %v1132 = vmul.f32 %v1111, 1.442695
        %v1133 = vpow.pop %v1132
        %v1134 = vmul.f32 %v1112, 1.442695
        %v1135 = vpow.pop %v1134
        %v1136 = vmul.f32 %v1113, 1.442695
        %v1137 = vpow.pop %v1136
        %v1138 = vmul.f32 %v1114, 1.442695
        %v1139 = vpow.pop %v1138
        %v1140 = vmul.f32 %v1115, 1.442695
        %v1141 = vpow.pop %v1140
        %v1142 = vmul.f32 %v1116, 1.442695
        %v1143 = vpow.pop %v1142
        %v1144 = vmul.f32 %v1117, 1.442695
        %v1145 = vpow.pop %v1144
        %v1146 = vmul.f32 %v1118, 1.442695
        %v1147 = vpow.pop %v1146
        %v1148 = vmul.f32 %v1119, 1.442695
        %v1149 = vpow.pop %v1148
        %v1150 = vmul.f32 %v1120, 1.442695
        %v1151 = vpow.pop %v1150
        %v1152 = vmul.f32 %v1121, 1.442695
        %v1153 = vpow.pop %v1152
        %v1154 = vlaneseq
        %v1155 = vshrl.u32 %v1154, 7
        %v1156 = vsub.s32 0, %v1155
        %v1157 = vrot.slane %v1014, %v1156
        %1159 = vbcast.lane.b32.xlu0 %v1157, 256
        %v1160 = vpop.permute.xlu0 %1159
        %s1162 = sor.u32 256, 8
        %1163 = vbcast.lane.b32.xlu0 %v1157, %s1162
        %v1164 = vpop.permute.xlu0 %1163
        %v1165 = vlaneseq
        %v1166 = vshrl.u32 %v1165, 7
        %v1167 = vsub.s32 1, %v1166
        %v1168 = vrot.slane %v1014, %v1167
        %1170 = vbcast.lane.b32.xlu0 %v1168, 256
        %v1171 = vpop.permute.xlu0 %1170
        %s1173 = sor.u32 256, 8
        %1174 = vbcast.lane.b32.xlu0 %v1168, %s1173
        %v1175 = vpop.permute.xlu0 %1174
        %v1176 = vlaneseq
        %v1177 = vshrl.u32 %v1176, 7
        %v1178 = vsub.s32 2, %v1177
        %v1179 = vrot.slane %v1014, %v1178
        %1181 = vbcast.lane.b32.xlu0 %v1179, 256
        %v1182 = vpop.permute.xlu0 %1181
        %s1184 = sor.u32 256, 8
        %1185 = vbcast.lane.b32.xlu0 %v1179, %s1184
        %v1186 = vpop.permute.xlu0 %1185
        %v1187 = vlaneseq
        %v1188 = vshrl.u32 %v1187, 7
        %v1189 = vsub.s32 3, %v1188
        %v1190 = vrot.slane %v1014, %v1189
        %1192 = vbcast.lane.b32.xlu0 %v1190, 256
        %v1193 = vpop.permute.xlu0 %1192
        %s1195 = sor.u32 256, 8
        %1196 = vbcast.lane.b32.xlu0 %v1190, %s1195
        %v1197 = vpop.permute.xlu0 %1196
        %v1198 = vlaneseq
        %v1199 = vshrl.u32 %v1198, 7
        %v1200 = vsub.s32 4, %v1199
        %v1201 = vrot.slane %v1014, %v1200
        %1203 = vbcast.lane.b32.xlu0 %v1201, 256
        %v1204 = vpop.permute.xlu0 %1203
        %s1206 = sor.u32 256, 8
        %1207 = vbcast.lane.b32.xlu0 %v1201, %s1206
        %v1208 = vpop.permute.xlu0 %1207
        %v1209 = vlaneseq
        %v1210 = vshrl.u32 %v1209, 7
        %v1211 = vsub.s32 5, %v1210
        %v1212 = vrot.slane %v1014, %v1211
        %1214 = vbcast.lane.b32.xlu0 %v1212, 256
        %v1215 = vpop.permute.xlu0 %1214
        %s1217 = sor.u32 256, 8
        %1218 = vbcast.lane.b32.xlu0 %v1212, %s1217
        %v1219 = vpop.permute.xlu0 %1218
        %v1220 = vlaneseq
        %v1221 = vshrl.u32 %v1220, 7
        %v1222 = vsub.s32 6, %v1221
        %v1223 = vrot.slane %v1014, %v1222
        %1225 = vbcast.lane.b32.xlu0 %v1223, 256
        %v1226 = vpop.permute.xlu0 %1225
        %s1228 = sor.u32 256, 8
        %1229 = vbcast.lane.b32.xlu0 %v1223, %s1228
        %v1230 = vpop.permute.xlu0 %1229
        %v1231 = vlaneseq
        %v1232 = vshrl.u32 %v1231, 7
        %v1233 = vsub.s32 7, %v1232
        %v1234 = vrot.slane %v1014, %v1233
        %1236 = vbcast.lane.b32.xlu0 %v1234, 256
        %v1237 = vpop.permute.xlu0 %1236
        %s1239 = sor.u32 256, 8
        %1240 = vbcast.lane.b32.xlu0 %v1234, %s1239
        %v1241 = vpop.permute.xlu0 %1240
        %v1242 = vmul.f32 %v1011, %v1012
        %v1244 = vcombine.high %v1242, %v1242
        %v1246 = vunpack.c.l.s4 1966171168
        %v1247 = vunpack.c.0.s8 %v1246
        %v1248 = vlaneseq
        %v1249 = vshrl.u32 %v1248, 7
        %v1250 = vsub.s32 %v1247, %v1249
        %v1251 = vrot.slane %v1242, %v1250
        %v1253 = vunpack.c.l.s4 1966171168
        %v1254 = vunpack.c.0.s8 %v1253
        %v1255 = vlaneseq
        %v1256 = vshrl.u32 %v1255, 7
        %v1257 = vsub.s32 %v1254, %v1256
        %v1258 = vrot.slane %v1244, %v1257
        %v1259 = vcombine.high %v1251, %v1251
        %v1260 = vcombine.high %v1258, %v1258
        %v1262 = vunpack.c.l.s4 1966171168
        %v1263 = vunpack.c.0.s8 %v1262
        %v1264 = vlaneseq
        %v1265 = vshrl.u32 %v1264, 7
        %v1266 = vsub.s32 %v1263, %v1265
        %v1267 = vrot.slane %v1251, %v1266
        %v1269 = vunpack.c.l.s4 1966171168
        %v1270 = vunpack.c.0.s8 %v1269
        %v1271 = vlaneseq
        %v1272 = vshrl.u32 %v1271, 7
        %v1273 = vsub.s32 %v1270, %v1272
        %v1274 = vrot.slane %v1258, %v1273
        %v1276 = vunpack.c.l.s4 1966171168
        %v1277 = vunpack.c.0.s8 %v1276
        %v1278 = vlaneseq
        %v1279 = vshrl.u32 %v1278, 7
        %v1280 = vsub.s32 %v1277, %v1279
        %v1281 = vrot.slane %v1259, %v1280
        %v1283 = vunpack.c.l.s4 1966171168
        %v1284 = vunpack.c.0.s8 %v1283
        %v1285 = vlaneseq
        %v1286 = vshrl.u32 %v1285, 7
        %v1287 = vsub.s32 %v1284, %v1286
        %v1288 = vrot.slane %v1260, %v1287
        %v1289 = vcombine.high %v1267, %v1267
        %v1290 = vcombine.high %v1274, %v1274
        %v1291 = vcombine.high %v1281, %v1281
        %v1292 = vcombine.high %v1288, %v1288
        %v1293 = vlaneseq
        %v1294 = vshrl.u32 %v1293, 7
        %v1295 = vsub.s32 0, %v1294
        %v1296 = vrot.slane %v1267, %v1295
        %v1297 = vlaneseq
        %v1298 = vshrl.u32 %v1297, 7
        %v1299 = vsub.s32 0, %v1298
        %v1300 = vrot.slane %v1281, %v1299
        %v1301 = vlaneseq
        %v1302 = vshrl.u32 %v1301, 7
        %v1303 = vsub.s32 0, %v1302
        %v1304 = vrot.slane %v1289, %v1303
        %v1305 = vlaneseq
        %v1306 = vshrl.u32 %v1305, 7
        %v1307 = vsub.s32 0, %v1306
        %v1308 = vrot.slane %v1291, %v1307
        %v1309 = vlaneseq
        %v1310 = vshrl.u32 %v1309, 7
        %v1311 = vsub.s32 0, %v1310
        %v1312 = vrot.slane %v1274, %v1311
        %v1313 = vlaneseq
        %v1314 = vshrl.u32 %v1313, 7
        %v1315 = vsub.s32 0, %v1314
        %v1316 = vrot.slane %v1288, %v1315
        %v1317 = vlaneseq
        %v1318 = vshrl.u32 %v1317, 7
        %v1319 = vsub.s32 0, %v1318
        %v1320 = vrot.slane %v1290, %v1319
        %v1321 = vlaneseq
        %v1322 = vshrl.u32 %v1321, 7
        %v1323 = vsub.s32 0, %v1322
        %v1324 = vrot.slane %v1292, %v1323
        %v1333 = vmul.f32 %v1160, %v1296
        %v1334 = vmul.f32 %v1164, %v1296
        %v1335 = vmul.f32 %v1171, %v1300
        %v1336 = vmul.f32 %v1175, %v1300
        %v1337 = vmul.f32 %v1182, %v1304
        %v1338 = vmul.f32 %v1186, %v1304
        %v1339 = vmul.f32 %v1193, %v1308
        %v1340 = vmul.f32 %v1197, %v1308
        %v1341 = vmul.f32 %v1204, %v1312
        %v1342 = vmul.f32 %v1208, %v1312
        %v1343 = vmul.f32 %v1215, %v1316
        %v1344 = vmul.f32 %v1219, %v1316
        %v1345 = vmul.f32 %v1226, %v1320
        %v1346 = vmul.f32 %v1230, %v1320
        %v1347 = vmul.f32 %v1237, %v1324
        %v1348 = vmul.f32 %v1241, %v1324
        %v1349 = vmul.f32 %v1009, %v1123
        %v1350 = vmul.f32 %v1010, %v1125
        %v1351 = vadd.f32 %v1349, %v1333
        %v1352 = vadd.f32 %v1350, %v1334
        %v1353 = vmul.f32 %v1351, %v1127
        %v1354 = vmul.f32 %v1352, %v1129
        %v1355 = vadd.f32 %v1353, %v1335
        %v1356 = vadd.f32 %v1354, %v1336
        %v1357 = vmul.f32 %v1355, %v1131
        %v1358 = vmul.f32 %v1356, %v1133
        %v1359 = vadd.f32 %v1357, %v1337
        %v1360 = vadd.f32 %v1358, %v1338
        %v1361 = vmul.f32 %v1359, %v1135
        %v1362 = vmul.f32 %v1360, %v1137
        %v1363 = vadd.f32 %v1361, %v1339
        %v1364 = vadd.f32 %v1362, %v1340
        %v1365 = vmul.f32 %v1363, %v1139
        %v1366 = vmul.f32 %v1364, %v1141
        %v1367 = vadd.f32 %v1365, %v1341
        %v1368 = vadd.f32 %v1366, %v1342
        %v1369 = vmul.f32 %v1367, %v1143
        %v1370 = vmul.f32 %v1368, %v1145
        %v1371 = vadd.f32 %v1369, %v1343
        %v1372 = vadd.f32 %v1370, %v1344
        %v1373 = vmul.f32 %v1371, %v1147
        %v1374 = vmul.f32 %v1372, %v1149
        %v1375 = vadd.f32 %v1373, %v1345
        %v1376 = vadd.f32 %v1374, %v1346
        %v1377 = vmul.f32 %v1375, %v1151
        %v1378 = vmul.f32 %v1376, %v1153
        %v1379 = vadd.f32 %v1377, %v1347
        %v1380 = vadd.f32 %v1378, %v1348
        %v1381 = vlaneseq
        %v1382 = vshrl.u32 %v1381, 7
        %v1383 = vsub.s32 0, %v1382
        %v1384 = vrot.slane %v1015, %v1383
        %1386 = vbcast.lane.b32.xlu0 %v1384, 256
        %v1387 = vpop.permute.xlu0 %1386
        %s1389 = sor.u32 256, 8
        %1390 = vbcast.lane.b32.xlu0 %v1384, %s1389
        %v1391 = vpop.permute.xlu0 %1390
        %v1392 = vlaneseq
        %v1393 = vshrl.u32 %v1392, 7
        %v1394 = vsub.s32 1, %v1393
        %v1395 = vrot.slane %v1015, %v1394
        %1397 = vbcast.lane.b32.xlu0 %v1395, 256
        %v1398 = vpop.permute.xlu0 %1397
        %s1400 = sor.u32 256, 8
        %1401 = vbcast.lane.b32.xlu0 %v1395, %s1400
        %v1402 = vpop.permute.xlu0 %1401
        %v1403 = vlaneseq
        %v1404 = vshrl.u32 %v1403, 7
        %v1405 = vsub.s32 2, %v1404
        %v1406 = vrot.slane %v1015, %v1405
        %1408 = vbcast.lane.b32.xlu0 %v1406, 256
        %v1409 = vpop.permute.xlu0 %1408
        %s1411 = sor.u32 256, 8
        %1412 = vbcast.lane.b32.xlu0 %v1406, %s1411
        %v1413 = vpop.permute.xlu0 %1412
        %v1414 = vlaneseq
        %v1415 = vshrl.u32 %v1414, 7
        %v1416 = vsub.s32 3, %v1415
        %v1417 = vrot.slane %v1015, %v1416
        %1419 = vbcast.lane.b32.xlu0 %v1417, 256
        %v1420 = vpop.permute.xlu0 %1419
        %s1422 = sor.u32 256, 8
        %1423 = vbcast.lane.b32.xlu0 %v1417, %s1422
        %v1424 = vpop.permute.xlu0 %1423
        %v1425 = vlaneseq
        %v1426 = vshrl.u32 %v1425, 7
        %v1427 = vsub.s32 4, %v1426
        %v1428 = vrot.slane %v1015, %v1427
        %1430 = vbcast.lane.b32.xlu0 %v1428, 256
        %v1431 = vpop.permute.xlu0 %1430
        %s1433 = sor.u32 256, 8
        %1434 = vbcast.lane.b32.xlu0 %v1428, %s1433
        %v1435 = vpop.permute.xlu0 %1434
        %v1436 = vlaneseq
        %v1437 = vshrl.u32 %v1436, 7
        %v1438 = vsub.s32 5, %v1437
        %v1439 = vrot.slane %v1015, %v1438
        %1441 = vbcast.lane.b32.xlu0 %v1439, 256
        %v1442 = vpop.permute.xlu0 %1441
        %s1444 = sor.u32 256, 8
        %1445 = vbcast.lane.b32.xlu0 %v1439, %s1444
        %v1446 = vpop.permute.xlu0 %1445
        %v1447 = vlaneseq
        %v1448 = vshrl.u32 %v1447, 7
        %v1449 = vsub.s32 6, %v1448
        %v1450 = vrot.slane %v1015, %v1449
        %1452 = vbcast.lane.b32.xlu0 %v1450, 256
        %v1453 = vpop.permute.xlu0 %1452
        %s1455 = sor.u32 256, 8
        %1456 = vbcast.lane.b32.xlu0 %v1450, %s1455
        %v1457 = vpop.permute.xlu0 %1456
        %v1458 = vlaneseq
        %v1459 = vshrl.u32 %v1458, 7
        %v1460 = vsub.s32 7, %v1459
        %v1461 = vrot.slane %v1015, %v1460
        %1463 = vbcast.lane.b32.xlu0 %v1461, 256
        %v1464 = vpop.permute.xlu0 %1463
        %s1466 = sor.u32 256, 8
        %1467 = vbcast.lane.b32.xlu0 %v1461, %s1466
        %v1468 = vpop.permute.xlu0 %1467
        %v1469 = vmul.f32 %v1387, %v1351
        %v1470 = vmul.f32 %v1391, %v1352
        %v1471 = vmul.f32 %v1398, %v1355
        %v1472 = vmul.f32 %v1402, %v1356
        %v1473 = vmul.f32 %v1409, %v1359
        %v1474 = vmul.f32 %v1413, %v1360
        %v1475 = vmul.f32 %v1420, %v1363
        %v1476 = vmul.f32 %v1424, %v1364
        %v1477 = vmul.f32 %v1431, %v1367
        %v1478 = vmul.f32 %v1435, %v1368
        %v1479 = vmul.f32 %v1442, %v1371
        %v1480 = vmul.f32 %v1446, %v1372
        %v1481 = vmul.f32 %v1453, %v1375
        %v1482 = vmul.f32 %v1457, %v1376
        %v1483 = vmul.f32 %v1464, %v1379
        %v1484 = vmul.f32 %v1468, %v1380
        %v1485 = vadd.f32 %v1469, %v1470
        %v1486 = vrot.slane %v1485, 4
        %v1487 = vadd.f32 %v1485, %v1486
        %v1488 = vrot.slane %v1487, 2
        %v1489 = vadd.f32 %v1487, %v1488
        %v1490 = vrot.slane %v1489, 1
        %v1491 = vadd.f32 %v1489, %v1490
        %v1492 = vadd.f32 %v1471, %v1472
        %v1493 = vrot.slane %v1492, 4
        %v1494 = vadd.f32 %v1492, %v1493
        %v1495 = vrot.slane %v1494, 2
        %v1496 = vadd.f32 %v1494, %v1495
        %v1497 = vrot.slane %v1496, 1
        %v1498 = vadd.f32 %v1496, %v1497
        %v1499 = vadd.f32 %v1473, %v1474
        %v1500 = vrot.slane %v1499, 4
        %v1501 = vadd.f32 %v1499, %v1500
        %v1502 = vrot.slane %v1501, 2
        %v1503 = vadd.f32 %v1501, %v1502
        %v1504 = vrot.slane %v1503, 1
        %v1505 = vadd.f32 %v1503, %v1504
        %v1506 = vadd.f32 %v1475, %v1476
        %v1507 = vrot.slane %v1506, 4
        %v1508 = vadd.f32 %v1506, %v1507
        %v1509 = vrot.slane %v1508, 2
        %v1510 = vadd.f32 %v1508, %v1509
        %v1511 = vrot.slane %v1510, 1
        %v1512 = vadd.f32 %v1510, %v1511
        %v1513 = vadd.f32 %v1477, %v1478
        %v1514 = vrot.slane %v1513, 4
        %v1515 = vadd.f32 %v1513, %v1514
        %v1516 = vrot.slane %v1515, 2
        %v1517 = vadd.f32 %v1515, %v1516
        %v1518 = vrot.slane %v1517, 1
        %v1519 = vadd.f32 %v1517, %v1518
        %v1520 = vadd.f32 %v1479, %v1480
        %v1521 = vrot.slane %v1520, 4
        %v1522 = vadd.f32 %v1520, %v1521
        %v1523 = vrot.slane %v1522, 2
        %v1524 = vadd.f32 %v1522, %v1523
        %v1525 = vrot.slane %v1524, 1
        %v1526 = vadd.f32 %v1524, %v1525
        %v1527 = vadd.f32 %v1481, %v1482
        %v1528 = vrot.slane %v1527, 4
        %v1529 = vadd.f32 %v1527, %v1528
        %v1530 = vrot.slane %v1529, 2
        %v1531 = vadd.f32 %v1529, %v1530
        %v1532 = vrot.slane %v1531, 1
        %v1533 = vadd.f32 %v1531, %v1532
        %v1534 = vadd.f32 %v1483, %v1484
        %v1535 = vrot.slane %v1534, 4
        %v1536 = vadd.f32 %v1534, %v1535
        %v1537 = vrot.slane %v1536, 2
        %v1538 = vadd.f32 %v1536, %v1537
        %v1539 = vrot.slane %v1538, 1
        %v1540 = vadd.f32 %v1538, %v1539
        %v1542 = vlaneseq
        %v1543 = vshrl.u32 %v1542, 7
        %v1544 = vsub.s32 0, %v1543
        %v1545 = vrot.slane %v1008, %v1544
        %v1547 = vmul.f32 %v1545, %v1012
        %v1549 = vrot.slane %v1547, 1
        %v1550 = vrot.slane %v1547, 2
        %v1551 = vrot.slane %v1547, 3
        %v1552 = vrot.slane %v1547, 4
        %v1553 = vrot.slane %v1547, 5
        %v1554 = vrot.slane %v1547, 6
        %v1555 = vrot.slane %v1547, 7
        %v1564 = vadd.f32 %v1491, %v1547
        %v1565 = vadd.f32 %v1498, %v1549
        %v1566 = vadd.f32 %v1505, %v1550
        %v1567 = vadd.f32 %v1512, %v1551
        %v1568 = vadd.f32 %v1519, %v1552
        %v1569 = vadd.f32 %v1526, %v1553
        %v1570 = vadd.f32 %v1533, %v1554
        %v1571 = vadd.f32 %v1540, %v1555
        %v1572 = vsub.f32 0.0, %v1013
        %v1573 = vmul.f32 %v1572, 1.442695
        %v1574 = vpow.pop %v1573
        %v1575 = vadd.f32 %v1574, 1.0
        %v1576 = vrcp.pop %v1575
        %v1577 = vmul.f32 1.0, %v1576
        %v1578 = vmul.f32 %v1013, %v1577
        %v1580 = vrot.slane %v1578, 1
        %v1581 = vrot.slane %v1578, 2
        %v1582 = vrot.slane %v1578, 3
        %v1583 = vrot.slane %v1578, 4
        %v1584 = vrot.slane %v1578, 5
        %v1585 = vrot.slane %v1578, 6
        %v1586 = vrot.slane %v1578, 7
        %v1595 = vmul.f32 %v1564, %v1578
        %v1596 = vmul.f32 %v1565, %v1580
        %v1597 = vmul.f32 %v1566, %v1581
        %v1598 = vmul.f32 %v1567, %v1582
        %v1599 = vmul.f32 %v1568, %v1583
        %v1600 = vmul.f32 %v1569, %v1584
        %v1601 = vmul.f32 %v1570, %v1585
        %v1602 = vmul.f32 %v1571, %v1586
        %v1603 = vpack.c.bf16 %v1595, %v1595
        %v1604 = vpack.c.bf16 %v1596, %v1596
        %v1605 = vpack.c.bf16 %v1597, %v1597
        %v1606 = vpack.c.bf16 %v1598, %v1598
        %v1607 = vpack.c.bf16 %v1599, %v1599
        %v1608 = vpack.c.bf16 %v1600, %v1600
        %v1609 = vpack.c.bf16 %v1601, %v1601
        %v1610 = vpack.c.bf16 %v1602, %v1602
        %v1611 = vld [vmem:[%s10] sm:$0xf]
        %v1612 = vld [vmem:[%s10 + $0x4] sm:$0xf]
        %v1613 = vld [vmem:[%s10 + $0x8] sm:$0xf]
        %v1614 = vld [vmem:[%s10 + $0xc] sm:$0xf]
        %v1615 = vld [vmem:[%s10 + $0x10] sm:$0xf]
        %v1616 = vld [vmem:[%s10 + $0x14] sm:$0xf]
        %v1617 = vld [vmem:[%s10 + $0x18] sm:$0xf]
        %v1618 = vld [vmem:[%s10 + $0x1c] sm:$0xf]
        %v1619 = vld [vmem:[%s10 + $0x20] sm:$0xf]
        %v1620 = vld [vmem:[%s10 + $0x24] sm:$0xf]
        %v1621 = vld [vmem:[%s10 + $0x28] sm:$0xf]
        %v1622 = vld [vmem:[%s10 + $0x2c] sm:$0xf]
        %v1623 = vld [vmem:[%s10 + $0x30] sm:$0xf]
        %v1624 = vld [vmem:[%s10 + $0x34] sm:$0xf]
        %v1625 = vld [vmem:[%s10 + $0x38] sm:$0xf]
        %v1626 = vld [vmem:[%s10 + $0x3c] sm:$0xf]
        %v1635 = vunpack.c.l.b16 %v1603
        %v1636 = vunpack.c.l.b16 %v1604
        %v1637 = vunpack.c.l.b16 %v1605
        %v1638 = vunpack.c.l.b16 %v1606
        %v1639 = vunpack.c.l.b16 %v1607
        %v1640 = vunpack.c.l.b16 %v1608
        %v1641 = vunpack.c.l.b16 %v1609
        %v1642 = vunpack.c.l.b16 %v1610
        %v1643 = vrot.slane %v1636, 7
        %vm1644 = vcmask 1041409
        %v1645 = vsel %vm1644, %v1643, %v1635
        %v1646 = vrot.slane %v1637, 6
        %vm1647 = vcmask 1042434
        %v1648 = vsel %vm1647, %v1646, %v1645
        %v1649 = vrot.slane %v1638, 5
        %vm1650 = vcmask 1043459
        %v1651 = vsel %vm1650, %v1649, %v1648
        %v1652 = vrot.slane %v1639, 4
        %vm1653 = vcmask 1044484
        %v1654 = vsel %vm1653, %v1652, %v1651
        %v1655 = vrot.slane %v1640, 3
        %vm1656 = vcmask 1045509
        %v1657 = vsel %vm1656, %v1655, %v1654
        %v1658 = vrot.slane %v1641, 2
        %vm1659 = vcmask 1046534
        %v1660 = vsel %vm1659, %v1658, %v1657
        %v1661 = vrot.slane %v1642, 1
        %vm1662 = vcmask 1047559
        %v1663 = vsel %vm1662, %v1661, %v1660
        %v1664 = vpack.c.b16 %v1663, %v1663
        %v1682 = vunpack.c.l.b16 %v1611
        %v1683 = vunpack.c.l.b16 %v1612
        %v1684 = vunpack.c.l.b16 %v1613
        %v1685 = vunpack.c.l.b16 %v1614
        %v1686 = vunpack.c.l.b16 %v1615
        %v1687 = vunpack.c.l.b16 %v1616
        %v1688 = vunpack.c.l.b16 %v1617
        %v1689 = vunpack.c.l.b16 %v1618
        %v1690 = vunpack.c.l.b16 %v1619
        %v1691 = vunpack.c.l.b16 %v1620
        %v1692 = vunpack.c.l.b16 %v1621
        %v1693 = vunpack.c.l.b16 %v1622
        %v1694 = vunpack.c.l.b16 %v1623
        %v1695 = vunpack.c.l.b16 %v1624
        %v1696 = vunpack.c.l.b16 %v1625
        %v1697 = vunpack.c.l.b16 %v1626
        %v1698 = vpack.c.b16 %v1683, %v1682
        %v1699 = vpack.c.b16 %v1685, %v1684
        %v1700 = vpack.c.b16 %v1687, %v1686
        %v1701 = vpack.c.b16 %v1689, %v1688
        %v1702 = vpack.c.b16 %v1691, %v1690
        %v1703 = vpack.c.b16 %v1693, %v1692
        %v1704 = vpack.c.b16 %v1695, %v1694
        %v1705 = vpack.c.b16 %v1697, %v1696
        %1714 = vmatprep.subr.bf16.mxu0 0
        %1715 = vmatpush1.bf16.msra.mxu0 %v1705
        %1716 = vmatprep.subr.bf16.mxu0 0
        %1717 = vmatpush1.bf16.msra.mxu0 %v1704
        %1718 = vmatprep.subr.bf16.mxu0 0
        %1719 = vmatpush1.bf16.msra.mxu0 %v1703
        %1720 = vmatprep.subr.bf16.mxu0 0
        %1721 = vmatpush1.bf16.msra.mxu0 %v1702
        %1722 = vmatprep.subr.bf16.mxu0 0
        %1723 = vmatpush1.bf16.msra.mxu0 %v1701
        %1724 = vmatprep.subr.bf16.mxu0 0
        %1725 = vmatpush1.bf16.msra.mxu0 %v1700
        %1726 = vmatprep.subr.bf16.mxu0 0
        %1727 = vmatpush1.bf16.msra.mxu0 %v1699
        %1728 = vmatprep.subr.bf16.mxu0 0
        %1729 = vmatpush1.bf16.msra.mxu0 %v1698
        %1730 = vmatprep.subr.bf16.mxu0 0
        %1731 = vmatpush2.bf16.msra.mxu0 0
        %1732 = vmatprep.subr.bf16.mxu0 0
        %1733 = vmatpush2.bf16.msra.mxu0 0
        %1734 = vmatprep.subr.bf16.mxu0 0
        %1735 = vmatpush2.bf16.msra.mxu0 0
        %1736 = vmatprep.subr.bf16.mxu0 0
        %1737 = vmatpush2.bf16.msra.mxu0 0
        %1738 = vmatprep.subr.bf16.mxu0 0
        %1739 = vmatpush2.bf16.msra.mxu0 0
        %1740 = vmatprep.subr.bf16.mxu0 0
        %1741 = vmatpush2.bf16.msra.mxu0 0
        %1742 = vmatprep.subr.bf16.mxu0 0
        %1743 = vmatpush2.bf16.msra.mxu0 0
        %1744 = vmatprep.subr.bf16.mxu0 0
        %1745 = vmatpush2.bf16.msra.mxu0 0
        %1746 = vmatprep.mubr.bf16.mxu0 0
        %1747 = vmatmul.mubr.bf16.gmra.mxu0 %v1664
        %v1748 = vpop.f32.mrf.mxu0
        %v1749 = vadd.f32 0.0, %v1748
        %v1750 = vpop.f32.mrf.mxu0
        %v1751 = vpop.f32.mrf.mxu0
        %v1752 = vpop.f32.mrf.mxu0
        %1753 = vdwg.mxu0
        %v1754 = vld [vmem:[%s428] sm:$0xff]
        %v1755 = vadd.f32 %v1754, %v1749
        %1756 = vst.msk [vmem:[%s486] sm:$0xff] %vm497, %v1755
        %1757 = vst [vmem:[#allocation8] sm:$0xff] %v1379
        %1758 = vst [vmem:[#allocation8 + $0x8] sm:$0xff] %v1380
        %s1759 = sand.u32 %s291, 1
        %s1760 = scalar_lea.sflag [#allocation11], %s1759
        %s1761 = sand.u32 %s291, 1
        %s1762 = smul.addr %s1761, 8
        %s1763 = scalar_lea.vmem [#allocation20], %s1762
        // Predicated region
        $region93: #{tpu_custom_call.1} parent=63 // pred_check
          %p1764 = pneg %p301
        $region94: #{tpu_custom_call.1} parent=63 // pred_check_branch
          %1766 = sbr.rel (%p1764) target = $region96
        $region95: #{tpu_custom_call.1} parent=63 // pred_region
          %s1768 = ssub.s32 128, 128
          %1769 = vsyncadd %s1760, %s1768
          %s1770 = smul.addr %s35, 2
          %s1771 = sadd.s32 %s36, %s1770
          %s1772 = smul.addr %s1771, 128
          %s1773 = scalar_lea.hbm %s11, %s1772
          %s1775 = sshll.u32 %s1763, 4
          %s1776 = int_to_ptr.vmem [resolvable:$true] %s1775
          %1778 = dma.vmem_to_hbm [thread:$0]  %s1776, 128, %s1773, %s1760
        $region96: #{tpu_custom_call.1} parent=63 // pred_fallthru
          _
      $region64: #{tpu_custom_call.1} parent=5 // pred_fallthru
        _
      %p1779 = scmp.le.s32.totalorder 2, %s26
      // Predicated region
      $region97: #{tpu_custom_call.1} parent=5 // pred_check
        %p1780 = pneg %p1779
      $region98: #{tpu_custom_call.1} parent=5 // pred_check_branch
        %1782 = sbr.rel (%p1780) target = $region100
      $region99: #{tpu_custom_call.1} parent=5 // pred_region
        %s1783 = ssub.s32 %s26, 2
        // Predicated region
        $region101: #{tpu_custom_call.1} parent=99 // pred_check
          %p1784 = pneg %p307
        $region102: #{tpu_custom_call.1} parent=99 // pred_check_branch
          %1786 = sbr.rel (%p1784) target = $region104
        $region103: #{tpu_custom_call.1} parent=99 // pred_region
          %s1787 = sand.u32 %s292, 1
          %s1788 = scalar_lea.sflag [#allocation11], %s1787
          %s1789 = sand.u32 %s292, 1
          %s1790 = smul.addr %s1789, 8
          %s1791 = scalar_lea.vmem [#allocation20], %s1790
          %1792 = dma.done %s1788, 128
        $region104: #{tpu_custom_call.1} parent=99 // pred_fallthru
          _
      $region100: #{tpu_custom_call.1} parent=5 // pred_fallthru
        _
    $region6: #{tpu_custom_call.1} parent=1 // loop_footer
      %s30 = sadd.s32 1, %s26
    $region7: #{tpu_custom_call.1} parent=1 // loop_footer_branch
      %25 = sbr.rel target = $region3
    $region8: #{tpu_custom_call.1} parent=1 // loop_exit
      _
    %1793 = vsyncpa [#allocation10], 1
    %s1794 = scalar_lea.sflag [#allocation10], 1
    %1795 = vsyncpa %s1794, 1
    %1796 = vsyncpa [#allocation13], 1
    %1797 = vsyncpa [#allocation16], 1
    %1798 = vsyncpa [#allocation19], 1
    %1799 = vsyncpa [#allocation11], 1
    %s1800 = scalar_lea.sflag [#allocation11], 1
    %1801 = vsyncpa %s1800, 1

// kernel: tpu_custom_call.1
$region0: #{tpu_custom_call.1}
  #allocation0 [shape = 'u32[]', space=smem, size = 0x4, offset = 0x4, fixed_abs, tag = 'smem constant byte address 0x4 - core index']
  #allocation1 [shape = 'u32[144,128]{1,0:T(1,128)}', space=vmem, size = 0x12000, scoped, tag = 'internal scratch']
  #allocation2 [shape = 'f32[16,128]{1,0:T(8,128)}', space=vmem, size = 0x2000, scoped, tag = 'scratch operand']
  #allocation3 [shape = 'f32[8,128]{1,0:T(8,128)}', space=vmem, size = 0x1000, scoped, tag = 'scratch operand']
  #allocation4 [shape = 'f32[8,128]{1,0:T(8,128)}', space=vmem, size = 0x1000, scoped, tag = 'scratch operand']
  #allocation5 [shape = 'f32[8,128]{1,0:T(8,128)}', space=vmem, size = 0x1000, scoped, tag = 'scratch operand']
  #allocation6 [shape = 'f32[8,128]{1,0:T(8,128)}', space=vmem, size = 0x1000, scoped, tag = 'scratch operand']
  #allocation7 [shape = 'f32[8,128]{1,0:T(8,128)}', space=vmem, size = 0x1000, scoped, tag = 'scratch operand']
  #allocation8 [shape = 'f32[16,128]{1,0:T(8,128)}', space=vmem, size = 0x2000, scoped, tag = 'scratch operand']
  %s0 = inlined_call_operand.hbm [shape: f32[2,16,32], index: 0, kind: input, shape index: {}]
  %s1 = inlined_call_operand.vmem [shape: f32[1,32], index: 1, kind: input, shape index: {}]
  %s2 = inlined_call_operand.hbm [shape: bf16[32,256], index: 2, kind: input, shape index: {}]
  %s3 = inlined_call_operand.hbm [shape: f32[4,128], index: 3, kind: input, shape index: {}]
  %s4 = inlined_call_operand.vmem [shape: f32[1,128], index: 4, kind: input, shape index: {}]
  %s5 = inlined_call_operand.hbm [shape: bf16[128,384], index: 5, kind: input, shape index: {}]
  %s6 = inlined_call_operand.vmem [shape: bf16[128,128], index: 6, kind: input, shape index: {}]
  %s7 = inlined_call_operand.hbm [shape: f32[1,128], index: 7, kind: input, shape index: {}]
  %s8 = inlined_call_operand.vmem [shape: f32[16,128], index: 8, kind: input, shape index: {}]
  %s9 = inlined_call_operand.hbm [shape: f32[1,128], index: 9, kind: input, shape index: {}]
  %s10 = inlined_call_operand.vmem [shape: bf16[128,32], index: 10, kind: input, shape index: {}]
  %s11 = inlined_call_operand.hbm [shape: f32[2,16,32], index: 11, kind: output, shape index: {}]
  %s12 = sld [smem:[#allocation0]]
  $region105: #{tpu_custom_call.1} parent=0
    _
  %s14 = ssub.s32 1, %s12
  %s15 = scalar_select 0, %s14, %s12
  $region1: #{tpu_custom_call.1} parent=0
    #allocation9 [shape = 'u8[8192]{0}', space=vmem, size = 0x2000, scoped, tag = 'input window, operand 0']
    #allocation10 [shape = 's32[2]{0}', space=sflag, size = 0x8, scoped, tag = 'scoped memory for tpu_custom_call.1']
    #allocation11 [shape = 's32[2]{0}', space=sflag, size = 0x8, scoped, tag = 'scoped memory for tpu_custom_call.1']
    #allocation12 [shape = 'u8[16384]{0}', space=vmem, size = 0x4000, scoped, tag = 'input window, operand 2, single buffered']
    #allocation13 [shape = 's32[1]{0}', space=sflag, size = 0x4, scoped, tag = 'scoped memory for tpu_custom_call.1']
    #allocation14 [shape = 'u8[2048]{0}', space=vmem, size = 0x800, scoped, tag = 'input window, operand 3, single buffered']
    #allocation15 [shape = 'u8[98304]{0}', space=vmem, size = 0x18000, scoped, tag = 'input window, operand 5, single buffered']
    #allocation16 [shape = 's32[1]{0}', space=sflag, size = 0x4, scoped, tag = 'scoped memory for tpu_custom_call.1']
    #allocation17 [shape = 'u8[512]{0}', space=vmem, size = 0x400, scoped, tag = 'input window, operand 7, single buffered']
    #allocation18 [shape = 'u8[512]{0}', space=vmem, size = 0x400, scoped, tag = 'input window, operand 9, single buffered']
    #allocation19 [shape = 's32[1]{0}', space=sflag, size = 0x4, scoped, tag = 'scoped memory for tpu_custom_call.1']
    #allocation20 [shape = 'u8[8192]{0}', space=vmem, size = 0x2000, scoped, tag = 'output window, operand 0']
    %16 = vsyncpa [#allocation10], 0
    %s17 = scalar_lea.sflag [#allocation10], 1
    %18 = vsyncpa %s17, 0
    %19 = vsyncpa [#allocation13], 0
    %20 = vsyncpa [#allocation16], 0
    %21 = vsyncpa [#allocation19], 0
    %22 = vsyncpa [#allocation11], 0
    %s23 = scalar_lea.sflag [#allocation11], 1
    %24 = vsyncpa %s23, 0
    loop: start=0, step=1, limit=6
    $region2: #{tpu_custom_call.1} parent=1 // loop_pre_header
      _
    $region3: #{tpu_custom_call.1} parent=1 // loop_header
      %s26 = sphi 0, %s30
      %p27 = scmp.ge.s32.totalorder %s26, 6
      %s33 = sphi 0, %s45
      %s34 = sphi 0, %s41
      %s35 = sphi 0, %s33
      %s36 = sphi 0, %s34
      %s37 = sphi 0, %s35
      %s38 = sphi 0, %s36
      %s50 = sphi 0, %s52
      %s53 = sphi 0, %s50
      %s54 = sphi 0, %s53
      %s70 = sphi 0, %s54
      %s74 = sphi 0, %s74
      %s76 = sphi 0, %s74
      %s77 = sphi 0, %s76
      %s91 = sphi 0, %s77
      %s95 = sphi 0, %s95
      %s97 = sphi 0, %s95
      %s98 = sphi 0, %s97
      %s112 = sphi 0, %s98
      %s116 = sphi 0, %s116
      %s118 = sphi 0, %s116
      %s119 = sphi 0, %s118
      %s133 = sphi 0, %s119
      %s137 = sphi 0, %s137
      %s139 = sphi 0, %s137
      %s140 = sphi 0, %s139
      %s154 = sphi 0, %s140
      %s158 = sphi 0, %s158
      %s160 = sphi 0, %s158
      %s161 = sphi 0, %s160
      %s175 = sphi 0, %s161
      %s179 = sphi 0, %s179
      %s181 = sphi 0, %s179
      %s182 = sphi 0, %s181
      %s196 = sphi 0, %s182
      %s200 = sphi 0, %s200
      %s202 = sphi 0, %s200
      %s203 = sphi 0, %s202
      %s217 = sphi 0, %s203
      %s221 = sphi 0, %s221
      %s223 = sphi 0, %s221
      %s224 = sphi 0, %s223
      %s238 = sphi 0, %s224
      %s242 = sphi 0, %s242
      %s244 = sphi 0, %s242
      %s245 = sphi 0, %s244
      %s259 = sphi 0, %s245
      %s263 = sphi 0, %s263
      %s265 = sphi 0, %s263
      %s266 = sphi 0, %s265
      %s280 = sphi 0, %s266
      %s288 = sphi 0, %s290
      %s291 = sphi 0, %s288
      %s292 = sphi 0, %s291
      %s308 = sphi 0, %s292
    $region4: #{tpu_custom_call.1} parent=1 // loop_header_branch
      %29 = sbr.rel (%p27) target = $region8
    $region5: #{tpu_custom_call.1} parent=1 // loop_body
      %s31 = ssub.s32 %s26, 1
      %s32 = ssub.s32 %s26, 2
      %s39 = sadd.s32 1, %s34
      %p40 = scmp.ge.s32.totalorder %s39, 2
      %s41 = scalar_select %p40, 0, %s39
      %s42 = sadd.s32 1, %s33
      %s43 = scalar_select %p40, %s42, %s33
      %p44 = scmp.ge.s32.totalorder %s43, 2
      %s45 = scalar_select %p44, 0, %s43
      %s46 = ssub.s32 %s33, %s45
      %s47 = ssub.s32 %s34, %s41
      %s48 = sor.u32 %s46, %s47
      %p49 = scmp.eq.s32.totalorder %s48, 0
      %s51 = sadd.s32 %s50, 1
      %s52 = scalar_select %p49, %s50, %s51
      %p55 = pneg %p49
      %p56 = scmp.eq.s32.totalorder %s26, 3
      %p57 = por %p55, %p56
      %p58 = scmp.ne.s32.totalorder %s50, %s53
      %p59 = scmp.eq.s32.totalorder %s26, 0
      %p60 = por %p58, %p59
      %p61 = scmp.ne.s32.totalorder %s50, %s53
      %p62 = scmp.eq.s32.totalorder %s31, 3
      %p63 = por %p61, %p62
      %p64 = scmp.ne.s32.totalorder %s53, %s54
      %p65 = scmp.eq.s32.totalorder %s31, 0
      %p66 = por %p64, %p65
      %p67 = scmp.ne.s32.totalorder %s53, %s54
      %p68 = scmp.eq.s32.totalorder %s32, 3
      %p69 = por %p67, %p68
      %p71 = scmp.ne.s32.totalorder %s54, %s70
      %p72 = scmp.eq.s32.totalorder %s32, 0
      %p73 = por %p71, %p72
      %s75 = sadd.s32 %s74, 1
      %p78 = scmp.eq.s32.totalorder %s26, 3
      %p79 = scmp.ne.s32.totalorder %s74, %s76
      %p80 = scmp.eq.s32.totalorder %s26, 0
      %p81 = por %p79, %p80
      %p82 = scmp.ne.s32.totalorder %s74, %s76
      %p83 = scmp.eq.s32.totalorder %s31, 3
      %p84 = por %p82, %p83
      %p85 = scmp.ne.s32.totalorder %s76, %s77
      %p86 = scmp.eq.s32.totalorder %s31, 0
      %p87 = por %p85, %p86
      %p88 = scmp.ne.s32.totalorder %s76, %s77
      %p89 = scmp.eq.s32.totalorder %s32, 3
      %p90 = por %p88, %p89
      %p92 = scmp.ne.s32.totalorder %s77, %s91
      %p93 = scmp.eq.s32.totalorder %s32, 0
      %p94 = por %p92, %p93
      %s96 = sadd.s32 %s95, 1
      %p99 = scmp.eq.s32.totalorder %s26, 3
      %p100 = scmp.ne.s32.totalorder %s95, %s97
      %p101 = scmp.eq.s32.totalorder %s26, 0
      %p102 = por %p100, %p101
      %p103 = scmp.ne.s32.totalorder %s95, %s97
      %p104 = scmp.eq.s32.totalorder %s31, 3
      %p105 = por %p103, %p104
      %p106 = scmp.ne.s32.totalorder %s97, %s98
      %p107 = scmp.eq.s32.totalorder %s31, 0
      %p108 = por %p106, %p107
      %p109 = scmp.ne.s32.totalorder %s97, %s98
      %p110 = scmp.eq.s32.totalorder %s32, 3
      %p111 = por %p109, %p110
      %p113 = scmp.ne.s32.totalorder %s98, %s112
      %p114 = scmp.eq.s32.totalorder %s32, 0
      %p115 = por %p113, %p114
      %s117 = sadd.s32 %s116, 1
      %p120 = scmp.eq.s32.totalorder %s26, 3
      %p121 = scmp.ne.s32.totalorder %s116, %s118
      %p122 = scmp.eq.s32.totalorder %s26, 0
      %p123 = por %p121, %p122
      %p124 = scmp.ne.s32.totalorder %s116, %s118
      %p125 = scmp.eq.s32.totalorder %s31, 3
      %p126 = por %p124, %p125
      %p127 = scmp.ne.s32.totalorder %s118, %s119
      %p128 = scmp.eq.s32.totalorder %s31, 0
      %p129 = por %p127, %p128
      %p130 = scmp.ne.s32.totalorder %s118, %s119
      %p131 = scmp.eq.s32.totalorder %s32, 3
      %p132 = por %p130, %p131
      %p134 = scmp.ne.s32.totalorder %s119, %s133
      %p135 = scmp.eq.s32.totalorder %s32, 0
      %p136 = por %p134, %p135
      %s138 = sadd.s32 %s137, 1
      %p141 = scmp.eq.s32.totalorder %s26, 3
      %p142 = scmp.ne.s32.totalorder %s137, %s139
      %p143 = scmp.eq.s32.totalorder %s26, 0
      %p144 = por %p142, %p143
      %p145 = scmp.ne.s32.totalorder %s137, %s139
      %p146 = scmp.eq.s32.totalorder %s31, 3
      %p147 = por %p145, %p146
      %p148 = scmp.ne.s32.totalorder %s139, %s140
      %p149 = scmp.eq.s32.totalorder %s31, 0
      %p150 = por %p148, %p149
      %p151 = scmp.ne.s32.totalorder %s139, %s140
      %p152 = scmp.eq.s32.totalorder %s32, 3
      %p153 = por %p151, %p152
      %p155 = scmp.ne.s32.totalorder %s140, %s154
      %p156 = scmp.eq.s32.totalorder %s32, 0
      %p157 = por %p155, %p156
      %s159 = sadd.s32 %s158, 1
      %p162 = scmp.eq.s32.totalorder %s26, 3
      %p163 = scmp.ne.s32.totalorder %s158, %s160
      %p164 = scmp.eq.s32.totalorder %s26, 0
      %p165 = por %p163, %p164
      %p166 = scmp.ne.s32.totalorder %s158, %s160
      %p167 = scmp.eq.s32.totalorder %s31, 3
      %p168 = por %p166, %p167
      %p169 = scmp.ne.s32.totalorder %s160, %s161
      %p170 = scmp.eq.s32.totalorder %s31, 0
      %p171 = por %p169, %p170
      %p172 = scmp.ne.s32.totalorder %s160, %s161
      %p173 = scmp.eq.s32.totalorder %s32, 3
      %p174 = por %p172, %p173
      %p176 = scmp.ne.s32.totalorder %s161, %s175
      %p177 = scmp.eq.s32.totalorder %s32, 0
      %p178 = por %p176, %p177
      %s180 = sadd.s32 %s179, 1
      %p183 = scmp.eq.s32.totalorder %s26, 3
      %p184 = scmp.ne.s32.totalorder %s179, %s181
      %p185 = scmp.eq.s32.totalorder %s26, 0
      %p186 = por %p184, %p185
      %p187 = scmp.ne.s32.totalorder %s179, %s181
      %p188 = scmp.eq.s32.totalorder %s31, 3
      %p189 = por %p187, %p188
      %p190 = scmp.ne.s32.totalorder %s181, %s182
      %p191 = scmp.eq.s32.totalorder %s31, 0
      %p192 = por %p190, %p191
      %p193 = scmp.ne.s32.totalorder %s181, %s182
      %p194 = scmp.eq.s32.totalorder %s32, 3
      %p195 = por %p193, %p194
      %p197 = scmp.ne.s32.totalorder %s182, %s196
      %p198 = scmp.eq.s32.totalorder %s32, 0
      %p199 = por %p197, %p198
      %s201 = sadd.s32 %s200, 1
      %p204 = scmp.eq.s32.totalorder %s26, 3
      %p205 = scmp.ne.s32.totalorder %s200, %s202
      %p206 = scmp.eq.s32.totalorder %s26, 0
      %p207 = por %p205, %p206
      %p208 = scmp.ne.s32.totalorder %s200, %s202
      %p209 = scmp.eq.s32.totalorder %s31, 3
      %p210 = por %p208, %p209
      %p211 = scmp.ne.s32.totalorder %s202, %s203
      %p212 = scmp.eq.s32.totalorder %s31, 0
      %p213 = por %p211, %p212
      %p214 = scmp.ne.s32.totalorder %s202, %s203
      %p215 = scmp.eq.s32.totalorder %s32, 3
      %p216 = por %p214, %p215
      %p218 = scmp.ne.s32.totalorder %s203, %s217
      %p219 = scmp.eq.s32.totalorder %s32, 0
      %p220 = por %p218, %p219
      %s222 = sadd.s32 %s221, 1
      %p225 = scmp.eq.s32.totalorder %s26, 3
      %p226 = scmp.ne.s32.totalorder %s221, %s223
      %p227 = scmp.eq.s32.totalorder %s26, 0
      %p228 = por %p226, %p227
      %p229 = scmp.ne.s32.totalorder %s221, %s223
      %p230 = scmp.eq.s32.totalorder %s31, 3
      %p231 = por %p229, %p230
      %p232 = scmp.ne.s32.totalorder %s223, %s224
      %p233 = scmp.eq.s32.totalorder %s31, 0
      %p234 = por %p232, %p233
      %p235 = scmp.ne.s32.totalorder %s223, %s224
      %p236 = scmp.eq.s32.totalorder %s32, 3
      %p237 = por %p235, %p236
      %p239 = scmp.ne.s32.totalorder %s224, %s238
      %p240 = scmp.eq.s32.totalorder %s32, 0
      %p241 = por %p239, %p240
      %s243 = sadd.s32 %s242, 1
      %p246 = scmp.eq.s32.totalorder %s26, 3
      %p247 = scmp.ne.s32.totalorder %s242, %s244
      %p248 = scmp.eq.s32.totalorder %s26, 0
      %p249 = por %p247, %p248
      %p250 = scmp.ne.s32.totalorder %s242, %s244
      %p251 = scmp.eq.s32.totalorder %s31, 3
      %p252 = por %p250, %p251
      %p253 = scmp.ne.s32.totalorder %s244, %s245
      %p254 = scmp.eq.s32.totalorder %s31, 0
      %p255 = por %p253, %p254
      %p256 = scmp.ne.s32.totalorder %s244, %s245
      %p257 = scmp.eq.s32.totalorder %s32, 3
      %p258 = por %p256, %p257
      %p260 = scmp.ne.s32.totalorder %s245, %s259
      %p261 = scmp.eq.s32.totalorder %s32, 0
      %p262 = por %p260, %p261
      %s264 = sadd.s32 %s263, 1
      %p267 = scmp.eq.s32.totalorder %s26, 3
      %p268 = scmp.ne.s32.totalorder %s263, %s265
      %p269 = scmp.eq.s32.totalorder %s26, 0
      %p270 = por %p268, %p269
      %p271 = scmp.ne.s32.totalorder %s263, %s265
      %p272 = scmp.eq.s32.totalorder %s31, 3
      %p273 = por %p271, %p272
      %p274 = scmp.ne.s32.totalorder %s265, %s266
      %p275 = scmp.eq.s32.totalorder %s31, 0
      %p276 = por %p274, %p275
      %p277 = scmp.ne.s32.totalorder %s265, %s266
      %p278 = scmp.eq.s32.totalorder %s32, 3
      %p279 = por %p277, %p278
      %p281 = scmp.ne.s32.totalorder %s266, %s280
      %p282 = scmp.eq.s32.totalorder %s32, 0
      %p283 = por %p281, %p282
      %s284 = ssub.s32 %s33, %s45
      %s285 = ssub.s32 %s34, %s41
      %s286 = sor.u32 %s284, %s285
      %p287 = scmp.eq.s32.totalorder %s286, 0
      %s289 = sadd.s32 %s288, 1
      %s290 = scalar_select %p287, %s288, %s289
      %p293 = pneg %p287
      %p294 = scmp.eq.s32.totalorder %s26, 3
      %p295 = por %p293, %p294
      %p296 = scmp.ne.s32.totalorder %s288, %s291
      %p297 = scmp.eq.s32.totalorder %s26, 0
      %p298 = por %p296, %p297
      %p299 = scmp.ne.s32.totalorder %s288, %s291
      %p300 = scmp.eq.s32.totalorder %s31, 3
      %p301 = por %p299, %p300
      %p302 = scmp.ne.s32.totalorder %s291, %s292
      %p303 = scmp.eq.s32.totalorder %s31, 0
      %p304 = por %p302, %p303
      %p305 = scmp.ne.s32.totalorder %s291, %s292
      %p306 = scmp.eq.s32.totalorder %s32, 3
      %p307 = por %p305, %p306
      %p309 = scmp.ne.s32.totalorder %s292, %s308
      %p310 = scmp.eq.s32.totalorder %s32, 0
      %p311 = por %p309, %p310
      %p312 = scmp.le.s32.totalorder 1, %s26
      %p313 = scmp.lt.s32.totalorder %s26, 5
      %p314 = pnand %p312, %p313
      %p315 = pneg %p314
      // Predicated region
      $region9: #{tpu_custom_call.1} parent=5 // pred_check
        _
      $region10: #{tpu_custom_call.1} parent=5 // pred_check_branch
        %317 = sbr.rel (%p314) target = $region12
      $region11: #{tpu_custom_call.1} parent=5 // pred_region
        %s318 = ssub.s32 %s26, 1
        // Predicated region
        $region13: #{tpu_custom_call.1} parent=11 // pred_check
          %p319 = pneg %p87
        $region14: #{tpu_custom_call.1} parent=11 // pred_check_branch
          %321 = sbr.rel (%p319) target = $region16
        $region15: #{tpu_custom_call.1} parent=11 // pred_region
          _
        $region16: #{tpu_custom_call.1} parent=11 // pred_fallthru
          _
        // Predicated region
        $region17: #{tpu_custom_call.1} parent=11 // pred_check
          %p322 = pneg %p108
        $region18: #{tpu_custom_call.1} parent=11 // pred_check_branch
          %324 = sbr.rel (%p322) target = $region20
        $region19: #{tpu_custom_call.1} parent=11 // pred_region
          %s326 = ssub.s32 512, 512
          %327 = vsyncadd [#allocation13], %s326
          %s328 = sshll.u32 [#allocation12], 4
          %s329 = int_to_ptr.vmem [resolvable:$true] %s328
          %334 = dma.hbm_to_vmem [thread:$0]  %s2, 512, %s329, [#allocation13], 128, 128, 8
        $region20: #{tpu_custom_call.1} parent=11 // pred_fallthru
          _
        // Predicated region
        $region21: #{tpu_custom_call.1} parent=11 // pred_check
          %p335 = pneg %p129
        $region22: #{tpu_custom_call.1} parent=11 // pred_check_branch
          %337 = sbr.rel (%p335) target = $region24
        $region23: #{tpu_custom_call.1} parent=11 // pred_region
          %s339 = ssub.s32 64, 64
          %340 = vsyncadd [#allocation13], %s339
          %s342 = sshll.u32 [#allocation14], 4
          %s343 = int_to_ptr.vmem [resolvable:$true] %s342
          %345 = dma.hbm_to_vmem [thread:$0]  %s3, 64, %s343, [#allocation13]
        $region24: #{tpu_custom_call.1} parent=11 // pred_fallthru
          _
        // Predicated region
        $region25: #{tpu_custom_call.1} parent=11 // pred_check
          %p346 = pneg %p150
        $region26: #{tpu_custom_call.1} parent=11 // pred_check_branch
          %348 = sbr.rel (%p346) target = $region28
        $region27: #{tpu_custom_call.1} parent=11 // pred_region
          _
        $region28: #{tpu_custom_call.1} parent=11 // pred_fallthru
          _
        // Predicated region
        $region29: #{tpu_custom_call.1} parent=11 // pred_check
          %p349 = pneg %p171
        $region30: #{tpu_custom_call.1} parent=11 // pred_check_branch
          %351 = sbr.rel (%p349) target = $region32
        $region31: #{tpu_custom_call.1} parent=11 // pred_region
          %s353 = ssub.s32 3072, 3072
          %354 = vsyncadd [#allocation16], %s353
          %s355 = sshll.u32 [#allocation15], 4
          %s356 = int_to_ptr.vmem [resolvable:$true] %s355
          %361 = dma.hbm_to_vmem [thread:$0]  %s5, 3072, %s356, [#allocation16], 192, 192, 12
        $region32: #{tpu_custom_call.1} parent=11 // pred_fallthru
          _
        // Predicated region
        $region33: #{tpu_custom_call.1} parent=11 // pred_check
          %p362 = pneg %p192
        $region34: #{tpu_custom_call.1} parent=11 // pred_check_branch
          %364 = sbr.rel (%p362) target = $region36
        $region35: #{tpu_custom_call.1} parent=11 // pred_region
          _
        $region36: #{tpu_custom_call.1} parent=11 // pred_fallthru
          _
        // Predicated region
        $region37: #{tpu_custom_call.1} parent=11 // pred_check
          %p365 = pneg %p213
        $region38: #{tpu_custom_call.1} parent=11 // pred_check_branch
          %367 = sbr.rel (%p365) target = $region40
        $region39: #{tpu_custom_call.1} parent=11 // pred_region
          %s369 = ssub.s32 16, 16
          %370 = vsyncadd [#allocation16], %s369
          %s372 = sshll.u32 [#allocation17], 4
          %s373 = int_to_ptr.vmem [resolvable:$true] %s372
          %375 = dma.hbm_to_vmem [thread:$0]  %s7, 16, %s373, [#allocation16]
        $region40: #{tpu_custom_call.1} parent=11 // pred_fallthru
          _
        // Predicated region
        $region41: #{tpu_custom_call.1} parent=11 // pred_check
          %p376 = pneg %p234
        $region42: #{tpu_custom_call.1} parent=11 // pred_check_branch
          %378 = sbr.rel (%p376) target = $region44
        $region43: #{tpu_custom_call.1} parent=11 // pred_region
          _
        $region44: #{tpu_custom_call.1} parent=11 // pred_fallthru
          _
        // Predicated region
        $region45: #{tpu_custom_call.1} parent=11 // pred_check
          %p379 = pneg %p255
        $region46: #{tpu_custom_call.1} parent=11 // pred_check_branch
          %381 = sbr.rel (%p379) target = $region48
        $region47: #{tpu_custom_call.1} parent=11 // pred_region
          %s383 = ssub.s32 16, 16
          %384 = vsyncadd [#allocation19], %s383
          %s386 = sshll.u32 [#allocation18], 4
          %s387 = int_to_ptr.vmem [resolvable:$true] %s386
          %389 = dma.hbm_to_vmem [thread:$0]  %s9, 16, %s387, [#allocation19]
        $region48: #{tpu_custom_call.1} parent=11 // pred_fallthru
          _
        // Predicated region
        $region49: #{tpu_custom_call.1} parent=11 // pred_check
          %p390 = pneg %p276
        $region50: #{tpu_custom_call.1} parent=11 // pred_check_branch
          %392 = sbr.rel (%p390) target = $region52
        $region51: #{tpu_custom_call.1} parent=11 // pred_region
          _
        $region52: #{tpu_custom_call.1} parent=11 // pred_fallthru
          _
      $region12: #{tpu_custom_call.1} parent=5 // pred_fallthru
        _
      %p393 = scmp.lt.s32.totalorder %s26, 4
      // Predicated region
      $region53: #{tpu_custom_call.1} parent=5 // pred_check
        %p394 = pneg %p393
      $region54: #{tpu_custom_call.1} parent=5 // pred_check_branch
        %396 = sbr.rel (%p394) target = $region56
      $region55: #{tpu_custom_call.1} parent=5 // pred_region
        // Predicated region
        $region57: #{tpu_custom_call.1} parent=55 // pred_check
          %p397 = pneg %p60
        $region58: #{tpu_custom_call.1} parent=55 // pred_check_branch
          %399 = sbr.rel (%p397) target = $region60
        $region59: #{tpu_custom_call.1} parent=55 // pred_region
          %s400 = sand.u32 %s50, 1
          %s401 = scalar_lea.sflag [#allocation10], %s400
          %s402 = sand.u32 %s50, 1
          %s403 = smul.addr %s402, 8
          %s404 = scalar_lea.vmem [#allocation9], %s403
          %s406 = ssub.s32 128, 128
          %407 = vsyncadd %s401, %s406
          %s408 = smul.addr %s33, 2
          %s409 = sadd.s32 %s34, %s408
          %s410 = smul.addr %s409, 128
          %s411 = scalar_lea.hbm %s0, %s410
          %s413 = sshll.u32 %s404, 4
          %s414 = int_to_ptr.vmem [resolvable:$true] %s413
          %416 = dma.hbm_to_vmem [thread:$0]  %s411, 128, %s414, %s401
        $region60: #{tpu_custom_call.1} parent=55 // pred_fallthru
          _
      $region56: #{tpu_custom_call.1} parent=5 // pred_fallthru
        _
      %p417 = scmp.le.s32.totalorder 1, %s26
      %p418 = scmp.lt.s32.totalorder %s26, 5
      %p419 = pnand %p417, %p418
      %p420 = pneg %p419
      // Predicated region
      $region61: #{tpu_custom_call.1} parent=5 // pred_check
        _
      $region62: #{tpu_custom_call.1} parent=5 // pred_check_branch
        %422 = sbr.rel (%p419) target = $region64
      $region63: #{tpu_custom_call.1} parent=5 // pred_region
        %s423 = ssub.s32 %s26, 1
        %s424 = sand.u32 %s53, 1
        %s425 = scalar_lea.sflag [#allocation10], %s424
        %s426 = sand.u32 %s53, 1
        %s427 = smul.addr %s426, 8
        %s428 = scalar_lea.vmem [#allocation9], %s427
        // Predicated region
        $region65: #{tpu_custom_call.1} parent=63 // pred_check
          %p429 = pneg %p66
        $region66: #{tpu_custom_call.1} parent=63 // pred_check_branch
          %431 = sbr.rel (%p429) target = $region68
        $region67: #{tpu_custom_call.1} parent=63 // pred_region
          %432 = dma.done %s425, 128
        $region68: #{tpu_custom_call.1} parent=63 // pred_fallthru
          _
        // Predicated region
        $region69: #{tpu_custom_call.1} parent=63 // pred_check
          %p433 = pneg %p108
        $region70: #{tpu_custom_call.1} parent=63 // pred_check_branch
          %435 = sbr.rel (%p433) target = $region72
        $region71: #{tpu_custom_call.1} parent=63 // pred_region
          %436 = dma.done [#allocation13], 512
        $region72: #{tpu_custom_call.1} parent=63 // pred_fallthru
          _
        // Predicated region
        $region73: #{tpu_custom_call.1} parent=63 // pred_check
          %p437 = pneg %p129
        $region74: #{tpu_custom_call.1} parent=63 // pred_check_branch
          %439 = sbr.rel (%p437) target = $region76
        $region75: #{tpu_custom_call.1} parent=63 // pred_region
          %440 = dma.done [#allocation13], 64
        $region76: #{tpu_custom_call.1} parent=63 // pred_fallthru
          _
        // Predicated region
        $region77: #{tpu_custom_call.1} parent=63 // pred_check
          %p441 = pneg %p171
        $region78: #{tpu_custom_call.1} parent=63 // pred_check_branch
          %443 = sbr.rel (%p441) target = $region80
        $region79: #{tpu_custom_call.1} parent=63 // pred_region
          %444 = dma.done [#allocation16], 3072
        $region80: #{tpu_custom_call.1} parent=63 // pred_fallthru
          _
        // Predicated region
        $region81: #{tpu_custom_call.1} parent=63 // pred_check
          %p445 = pneg %p213
        $region82: #{tpu_custom_call.1} parent=63 // pred_check_branch
          %447 = sbr.rel (%p445) target = $region84
        $region83: #{tpu_custom_call.1} parent=63 // pred_region
          %448 = dma.done [#allocation16], 16
        $region84: #{tpu_custom_call.1} parent=63 // pred_fallthru
          _
        // Predicated region
        $region85: #{tpu_custom_call.1} parent=63 // pred_check
          %p449 = pneg %p255
        $region86: #{tpu_custom_call.1} parent=63 // pred_check_branch
          %451 = sbr.rel (%p449) target = $region88
        $region87: #{tpu_custom_call.1} parent=63 // pred_region
          %452 = dma.done [#allocation19], 16
        $region88: #{tpu_custom_call.1} parent=63 // pred_fallthru
          _
        %s453 = sand.u32 %s53, 1
        %s454 = scalar_lea.sflag [#allocation10], %s453
        %s455 = sand.u32 %s53, 1
        %s456 = smul.addr %s455, 8
        %s457 = scalar_lea.vmem [#allocation9], %s456
        %p458 = pneg %p66
        %p459 = pneg %p63
        %p460 = pneg %p87
        %p461 = pneg %p84
        %p462 = pneg %p108
        %p463 = pneg %p105
        %p464 = pneg %p129
        %p465 = pneg %p126
        %p466 = pneg %p150
        %p467 = pneg %p147
        %p468 = pneg %p171
        %p469 = pneg %p168
        %p470 = pneg %p192
        %p471 = pneg %p189
        %p472 = pneg %p213
        %p473 = pneg %p210
        %p474 = pneg %p234
        %p475 = pneg %p231
        %p476 = pneg %p255
        %p477 = pneg %p252
        %p478 = pneg %p276
        %p479 = pneg %p273
        %p480 = pneg %p304
        %p481 = pneg %p301
        %s482 = sand.u32 %s291, 1
        %s483 = scalar_lea.sflag [#allocation11], %s482
        %s484 = sand.u32 %s291, 1
        %s485 = smul.addr %s484, 8
        %s486 = scalar_lea.vmem [#allocation20], %s485
        %p488 = scmp.eq.s32.totalorder %s36, 0
        // Predicated region
        $region89: #{tpu_custom_call.1} parent=63 // pred_check
          %p489 = pneg %p488
        $region90: #{tpu_custom_call.1} parent=63 // pred_check_branch
          %491 = sbr.rel (%p489) target = $region92
        $region91: #{tpu_custom_call.1} parent=63 // pred_region
          %492 = vst [vmem:[#allocation8] sm:$0xff] 0.0
          %493 = vst [vmem:[#allocation8 + $0x8] sm:$0xff] 0.0
          %494 = vst [vmem:[#allocation2] sm:$0xff] 0.0
        $region92: #{tpu_custom_call.1} parent=63 // pred_fallthru
          _
        %v495 = vld [vmem:[%s428] sm:$0xff]
        %v496 = vmul.f32 %v495, %v495
        %vm497 = vcmask 261120
        %v498 = vsel %vm497, %v496, 0.0
        %499 = vadd.xlane.f32.xlu0 %v498
        %v500 = vpop.xlane.xlu0 %499
        %v501 = vrcp.pop 32.0
        %v502 = vmul.f32 %v500, %v501
        %v503 = vadd.f32 %v502, 1e-06
        %v504 = vrsqrt.pop %v503
        %v505 = vmul.f32 %v495, %v504
        %v506 = vld [vmem:[%s1] sm:$0x1]
        %v508 = vlaneseq
        %v509 = vshrl.u32 %v508, 7
        %v510 = vsub.s32 0, %v509
        %v511 = vrot.slane %v506, %v510
        %v513 = vmul.f32 %v505, %v511
        %v514 = vpack.c.bf16 %v513, %v513
        %v515 = vld [vmem:[#allocation12] sm:$0xff]
        %v516 = vld [vmem:[#allocation12 + $0x8] sm:$0xff]
        %v517 = vld [vmem:[#allocation12 + $0x10] sm:$0xff]
        %v518 = vld [vmem:[#allocation12 + $0x18] sm:$0xff]
        %v523 = vunpack.c.l.b16 %v515
        %v524 = vunpack.c.h.b16 %v515
        %v525 = vunpack.c.l.b16 %v516
        %v526 = vunpack.c.h.b16 %v516
        %v527 = vunpack.c.l.b16 %v517
        %v528 = vunpack.c.h.b16 %v517
        %v529 = vunpack.c.l.b16 %v518
        %v530 = vunpack.c.h.b16 %v518
        %v531 = vpack.c.b16 %v525, %v523
        %v532 = vpack.c.b16 %v526, %v524
        %v533 = vpack.c.b16 %v529, %v527
        %v534 = vpack.c.b16 %v530, %v528
        %v540 = vsel %vm497, %v514, 0
        %542 = vmatprep.subr.bf16.mxu0 0
        %543 = vmatpush1.bf16.msra.mxu0 0
        %544 = vmatprep.subr.bf16.mxu0 0
        %545 = vmatpush1.bf16.msra.mxu0 0
        %546 = vmatprep.subr.bf16.mxu0 0
        %547 = vmatpush1.bf16.msra.mxu0 0
        %548 = vmatprep.subr.bf16.mxu0 0
        %549 = vmatpush1.bf16.msra.mxu0 0
        %550 = vmatprep.subr.bf16.mxu0 0
        %551 = vmatpush1.bf16.msra.mxu0 0
        %552 = vmatprep.subr.bf16.mxu0 0
        %553 = vmatpush1.bf16.msra.mxu0 0
        %554 = vmatprep.subr.bf16.mxu0 %v534
        %555 = vmatpush1.bf16.msra.mxu0 %v533
        %556 = vmatprep.subr.bf16.mxu0 %v532
        %557 = vmatpush1.bf16.msra.mxu0 %v531
        %558 = vmatprep.subr.bf16.mxu0 0
        %559 = vmatpush2.bf16.msra.mxu0 0
        %560 = vmatprep.subr.bf16.mxu0 0
        %561 = vmatpush2.bf16.msra.mxu0 0
        %562 = vmatprep.subr.bf16.mxu0 0
        %563 = vmatpush2.bf16.msra.mxu0 0
        %564 = vmatprep.subr.bf16.mxu0 0
        %565 = vmatpush2.bf16.msra.mxu0 0
        %566 = vmatprep.subr.bf16.mxu0 0
        %567 = vmatpush2.bf16.msra.mxu0 0
        %568 = vmatprep.subr.bf16.mxu0 0
        %569 = vmatpush2.bf16.msra.mxu0 0
        %570 = vmatprep.subr.bf16.mxu0 0
        %571 = vmatpush2.bf16.msra.mxu0 0
        %572 = vmatprep.subr.bf16.mxu0 0
        %573 = vmatpush2.bf16.msra.mxu0 0
        %574 = vmatprep.mubr.bf16.mxu0 0
        %575 = vmatmul.mubr.bf16.gmra.mxu0 %v540
        %v576 = vpop.f32.mrf.mxu0
        %v577 = vadd.f32 0.0, %v576
        %v578 = vpop.f32.mrf.mxu0
        %v579 = vadd.f32 0.0, %v578
        %v580 = vpop.f32.mrf.mxu0
        %v581 = vpop.f32.mrf.mxu0
        %582 = vdwg.mxu0
        %583 = vst [vmem:[#allocation7] sm:$0xff] %v579
        %584 = vst [vmem:[#allocation2 + $0x8] sm:$0xff] %v577
        %v585 = vld [vmem:[%s4] sm:$0x1]
        %v587 = vlaneseq
        %v588 = vshrl.u32 %v587, 7
        %v589 = vsub.s32 0, %v588
        %v590 = vrot.slane %v585, %v589
        %v592 = vadd.f32 %v590, 0.0
        %v593 = vld [vmem:[#allocation2 + $0x5] sm:$0xff]
        %v594 = vld [vmem:[#allocation14] sm:$0x1]
        %v595 = vlaneseq
        %v596 = vshrl.u32 %v595, 7
        %v597 = vsub.s32 0, %v596
        %v598 = vrot.slane %v594, %v597
        %v599 = vmul.f32 %v593, %v598
        %v600 = vadd.f32 %v592, %v599
        %v601 = vld [vmem:[#allocation2 + $0x6] sm:$0xff]
        %v602 = vld [vmem:[#allocation14 + $0x1] sm:$0x1]
        %v603 = vlaneseq
        %v604 = vshrl.u32 %v603, 7
        %v605 = vsub.s32 0, %v604
        %v606 = vrot.slane %v602, %v605
        %v607 = vmul.f32 %v601, %v606
        %v608 = vadd.f32 %v600, %v607
        %v609 = vld [vmem:[#allocation2 + $0x7] sm:$0xff]
        %v610 = vld [vmem:[#allocation14 + $0x2] sm:$0x1]
        %v611 = vlaneseq
        %v612 = vshrl.u32 %v611, 7
        %v613 = vsub.s32 0, %v612
        %v614 = vrot.slane %v610, %v613
        %v615 = vmul.f32 %v609, %v614
        %v616 = vadd.f32 %v608, %v615
        %v617 = vld [vmem:[#allocation2 + $0x8] sm:$0xff]
        %v618 = vld [vmem:[#allocation14 + $0x3] sm:$0x1]
        %v619 = vlaneseq
        %v620 = vshrl.u32 %v619, 7
        %v621 = vsub.s32 0, %v620
        %v622 = vrot.slane %v618, %v621
        %v623 = vmul.f32 %v617, %v622
        %v624 = vadd.f32 %v616, %v623
        %625 = vst [vmem:[#allocation2] sm:$0xe0] %v577
        %v626 = vsub.f32 0.0, %v624
        %v627 = vmul.f32 %v626, 1.442695
        %v628 = vpow.pop %v627
        %v629 = vadd.f32 %v628, 1.0
        %v630 = vrcp.pop %v629
        %v631 = vmul.f32 1.0, %v630
        %v632 = vmul.f32 %v624, %v631
        %633 = vst [vmem:[#allocation3] sm:$0xff] %v632
        %v634 = vpack.c.bf16 %v632, %v632
        %v635 = vld [vmem:[#allocation15] sm:$0xff]
        %v636 = vld [vmem:[#allocation15 + $0x8] sm:$0xf]
        %v637 = vld [vmem:[#allocation15 + $0xc] sm:$0xff]
        %v638 = vld [vmem:[#allocation15 + $0x14] sm:$0xf]
        %v639 = vld [vmem:[#allocation15 + $0x18] sm:$0xff]
        %v640 = vld [vmem:[#allocation15 + $0x20] sm:$0xf]
        %v641 = vld [vmem:[#allocation15 + $0x24] sm:$0xff]
        %v642 = vld [vmem:[#allocation15 + $0x2c] sm:$0xf]
        %v643 = vld [vmem:[#allocation15 + $0x30] sm:$0xff]
        %v644 = vld [vmem:[#allocation15 + $0x38] sm:$0xf]
        %v645 = vld [vmem:[#allocation15 + $0x3c] sm:$0xff]
        %v646 = vld [vmem:[#allocation15 + $0x44] sm:$0xf]
        %v647 = vld [vmem:[#allocation15 + $0x48] sm:$0xff]
        %v648 = vld [vmem:[#allocation15 + $0x50] sm:$0xf]
        %v649 = vld [vmem:[#allocation15 + $0x54] sm:$0xff]
        %v650 = vld [vmem:[#allocation15 + $0x5c] sm:$0xf]
        %v651 = vld [vmem:[#allocation15 + $0x60] sm:$0xff]
        %v652 = vld [vmem:[#allocation15 + $0x68] sm:$0xf]
        %v653 = vld [vmem:[#allocation15 + $0x6c] sm:$0xff]
        %v654 = vld [vmem:[#allocation15 + $0x74] sm:$0xf]
        %v655 = vld [vmem:[#allocation15 + $0x78] sm:$0xff]
        %v656 = vld [vmem:[#allocation15 + $0x80] sm:$0xf]
        %v657 = vld [vmem:[#allocation15 + $0x84] sm:$0xff]
        %v658 = vld [vmem:[#allocation15 + $0x8c] sm:$0xf]
        %v659 = vld [vmem:[#allocation15 + $0x90] sm:$0xff]
        %v660 = vld [vmem:[#allocation15 + $0x98] sm:$0xf]
        %v661 = vld [vmem:[#allocation15 + $0x9c] sm:$0xff]
        %v662 = vld [vmem:[#allocation15 + $0xa4] sm:$0xf]
        %v663 = vld [vmem:[#allocation15 + $0xa8] sm:$0xff]
        %v664 = vld [vmem:[#allocation15 + $0xb0] sm:$0xf]
        %v665 = vld [vmem:[#allocation15 + $0xb4] sm:$0xff]
        %v666 = vld [vmem:[#allocation15 + $0xbc] sm:$0xf]
        %v699 = vunpack.c.l.b16 %v635
        %v700 = vunpack.c.h.b16 %v635
        %v701 = vunpack.c.l.b16 %v636
        %v702 = vunpack.c.l.b16 %v637
        %v703 = vunpack.c.h.b16 %v637
        %v704 = vunpack.c.l.b16 %v638
        %v705 = vunpack.c.l.b16 %v639
        %v706 = vunpack.c.h.b16 %v639
        %v707 = vunpack.c.l.b16 %v640
        %v708 = vunpack.c.l.b16 %v641
        %v709 = vunpack.c.h.b16 %v641
        %v710 = vunpack.c.l.b16 %v642
        %v711 = vunpack.c.l.b16 %v643
        %v712 = vunpack.c.h.b16 %v643
        %v713 = vunpack.c.l.b16 %v644
        %v714 = vunpack.c.l.b16 %v645
        %v715 = vunpack.c.h.b16 %v645
        %v716 = vunpack.c.l.b16 %v646
        %v717 = vunpack.c.l.b16 %v647
        %v718 = vunpack.c.h.b16 %v647
        %v719 = vunpack.c.l.b16 %v648
        %v720 = vunpack.c.l.b16 %v649
        %v721 = vunpack.c.h.b16 %v649
        %v722 = vunpack.c.l.b16 %v650
        %v723 = vunpack.c.l.b16 %v651
        %v724 = vunpack.c.h.b16 %v651
        %v725 = vunpack.c.l.b16 %v652
        %v726 = vunpack.c.l.b16 %v653
        %v727 = vunpack.c.h.b16 %v653
        %v728 = vunpack.c.l.b16 %v654
        %v729 = vunpack.c.l.b16 %v655
        %v730 = vunpack.c.h.b16 %v655
        %v731 = vunpack.c.l.b16 %v656
        %v732 = vunpack.c.l.b16 %v657
        %v733 = vunpack.c.h.b16 %v657
        %v734 = vunpack.c.l.b16 %v658
        %v735 = vunpack.c.l.b16 %v659
        %v736 = vunpack.c.h.b16 %v659
        %v737 = vunpack.c.l.b16 %v660
        %v738 = vunpack.c.l.b16 %v661
        %v739 = vunpack.c.h.b16 %v661
        %v740 = vunpack.c.l.b16 %v662
        %v741 = vunpack.c.l.b16 %v663
        %v742 = vunpack.c.h.b16 %v663
        %v743 = vunpack.c.l.b16 %v664
        %v744 = vunpack.c.l.b16 %v665
        %v745 = vunpack.c.h.b16 %v665
        %v746 = vunpack.c.l.b16 %v666
        %v747 = vpack.c.b16 %v702, %v699
        %v748 = vpack.c.b16 %v703, %v700
        %v749 = vpack.c.b16 %v704, %v701
        %v750 = vpack.c.b16 %v708, %v705
        %v751 = vpack.c.b16 %v709, %v706
        %v752 = vpack.c.b16 %v710, %v707
        %v753 = vpack.c.b16 %v714, %v711
        %v754 = vpack.c.b16 %v715, %v712
        %v755 = vpack.c.b16 %v716, %v713
        %v756 = vpack.c.b16 %v720, %v717
        %v757 = vpack.c.b16 %v721, %v718
        %v758 = vpack.c.b16 %v722, %v719
        %v759 = vpack.c.b16 %v726, %v723
        %v760 = vpack.c.b16 %v727, %v724
        %v761 = vpack.c.b16 %v728, %v725
        %v762 = vpack.c.b16 %v732, %v729
        %v763 = vpack.c.b16 %v733, %v730
        %v764 = vpack.c.b16 %v734, %v731
        %v765 = vpack.c.b16 %v738, %v735
        %v766 = vpack.c.b16 %v739, %v736
        %v767 = vpack.c.b16 %v740, %v737
        %v768 = vpack.c.b16 %v744, %v741
        %v769 = vpack.c.b16 %v745, %v742
        %v770 = vpack.c.b16 %v746, %v743
        %795 = vmatprep.subr.bf16.mxu0 %v769
        %796 = vmatpush1.bf16.msra.mxu0 %v768
        %797 = vmatprep.subr.bf16.mxu0 %v766
        %798 = vmatpush1.bf16.msra.mxu0 %v765
        %799 = vmatprep.subr.bf16.mxu0 %v763
        %800 = vmatpush1.bf16.msra.mxu0 %v762
        %801 = vmatprep.subr.bf16.mxu0 %v760
        %802 = vmatpush1.bf16.msra.mxu0 %v759
        %803 = vmatprep.subr.bf16.mxu0 %v757
        %804 = vmatpush1.bf16.msra.mxu0 %v756
        %805 = vmatprep.subr.bf16.mxu0 %v754
        %806 = vmatpush1.bf16.msra.mxu0 %v753
        %807 = vmatprep.subr.bf16.mxu0 %v751
        %808 = vmatpush1.bf16.msra.mxu0 %v750
        %809 = vmatprep.subr.bf16.mxu0 %v748
        %810 = vmatpush1.bf16.msra.mxu0 %v747
        %811 = vmatprep.subr.bf16.mxu0 0
        %812 = vmatpush2.bf16.msra.mxu0 0
        %813 = vmatprep.subr.bf16.mxu0 0
        %814 = vmatpush2.bf16.msra.mxu0 0
        %815 = vmatprep.subr.bf16.mxu0 0
        %816 = vmatpush2.bf16.msra.mxu0 0
        %817 = vmatprep.subr.bf16.mxu0 0
        %818 = vmatpush2.bf16.msra.mxu0 0
        %819 = vmatprep.subr.bf16.mxu0 0
        %820 = vmatpush2.bf16.msra.mxu0 0
        %821 = vmatprep.subr.bf16.mxu0 0
        %822 = vmatpush2.bf16.msra.mxu0 0
        %823 = vmatprep.subr.bf16.mxu0 0
        %824 = vmatpush2.bf16.msra.mxu0 0
        %825 = vmatprep.subr.bf16.mxu0 0
        %826 = vmatpush2.bf16.msra.mxu0 0
        %827 = vmatprep.mubr.bf16.mxu0 0
        %828 = vmatmul.mubr.bf16.gmra.mxu0 %v634
        %v829 = vpop.f32.mrf.mxu0
        %v830 = vadd.f32 0.0, %v829
        %v831 = vpop.f32.mrf.mxu0
        %v832 = vadd.f32 0.0, %v831
        %v833 = vpop.f32.mrf.mxu0
        %v834 = vpop.f32.mrf.mxu0
        %835 = vdwg.mxu0
        %836 = vmatprep.subr.bf16.mxu0 0
        %837 = vmatpush1.bf16.msra.mxu0 %v770
        %838 = vmatprep.subr.bf16.mxu0 0
        %839 = vmatpush1.bf16.msra.mxu0 %v767
        %840 = vmatprep.subr.bf16.mxu0 0
        %841 = vmatpush1.bf16.msra.mxu0 %v764
        %842 = vmatprep.subr.bf16.mxu0 0
        %843 = vmatpush1.bf16.msra.mxu0 %v761
        %844 = vmatprep.subr.bf16.mxu0 0
        %845 = vmatpush1.bf16.msra.mxu0 %v758
        %846 = vmatprep.subr.bf16.mxu0 0
        %847 = vmatpush1.bf16.msra.mxu0 %v755
        %848 = vmatprep.subr.bf16.mxu0 0
        %849 = vmatpush1.bf16.msra.mxu0 %v752
        %850 = vmatprep.subr.bf16.mxu0 0
        %851 = vmatpush1.bf16.msra.mxu0 %v749
        %852 = vmatprep.subr.bf16.mxu0 0
        %853 = vmatpush2.bf16.msra.mxu0 0
        %854 = vmatprep.subr.bf16.mxu0 0
        %855 = vmatpush2.bf16.msra.mxu0 0
        %856 = vmatprep.subr.bf16.mxu0 0
        %857 = vmatpush2.bf16.msra.mxu0 0
        %858 = vmatprep.subr.bf16.mxu0 0
        %859 = vmatpush2.bf16.msra.mxu0 0
        %860 = vmatprep.subr.bf16.mxu0 0
        %861 = vmatpush2.bf16.msra.mxu0 0
        %862 = vmatprep.subr.bf16.mxu0 0
        %863 = vmatpush2.bf16.msra.mxu0 0
        %864 = vmatprep.subr.bf16.mxu0 0
        %865 = vmatpush2.bf16.msra.mxu0 0
        %866 = vmatprep.subr.bf16.mxu0 0
        %867 = vmatpush2.bf16.msra.mxu0 0
        %868 = vmatprep.mubr.bf16.mxu0 0
        %869 = vmatmul.mubr.bf16.gmra.mxu0 %v634
        %v870 = vpop.f32.mrf.mxu0
        %v871 = vadd.f32 0.0, %v870
        %v872 = vpop.f32.mrf.mxu0
        %v873 = vpop.f32.mrf.mxu0
        %v874 = vpop.f32.mrf.mxu0
        %875 = vdwg.mxu0
        %876 = vst [vmem:[#allocation5] sm:$0xff] %v832
        %877 = vst [vmem:[#allocation6] sm:$0xff] %v871
        %v878 = vpack.c.bf16 %v830, %v830
        %v879 = vld [vmem:[%s6] sm:$0xf]
        %v880 = vld [vmem:[%s6 + $0x4] sm:$0xf]
        %v881 = vld [vmem:[%s6 + $0x8] sm:$0xf]
        %v882 = vld [vmem:[%s6 + $0xc] sm:$0xf]
        %v883 = vld [vmem:[%s6 + $0x10] sm:$0xf]
        %v884 = vld [vmem:[%s6 + $0x14] sm:$0xf]
        %v885 = vld [vmem:[%s6 + $0x18] sm:$0xf]
        %v886 = vld [vmem:[%s6 + $0x1c] sm:$0xf]
        %v887 = vld [vmem:[%s6 + $0x20] sm:$0xf]
        %v888 = vld [vmem:[%s6 + $0x24] sm:$0xf]
        %v889 = vld [vmem:[%s6 + $0x28] sm:$0xf]
        %v890 = vld [vmem:[%s6 + $0x2c] sm:$0xf]
        %v891 = vld [vmem:[%s6 + $0x30] sm:$0xf]
        %v892 = vld [vmem:[%s6 + $0x34] sm:$0xf]
        %v893 = vld [vmem:[%s6 + $0x38] sm:$0xf]
        %v894 = vld [vmem:[%s6 + $0x3c] sm:$0xf]
        %v895 = vld [vmem:[#allocation17] sm:$0x1]
        %v897 = vlaneseq
        %v898 = vshrl.u32 %v897, 7
        %v899 = vsub.s32 0, %v898
        %v900 = vrot.slane %v895, %v899
        %v918 = vunpack.c.l.b16 %v879
        %v919 = vunpack.c.l.b16 %v880
        %v920 = vunpack.c.l.b16 %v881
        %v921 = vunpack.c.l.b16 %v882
        %v922 = vunpack.c.l.b16 %v883
        %v923 = vunpack.c.l.b16 %v884
        %v924 = vunpack.c.l.b16 %v885
        %v925 = vunpack.c.l.b16 %v886
        %v926 = vunpack.c.l.b16 %v887
        %v927 = vunpack.c.l.b16 %v888
        %v928 = vunpack.c.l.b16 %v889
        %v929 = vunpack.c.l.b16 %v890
        %v930 = vunpack.c.l.b16 %v891
        %v931 = vunpack.c.l.b16 %v892
        %v932 = vunpack.c.l.b16 %v893
        %v933 = vunpack.c.l.b16 %v894
        %v934 = vpack.c.b16 %v919, %v918
        %v935 = vpack.c.b16 %v921, %v920
        %v936 = vpack.c.b16 %v923, %v922
        %v937 = vpack.c.b16 %v925, %v924
        %v938 = vpack.c.b16 %v927, %v926
        %v939 = vpack.c.b16 %v929, %v928
        %v940 = vpack.c.b16 %v931, %v930
        %v941 = vpack.c.b16 %v933, %v932
        %950 = vmatprep.subr.bf16.mxu0 0
        %951 = vmatpush1.bf16.msra.mxu0 %v941
        %952 = vmatprep.subr.bf16.mxu0 0
        %953 = vmatpush1.bf16.msra.mxu0 %v940
        %954 = vmatprep.subr.bf16.mxu0 0
        %955 = vmatpush1.bf16.msra.mxu0 %v939
        %956 = vmatprep.subr.bf16.mxu0 0
        %957 = vmatpush1.bf16.msra.mxu0 %v938
        %958 = vmatprep.subr.bf16.mxu0 0
        %959 = vmatpush1.bf16.msra.mxu0 %v937
        %960 = vmatprep.subr.bf16.mxu0 0
        %961 = vmatpush1.bf16.msra.mxu0 %v936
        %962 = vmatprep.subr.bf16.mxu0 0
        %963 = vmatpush1.bf16.msra.mxu0 %v935
        %964 = vmatprep.subr.bf16.mxu0 0
        %965 = vmatpush1.bf16.msra.mxu0 %v934
        %966 = vmatprep.subr.bf16.mxu0 0
        %967 = vmatpush2.bf16.msra.mxu0 0
        %968 = vmatprep.subr.bf16.mxu0 0
        %969 = vmatpush2.bf16.msra.mxu0 0
        %970 = vmatprep.subr.bf16.mxu0 0
        %971 = vmatpush2.bf16.msra.mxu0 0
        %972 = vmatprep.subr.bf16.mxu0 0
        %973 = vmatpush2.bf16.msra.mxu0 0
        %974 = vmatprep.subr.bf16.mxu0 0
        %975 = vmatpush2.bf16.msra.mxu0 0
        %976 = vmatprep.subr.bf16.mxu0 0
        %977 = vmatpush2.bf16.msra.mxu0 0
        %978 = vmatprep.subr.bf16.mxu0 0
        %979 = vmatpush2.bf16.msra.mxu0 0
        %980 = vmatprep.subr.bf16.mxu0 0
        %981 = vmatpush2.bf16.msra.mxu0 0
        %982 = vmatprep.mubr.bf16.mxu0 0
        %983 = vmatmul.mubr.bf16.gmra.mxu0 %v878
        %v984 = vpop.f32.mrf.mxu0
        %v985 = vadd.f32 %v900, %v984
        %v986 = vpop.f32.mrf.mxu0
        %v987 = vpop.f32.mrf.mxu0
        %v988 = vpop.f32.mrf.mxu0
        %989 = vdwg.mxu0
        %v990 = vmax.f32 %v985, 0.0
        %v991 = vand.u32 2147483647, %v985
        %v992 = vsub.f32 0.0, %v991
        %v993 = vmul.f32 %v992, 1.442695
        %v994 = vpow.pop %v993
        %v995 = vadd.f32 %v994, 1.0
        %v996 = vlog2.pop %v995
        %v997 = vmul.f32 %v996, 0.6931472
        %v998 = vadd.f32 %v990, %v997
        %999 = vst [vmem:[#allocation4] sm:$0xff] %v998
        %v1000 = vld [vmem:[%s8] sm:$0xff]
        %v1001 = vld [vmem:[%s8 + $0x8] sm:$0xff]
        %v1002 = vmul.f32 %v1000, 1.442695
        %v1003 = vpow.pop %v1002
        %v1004 = vmul.f32 %v1001, 1.442695
        %v1005 = vpow.pop %v1004
        %v1006 = vsub.f32 0.0, %v1003
        %v1007 = vsub.f32 0.0, %v1005
        %v1008 = vld [vmem:[#allocation18] sm:$0x1]
        %v1009 = vld [vmem:[#allocation8] sm:$0xff]
        %v1010 = vld [vmem:[#allocation8 + $0x8] sm:$0xff]
        %v1011 = vld [vmem:[#allocation4] sm:$0xff]
        %v1012 = vld [vmem:[#allocation3] sm:$0xff]
        %v1013 = vld [vmem:[#allocation7] sm:$0xff]
        %v1014 = vld [vmem:[#allocation5] sm:$0xff]
        %v1015 = vld [vmem:[#allocation6] sm:$0xff]
        %v1017 = vcombine.high %v1011, %v1011
        %v1019 = vunpack.c.l.s4 1966171168
        %v1020 = vunpack.c.0.s8 %v1019
        %v1021 = vlaneseq
        %v1022 = vshrl.u32 %v1021, 7
        %v1023 = vsub.s32 %v1020, %v1022
        %v1024 = vrot.slane %v1011, %v1023
        %v1026 = vunpack.c.l.s4 1966171168
        %v1027 = vunpack.c.0.s8 %v1026
        %v1028 = vlaneseq
        %v1029 = vshrl.u32 %v1028, 7
        %v1030 = vsub.s32 %v1027, %v1029
        %v1031 = vrot.slane %v1017, %v1030
        %v1032 = vcombine.high %v1024, %v1024
        %v1033 = vcombine.high %v1031, %v1031
        %v1035 = vunpack.c.l.s4 1966171168
        %v1036 = vunpack.c.0.s8 %v1035
        %v1037 = vlaneseq
        %v1038 = vshrl.u32 %v1037, 7
        %v1039 = vsub.s32 %v1036, %v1038
        %v1040 = vrot.slane %v1024, %v1039
        %v1042 = vunpack.c.l.s4 1966171168
        %v1043 = vunpack.c.0.s8 %v1042
        %v1044 = vlaneseq
        %v1045 = vshrl.u32 %v1044, 7
        %v1046 = vsub.s32 %v1043, %v1045
        %v1047 = vrot.slane %v1031, %v1046
        %v1049 = vunpack.c.l.s4 1966171168
        %v1050 = vunpack.c.0.s8 %v1049
        %v1051 = vlaneseq
        %v1052 = vshrl.u32 %v1051, 7
        %v1053 = vsub.s32 %v1050, %v1052
        %v1054 = vrot.slane %v1032, %v1053
        %v1056 = vunpack.c.l.s4 1966171168
        %v1057 = vunpack.c.0.s8 %v1056
        %v1058 = vlaneseq
        %v1059 = vshrl.u32 %v1058, 7
        %v1060 = vsub.s32 %v1057, %v1059
        %v1061 = vrot.slane %v1033, %v1060
        %v1062 = vcombine.high %v1040, %v1040
        %v1063 = vcombine.high %v1047, %v1047
        %v1064 = vcombine.high %v1054, %v1054
        %v1065 = vcombine.high %v1061, %v1061
        %v1066 = vlaneseq
        %v1067 = vshrl.u32 %v1066, 7
        %v1068 = vsub.s32 0, %v1067
        %v1069 = vrot.slane %v1040, %v1068
        %v1070 = vlaneseq
        %v1071 = vshrl.u32 %v1070, 7
        %v1072 = vsub.s32 0, %v1071
        %v1073 = vrot.slane %v1054, %v1072
        %v1074 = vlaneseq
        %v1075 = vshrl.u32 %v1074, 7
        %v1076 = vsub.s32 0, %v1075
        %v1077 = vrot.slane %v1062, %v1076
        %v1078 = vlaneseq
        %v1079 = vshrl.u32 %v1078, 7
        %v1080 = vsub.s32 0, %v1079
        %v1081 = vrot.slane %v1064, %v1080
        %v1082 = vlaneseq
        %v1083 = vshrl.u32 %v1082, 7
        %v1084 = vsub.s32 0, %v1083
        %v1085 = vrot.slane %v1047, %v1084
        %v1086 = vlaneseq
        %v1087 = vshrl.u32 %v1086, 7
        %v1088 = vsub.s32 0, %v1087
        %v1089 = vrot.slane %v1061, %v1088
        %v1090 = vlaneseq
        %v1091 = vshrl.u32 %v1090, 7
        %v1092 = vsub.s32 0, %v1091
        %v1093 = vrot.slane %v1063, %v1092
        %v1094 = vlaneseq
        %v1095 = vshrl.u32 %v1094, 7
        %v1096 = vsub.s32 0, %v1095
        %v1097 = vrot.slane %v1065, %v1096
        %v1106 = vmul.f32 %v1069, %v1006
        %v1107 = vmul.f32 %v1069, %v1007
        %v1108 = vmul.f32 %v1073, %v1006
        %v1109 = vmul.f32 %v1073, %v1007
        %v1110 = vmul.f32 %v1077, %v1006
        %v1111 = vmul.f32 %v1077, %v1007
        %v1112 = vmul.f32 %v1081, %v1006
        %v1113 = vmul.f32 %v1081, %v1007
        %v1114 = vmul.f32 %v1085, %v1006
        %v1115 = vmul.f32 %v1085, %v1007
        %v1116 = vmul.f32 %v1089, %v1006
        %v1117 = vmul.f32 %v1089, %v1007
        %v1118 = vmul.f32 %v1093, %v1006
        %v1119 = vmul.f32 %v1093, %v1007
        %v1120 = vmul.f32 %v1097, %v1006
        %v1121 = vmul.f32 %v1097, %v1007
        %v1122 = vmul.f32 %v1106, 1.442695
        %v1123 = vpow.pop %v1122
        %v1124 = vmul.f32 %v1107, 1.442695
        %v1125 = vpow.pop %v1124
        %v1126 = vmul.f32 %v1108, 1.442695
        %v1127 = vpow.pop %v1126
        %v1128 = vmul.f32 %v1109, 1.442695
        %v1129 = vpow.pop %v1128
        %v1130 = vmul.f32 %v1110, 1.442695
        %v1131 = vpow.pop %v1130
        %v1132 = vmul.f32 %v1111, 1.442695
        %v1133 = vpow.pop %v1132
        %v1134 = vmul.f32 %v1112, 1.442695
        %v1135 = vpow.pop %v1134
        %v1136 = vmul.f32 %v1113, 1.442695
        %v1137 = vpow.pop %v1136
        %v1138 = vmul.f32 %v1114, 1.442695
        %v1139 = vpow.pop %v1138
        %v1140 = vmul.f32 %v1115, 1.442695
        %v1141 = vpow.pop %v1140
        %v1142 = vmul.f32 %v1116, 1.442695
        %v1143 = vpow.pop %v1142
        %v1144 = vmul.f32 %v1117, 1.442695
        %v1145 = vpow.pop %v1144
        %v1146 = vmul.f32 %v1118, 1.442695
        %v1147 = vpow.pop %v1146
        %v1148 = vmul.f32 %v1119, 1.442695
        %v1149 = vpow.pop %v1148
        %v1150 = vmul.f32 %v1120, 1.442695
        %v1151 = vpow.pop %v1150
        %v1152 = vmul.f32 %v1121, 1.442695
        %v1153 = vpow.pop %v1152
        %v1154 = vlaneseq
        %v1155 = vshrl.u32 %v1154, 7
        %v1156 = vsub.s32 0, %v1155
        %v1157 = vrot.slane %v1014, %v1156
        %1159 = vbcast.lane.b32.xlu0 %v1157, 256
        %v1160 = vpop.permute.xlu0 %1159
        %s1162 = sor.u32 256, 8
        %1163 = vbcast.lane.b32.xlu0 %v1157, %s1162
        %v1164 = vpop.permute.xlu0 %1163
        %v1165 = vlaneseq
        %v1166 = vshrl.u32 %v1165, 7
        %v1167 = vsub.s32 1, %v1166
        %v1168 = vrot.slane %v1014, %v1167
        %1170 = vbcast.lane.b32.xlu0 %v1168, 256
        %v1171 = vpop.permute.xlu0 %1170
        %s1173 = sor.u32 256, 8
        %1174 = vbcast.lane.b32.xlu0 %v1168, %s1173
        %v1175 = vpop.permute.xlu0 %1174
        %v1176 = vlaneseq
        %v1177 = vshrl.u32 %v1176, 7
        %v1178 = vsub.s32 2, %v1177
        %v1179 = vrot.slane %v1014, %v1178
        %1181 = vbcast.lane.b32.xlu0 %v1179, 256
        %v1182 = vpop.permute.xlu0 %1181
        %s1184 = sor.u32 256, 8
        %1185 = vbcast.lane.b32.xlu0 %v1179, %s1184
        %v1186 = vpop.permute.xlu0 %1185
        %v1187 = vlaneseq
        %v1188 = vshrl.u32 %v1187, 7
        %v1189 = vsub.s32 3, %v1188
        %v1190 = vrot.slane %v1014, %v1189
        %1192 = vbcast.lane.b32.xlu0 %v1190, 256
        %v1193 = vpop.permute.xlu0 %1192
        %s1195 = sor.u32 256, 8
        %1196 = vbcast.lane.b32.xlu0 %v1190, %s1195
        %v1197 = vpop.permute.xlu0 %1196
        %v1198 = vlaneseq
        %v1199 = vshrl.u32 %v1198, 7
        %v1200 = vsub.s32 4, %v1199
        %v1201 = vrot.slane %v1014, %v1200
        %1203 = vbcast.lane.b32.xlu0 %v1201, 256
        %v1204 = vpop.permute.xlu0 %1203
        %s1206 = sor.u32 256, 8
        %1207 = vbcast.lane.b32.xlu0 %v1201, %s1206
        %v1208 = vpop.permute.xlu0 %1207
        %v1209 = vlaneseq
        %v1210 = vshrl.u32 %v1209, 7
        %v1211 = vsub.s32 5, %v1210
        %v1212 = vrot.slane %v1014, %v1211
        %1214 = vbcast.lane.b32.xlu0 %v1212, 256
        %v1215 = vpop.permute.xlu0 %1214
        %s1217 = sor.u32 256, 8
        %1218 = vbcast.lane.b32.xlu0 %v1212, %s1217
        %v1219 = vpop.permute.xlu0 %1218
        %v1220 = vlaneseq
        %v1221 = vshrl.u32 %v1220, 7
        %v1222 = vsub.s32 6, %v1221
        %v1223 = vrot.slane %v1014, %v1222
        %1225 = vbcast.lane.b32.xlu0 %v1223, 256
        %v1226 = vpop.permute.xlu0 %1225
        %s1228 = sor.u32 256, 8
        %1229 = vbcast.lane.b32.xlu0 %v1223, %s1228
        %v1230 = vpop.permute.xlu0 %1229
        %v1231 = vlaneseq
        %v1232 = vshrl.u32 %v1231, 7
        %v1233 = vsub.s32 7, %v1232
        %v1234 = vrot.slane %v1014, %v1233
        %1236 = vbcast.lane.b32.xlu0 %v1234, 256
        %v1237 = vpop.permute.xlu0 %1236
        %s1239 = sor.u32 256, 8
        %1240 = vbcast.lane.b32.xlu0 %v1234, %s1239
        %v1241 = vpop.permute.xlu0 %1240
        %v1242 = vmul.f32 %v1011, %v1012
        %v1244 = vcombine.high %v1242, %v1242
        %v1246 = vunpack.c.l.s4 1966171168
        %v1247 = vunpack.c.0.s8 %v1246
        %v1248 = vlaneseq
        %v1249 = vshrl.u32 %v1248, 7
        %v1250 = vsub.s32 %v1247, %v1249
        %v1251 = vrot.slane %v1242, %v1250
        %v1253 = vunpack.c.l.s4 1966171168
        %v1254 = vunpack.c.0.s8 %v1253
        %v1255 = vlaneseq
        %v1256 = vshrl.u32 %v1255, 7
        %v1257 = vsub.s32 %v1254, %v1256
        %v1258 = vrot.slane %v1244, %v1257
        %v1259 = vcombine.high %v1251, %v1251
        %v1260 = vcombine.high %v1258, %v1258
        %v1262 = vunpack.c.l.s4 1966171168
        %v1263 = vunpack.c.0.s8 %v1262
        %v1264 = vlaneseq
        %v1265 = vshrl.u32 %v1264, 7
        %v1266 = vsub.s32 %v1263, %v1265
        %v1267 = vrot.slane %v1251, %v1266
        %v1269 = vunpack.c.l.s4 1966171168
        %v1270 = vunpack.c.0.s8 %v1269
        %v1271 = vlaneseq
        %v1272 = vshrl.u32 %v1271, 7
        %v1273 = vsub.s32 %v1270, %v1272
        %v1274 = vrot.slane %v1258, %v1273
        %v1276 = vunpack.c.l.s4 1966171168
        %v1277 = vunpack.c.0.s8 %v1276
        %v1278 = vlaneseq
        %v1279 = vshrl.u32 %v1278, 7
        %v1280 = vsub.s32 %v1277, %v1279
        %v1281 = vrot.slane %v1259, %v1280
        %v1283 = vunpack.c.l.s4 1966171168
        %v1284 = vunpack.c.0.s8 %v1283
        %v1285 = vlaneseq
        %v1286 = vshrl.u32 %v1285, 7
        %v1287 = vsub.s32 %v1284, %v1286
        %v1288 = vrot.slane %v1260, %v1287
        %v1289 = vcombine.high %v1267, %v1267
        %v1290 = vcombine.high %v1274, %v1274
        %v1291 = vcombine.high %v1281, %v1281
        %v1292 = vcombine.high %v1288, %v1288
        %v1293 = vlaneseq
        %v1294 = vshrl.u32 %v1293, 7
        %v1295 = vsub.s32 0, %v1294
        %v1296 = vrot.slane %v1267, %v1295
        %v1297 = vlaneseq
        %v1298 = vshrl.u32 %v1297, 7
        %v1299 = vsub.s32 0, %v1298
        %v1300 = vrot.slane %v1281, %v1299
        %v1301 = vlaneseq
        %v1302 = vshrl.u32 %v1301, 7
        %v1303 = vsub.s32 0, %v1302
        %v1304 = vrot.slane %v1289, %v1303
        %v1305 = vlaneseq
        %v1306 = vshrl.u32 %v1305, 7
        %v1307 = vsub.s32 0, %v1306
        %v1308 = vrot.slane %v1291, %v1307
        %v1309 = vlaneseq
        %v1310 = vshrl.u32 %v1309, 7
        %v1311 = vsub.s32 0, %v1310
        %v1312 = vrot.slane %v1274, %v1311
        %v1313 = vlaneseq
        %v1314 = vshrl.u32 %v1313, 7
        %v1315 = vsub.s32 0, %v1314
        %v1316 = vrot.slane %v1288, %v1315
        %v1317 = vlaneseq
        %v1318 = vshrl.u32 %v1317, 7
        %v1319 = vsub.s32 0, %v1318
        %v1320 = vrot.slane %v1290, %v1319
        %v1321 = vlaneseq
        %v1322 = vshrl.u32 %v1321, 7
        %v1323 = vsub.s32 0, %v1322
        %v1324 = vrot.slane %v1292, %v1323
        %v1333 = vmul.f32 %v1160, %v1296
        %v1334 = vmul.f32 %v1164, %v1296
        %v1335 = vmul.f32 %v1171, %v1300
        %v1336 = vmul.f32 %v1175, %v1300
        %v1337 = vmul.f32 %v1182, %v1304
        %v1338 = vmul.f32 %v1186, %v1304
        %v1339 = vmul.f32 %v1193, %v1308
        %v1340 = vmul.f32 %v1197, %v1308
        %v1341 = vmul.f32 %v1204, %v1312
        %v1342 = vmul.f32 %v1208, %v1312
        %v1343 = vmul.f32 %v1215, %v1316
        %v1344 = vmul.f32 %v1219, %v1316
        %v1345 = vmul.f32 %v1226, %v1320
        %v1346 = vmul.f32 %v1230, %v1320
        %v1347 = vmul.f32 %v1237, %v1324
        %v1348 = vmul.f32 %v1241, %v1324
        %v1349 = vmul.f32 %v1009, %v1123
        %v1350 = vmul.f32 %v1010, %v1125
        %v1351 = vadd.f32 %v1349, %v1333
        %v1352 = vadd.f32 %v1350, %v1334
        %v1353 = vmul.f32 %v1351, %v1127
        %v1354 = vmul.f32 %v1352, %v1129
        %v1355 = vadd.f32 %v1353, %v1335
        %v1356 = vadd.f32 %v1354, %v1336
        %v1357 = vmul.f32 %v1355, %v1131
        %v1358 = vmul.f32 %v1356, %v1133
        %v1359 = vadd.f32 %v1357, %v1337
        %v1360 = vadd.f32 %v1358, %v1338
        %v1361 = vmul.f32 %v1359, %v1135
        %v1362 = vmul.f32 %v1360, %v1137
        %v1363 = vadd.f32 %v1361, %v1339
        %v1364 = vadd.f32 %v1362, %v1340
        %v1365 = vmul.f32 %v1363, %v1139
        %v1366 = vmul.f32 %v1364, %v1141
        %v1367 = vadd.f32 %v1365, %v1341
        %v1368 = vadd.f32 %v1366, %v1342
        %v1369 = vmul.f32 %v1367, %v1143
        %v1370 = vmul.f32 %v1368, %v1145
        %v1371 = vadd.f32 %v1369, %v1343
        %v1372 = vadd.f32 %v1370, %v1344
        %v1373 = vmul.f32 %v1371, %v1147
        %v1374 = vmul.f32 %v1372, %v1149
        %v1375 = vadd.f32 %v1373, %v1345
        %v1376 = vadd.f32 %v1374, %v1346
        %v1377 = vmul.f32 %v1375, %v1151
        %v1378 = vmul.f32 %v1376, %v1153
        %v1379 = vadd.f32 %v1377, %v1347
        %v1380 = vadd.f32 %v1378, %v1348
        %v1381 = vlaneseq
        %v1382 = vshrl.u32 %v1381, 7
        %v1383 = vsub.s32 0, %v1382
        %v1384 = vrot.slane %v1015, %v1383
        %1386 = vbcast.lane.b32.xlu0 %v1384, 256
        %v1387 = vpop.permute.xlu0 %1386
        %s1389 = sor.u32 256, 8
        %1390 = vbcast.lane.b32.xlu0 %v1384, %s1389
        %v1391 = vpop.permute.xlu0 %1390
        %v1392 = vlaneseq
        %v1393 = vshrl.u32 %v1392, 7
        %v1394 = vsub.s32 1, %v1393
        %v1395 = vrot.slane %v1015, %v1394
        %1397 = vbcast.lane.b32.xlu0 %v1395, 256
        %v1398 = vpop.permute.xlu0 %1397
        %s1400 = sor.u32 256, 8
        %1401 = vbcast.lane.b32.xlu0 %v1395, %s1400
        %v1402 = vpop.permute.xlu0 %1401
        %v1403 = vlaneseq
        %v1404 = vshrl.u32 %v1403, 7
        %v1405 = vsub.s32 2, %v1404
        %v1406 = vrot.slane %v1015, %v1405
        %1408 = vbcast.lane.b32.xlu0 %v1406, 256
        %v1409 = vpop.permute.xlu0 %1408
        %s1411 = sor.u32 256, 8
        %1412 = vbcast.lane.b32.xlu0 %v1406, %s1411
        %v1413 = vpop.permute.xlu0 %1412
        %v1414 = vlaneseq
        %v1415 = vshrl.u32 %v1414, 7
        %v1416 = vsub.s32 3, %v1415
        %v1417 = vrot.slane %v1015, %v1416
        %1419 = vbcast.lane.b32.xlu0 %v1417, 256
        %v1420 = vpop.permute.xlu0 %1419
        %s1422 = sor.u32 256, 8
        %1423 = vbcast.lane.b32.xlu0 %v1417, %s1422
        %v1424 = vpop.permute.xlu0 %1423
        %v1425 = vlaneseq
        %v1426 = vshrl.u32 %v1425, 7
        %v1427 = vsub.s32 4, %v1426
        %v1428 = vrot.slane %v1015, %v1427
        %1430 = vbcast.lane.b32.xlu0 %v1428, 256
        %v1431 = vpop.permute.xlu0 %1430
        %s1433 = sor.u32 256, 8
        %1434 = vbcast.lane.b32.xlu0 %v1428, %s1433
        %v1435 = vpop.permute.xlu0 %1434
        %v1436 = vlaneseq
        %v1437 = vshrl.u32 %v1436, 7
        %v1438 = vsub.s32 5, %v1437
        %v1439 = vrot.slane %v1015, %v1438
        %1441 = vbcast.lane.b32.xlu0 %v1439, 256
        %v1442 = vpop.permute.xlu0 %1441
        %s1444 = sor.u32 256, 8
        %1445 = vbcast.lane.b32.xlu0 %v1439, %s1444
        %v1446 = vpop.permute.xlu0 %1445
        %v1447 = vlaneseq
        %v1448 = vshrl.u32 %v1447, 7
        %v1449 = vsub.s32 6, %v1448
        %v1450 = vrot.slane %v1015, %v1449
        %1452 = vbcast.lane.b32.xlu0 %v1450, 256
        %v1453 = vpop.permute.xlu0 %1452
        %s1455 = sor.u32 256, 8
        %1456 = vbcast.lane.b32.xlu0 %v1450, %s1455
        %v1457 = vpop.permute.xlu0 %1456
        %v1458 = vlaneseq
        %v1459 = vshrl.u32 %v1458, 7
        %v1460 = vsub.s32 7, %v1459
        %v1461 = vrot.slane %v1015, %v1460
        %1463 = vbcast.lane.b32.xlu0 %v1461, 256
        %v1464 = vpop.permute.xlu0 %1463
        %s1466 = sor.u32 256, 8
        %1467 = vbcast.lane.b32.xlu0 %v1461, %s1466
        %v1468 = vpop.permute.xlu0 %1467
        %v1469 = vmul.f32 %v1387, %v1351
        %v1470 = vmul.f32 %v1391, %v1352
        %v1471 = vmul.f32 %v1398, %v1355
        %v1472 = vmul.f32 %v1402, %v1356
        %v1473 = vmul.f32 %v1409, %v1359
        %v1474 = vmul.f32 %v1413, %v1360
        %v1475 = vmul.f32 %v1420, %v1363
        %v1476 = vmul.f32 %v1424, %v1364
        %v1477 = vmul.f32 %v1431, %v1367
        %v1478 = vmul.f32 %v1435, %v1368
        %v1479 = vmul.f32 %v1442, %v1371
        %v1480 = vmul.f32 %v1446, %v1372
        %v1481 = vmul.f32 %v1453, %v1375
        %v1482 = vmul.f32 %v1457, %v1376
        %v1483 = vmul.f32 %v1464, %v1379
        %v1484 = vmul.f32 %v1468, %v1380
        %v1485 = vadd.f32 %v1469, %v1470
        %v1486 = vrot.slane %v1485, 4
        %v1487 = vadd.f32 %v1485, %v1486
        %v1488 = vrot.slane %v1487, 2
        %v1489 = vadd.f32 %v1487, %v1488
        %v1490 = vrot.slane %v1489, 1
        %v1491 = vadd.f32 %v1489, %v1490
        %v1492 = vadd.f32 %v1471, %v1472
        %v1493 = vrot.slane %v1492, 4
        %v1494 = vadd.f32 %v1492, %v1493
        %v1495 = vrot.slane %v1494, 2
        %v1496 = vadd.f32 %v1494, %v1495
        %v1497 = vrot.slane %v1496, 1
        %v1498 = vadd.f32 %v1496, %v1497
        %v1499 = vadd.f32 %v1473, %v1474
        %v1500 = vrot.slane %v1499, 4
        %v1501 = vadd.f32 %v1499, %v1500
        %v1502 = vrot.slane %v1501, 2
        %v1503 = vadd.f32 %v1501, %v1502
        %v1504 = vrot.slane %v1503, 1
        %v1505 = vadd.f32 %v1503, %v1504
        %v1506 = vadd.f32 %v1475, %v1476
        %v1507 = vrot.slane %v1506, 4
        %v1508 = vadd.f32 %v1506, %v1507
        %v1509 = vrot.slane %v1508, 2
        %v1510 = vadd.f32 %v1508, %v1509
        %v1511 = vrot.slane %v1510, 1
        %v1512 = vadd.f32 %v1510, %v1511
        %v1513 = vadd.f32 %v1477, %v1478
        %v1514 = vrot.slane %v1513, 4
        %v1515 = vadd.f32 %v1513, %v1514
        %v1516 = vrot.slane %v1515, 2
        %v1517 = vadd.f32 %v1515, %v1516
        %v1518 = vrot.slane %v1517, 1
        %v1519 = vadd.f32 %v1517, %v1518
        %v1520 = vadd.f32 %v1479, %v1480
        %v1521 = vrot.slane %v1520, 4
        %v1522 = vadd.f32 %v1520, %v1521
        %v1523 = vrot.slane %v1522, 2
        %v1524 = vadd.f32 %v1522, %v1523
        %v1525 = vrot.slane %v1524, 1
        %v1526 = vadd.f32 %v1524, %v1525
        %v1527 = vadd.f32 %v1481, %v1482
        %v1528 = vrot.slane %v1527, 4
        %v1529 = vadd.f32 %v1527, %v1528
        %v1530 = vrot.slane %v1529, 2
        %v1531 = vadd.f32 %v1529, %v1530
        %v1532 = vrot.slane %v1531, 1
        %v1533 = vadd.f32 %v1531, %v1532
        %v1534 = vadd.f32 %v1483, %v1484
        %v1535 = vrot.slane %v1534, 4
        %v1536 = vadd.f32 %v1534, %v1535
        %v1537 = vrot.slane %v1536, 2
        %v1538 = vadd.f32 %v1536, %v1537
        %v1539 = vrot.slane %v1538, 1
        %v1540 = vadd.f32 %v1538, %v1539
        %v1542 = vlaneseq
        %v1543 = vshrl.u32 %v1542, 7
        %v1544 = vsub.s32 0, %v1543
        %v1545 = vrot.slane %v1008, %v1544
        %v1547 = vmul.f32 %v1545, %v1012
        %v1549 = vrot.slane %v1547, 1
        %v1550 = vrot.slane %v1547, 2
        %v1551 = vrot.slane %v1547, 3
        %v1552 = vrot.slane %v1547, 4
        %v1553 = vrot.slane %v1547, 5
        %v1554 = vrot.slane %v1547, 6
        %v1555 = vrot.slane %v1547, 7
        %v1564 = vadd.f32 %v1491, %v1547
        %v1565 = vadd.f32 %v1498, %v1549
        %v1566 = vadd.f32 %v1505, %v1550
        %v1567 = vadd.f32 %v1512, %v1551
        %v1568 = vadd.f32 %v1519, %v1552
        %v1569 = vadd.f32 %v1526, %v1553
        %v1570 = vadd.f32 %v1533, %v1554
        %v1571 = vadd.f32 %v1540, %v1555
        %v1572 = vsub.f32 0.0, %v1013
        %v1573 = vmul.f32 %v1572, 1.442695
        %v1574 = vpow.pop %v1573
        %v1575 = vadd.f32 %v1574, 1.0
        %v1576 = vrcp.pop %v1575
        %v1577 = vmul.f32 1.0, %v1576
        %v1578 = vmul.f32 %v1013, %v1577
        %v1580 = vrot.slane %v1578, 1
        %v1581 = vrot.slane %v1578, 2
        %v1582 = vrot.slane %v1578, 3
        %v1583 = vrot.slane %v1578, 4
        %v1584 = vrot.slane %v1578, 5
        %v1585 = vrot.slane %v1578, 6
        %v1586 = vrot.slane %v1578, 7
        %v1595 = vmul.f32 %v1564, %v1578
        %v1596 = vmul.f32 %v1565, %v1580
        %v1597 = vmul.f32 %v1566, %v1581
        %v1598 = vmul.f32 %v1567, %v1582
        %v1599 = vmul.f32 %v1568, %v1583
        %v1600 = vmul.f32 %v1569, %v1584
        %v1601 = vmul.f32 %v1570, %v1585
        %v1602 = vmul.f32 %v1571, %v1586
        %v1603 = vpack.c.bf16 %v1595, %v1595
        %v1604 = vpack.c.bf16 %v1596, %v1596
        %v1605 = vpack.c.bf16 %v1597, %v1597
        %v1606 = vpack.c.bf16 %v1598, %v1598
        %v1607 = vpack.c.bf16 %v1599, %v1599
        %v1608 = vpack.c.bf16 %v1600, %v1600
        %v1609 = vpack.c.bf16 %v1601, %v1601
        %v1610 = vpack.c.bf16 %v1602, %v1602
        %v1611 = vld [vmem:[%s10] sm:$0xf]
        %v1612 = vld [vmem:[%s10 + $0x4] sm:$0xf]
        %v1613 = vld [vmem:[%s10 + $0x8] sm:$0xf]
        %v1614 = vld [vmem:[%s10 + $0xc] sm:$0xf]
        %v1615 = vld [vmem:[%s10 + $0x10] sm:$0xf]
        %v1616 = vld [vmem:[%s10 + $0x14] sm:$0xf]
        %v1617 = vld [vmem:[%s10 + $0x18] sm:$0xf]
        %v1618 = vld [vmem:[%s10 + $0x1c] sm:$0xf]
        %v1619 = vld [vmem:[%s10 + $0x20] sm:$0xf]
        %v1620 = vld [vmem:[%s10 + $0x24] sm:$0xf]
        %v1621 = vld [vmem:[%s10 + $0x28] sm:$0xf]
        %v1622 = vld [vmem:[%s10 + $0x2c] sm:$0xf]
        %v1623 = vld [vmem:[%s10 + $0x30] sm:$0xf]
        %v1624 = vld [vmem:[%s10 + $0x34] sm:$0xf]
        %v1625 = vld [vmem:[%s10 + $0x38] sm:$0xf]
        %v1626 = vld [vmem:[%s10 + $0x3c] sm:$0xf]
        %v1635 = vunpack.c.l.b16 %v1603
        %v1636 = vunpack.c.l.b16 %v1604
        %v1637 = vunpack.c.l.b16 %v1605
        %v1638 = vunpack.c.l.b16 %v1606
        %v1639 = vunpack.c.l.b16 %v1607
        %v1640 = vunpack.c.l.b16 %v1608
        %v1641 = vunpack.c.l.b16 %v1609
        %v1642 = vunpack.c.l.b16 %v1610
        %v1643 = vrot.slane %v1636, 7
        %vm1644 = vcmask 1041409
        %v1645 = vsel %vm1644, %v1643, %v1635
        %v1646 = vrot.slane %v1637, 6
        %vm1647 = vcmask 1042434
        %v1648 = vsel %vm1647, %v1646, %v1645
        %v1649 = vrot.slane %v1638, 5
        %vm1650 = vcmask 1043459
        %v1651 = vsel %vm1650, %v1649, %v1648
        %v1652 = vrot.slane %v1639, 4
        %vm1653 = vcmask 1044484
        %v1654 = vsel %vm1653, %v1652, %v1651
        %v1655 = vrot.slane %v1640, 3
        %vm1656 = vcmask 1045509
        %v1657 = vsel %vm1656, %v1655, %v1654
        %v1658 = vrot.slane %v1641, 2
        %vm1659 = vcmask 1046534
        %v1660 = vsel %vm1659, %v1658, %v1657
        %v1661 = vrot.slane %v1642, 1
        %vm1662 = vcmask 1047559
        %v1663 = vsel %vm1662, %v1661, %v1660
        %v1664 = vpack.c.b16 %v1663, %v1663
        %v1682 = vunpack.c.l.b16 %v1611
        %v1683 = vunpack.c.l.b16 %v1612
        %v1684 = vunpack.c.l.b16 %v1613
        %v1685 = vunpack.c.l.b16 %v1614
        %v1686 = vunpack.c.l.b16 %v1615
        %v1687 = vunpack.c.l.b16 %v1616
        %v1688 = vunpack.c.l.b16 %v1617
        %v1689 = vunpack.c.l.b16 %v1618
        %v1690 = vunpack.c.l.b16 %v1619
        %v1691 = vunpack.c.l.b16 %v1620
        %v1692 = vunpack.c.l.b16 %v1621
        %v1693 = vunpack.c.l.b16 %v1622
        %v1694 = vunpack.c.l.b16 %v1623
        %v1695 = vunpack.c.l.b16 %v1624
        %v1696 = vunpack.c.l.b16 %v1625
        %v1697 = vunpack.c.l.b16 %v1626
        %v1698 = vpack.c.b16 %v1683, %v1682
        %v1699 = vpack.c.b16 %v1685, %v1684
        %v1700 = vpack.c.b16 %v1687, %v1686
        %v1701 = vpack.c.b16 %v1689, %v1688
        %v1702 = vpack.c.b16 %v1691, %v1690
        %v1703 = vpack.c.b16 %v1693, %v1692
        %v1704 = vpack.c.b16 %v1695, %v1694
        %v1705 = vpack.c.b16 %v1697, %v1696
        %1714 = vmatprep.subr.bf16.mxu0 0
        %1715 = vmatpush1.bf16.msra.mxu0 %v1705
        %1716 = vmatprep.subr.bf16.mxu0 0
        %1717 = vmatpush1.bf16.msra.mxu0 %v1704
        %1718 = vmatprep.subr.bf16.mxu0 0
        %1719 = vmatpush1.bf16.msra.mxu0 %v1703
        %1720 = vmatprep.subr.bf16.mxu0 0
        %1721 = vmatpush1.bf16.msra.mxu0 %v1702
        %1722 = vmatprep.subr.bf16.mxu0 0
        %1723 = vmatpush1.bf16.msra.mxu0 %v1701
        %1724 = vmatprep.subr.bf16.mxu0 0
        %1725 = vmatpush1.bf16.msra.mxu0 %v1700
        %1726 = vmatprep.subr.bf16.mxu0 0
        %1727 = vmatpush1.bf16.msra.mxu0 %v1699
        %1728 = vmatprep.subr.bf16.mxu0 0
        %1729 = vmatpush1.bf16.msra.mxu0 %v1698
        %1730 = vmatprep.subr.bf16.mxu0 0
        %1731 = vmatpush2.bf16.msra.mxu0 0
        %1732 = vmatprep.subr.bf16.mxu0 0
        %1733 = vmatpush2.bf16.msra.mxu0 0
        %1734 = vmatprep.subr.bf16.mxu0 0
        %1735 = vmatpush2.bf16.msra.mxu0 0
        %1736 = vmatprep.subr.bf16.mxu0 0
        %1737 = vmatpush2.bf16.msra.mxu0 0
        %1738 = vmatprep.subr.bf16.mxu0 0
        %1739 = vmatpush2.bf16.msra.mxu0 0
        %1740 = vmatprep.subr.bf16.mxu0 0
        %1741 = vmatpush2.bf16.msra.mxu0 0
        %1742 = vmatprep.subr.bf16.mxu0 0
        %1743 = vmatpush2.bf16.msra.mxu0 0
        %1744 = vmatprep.subr.bf16.mxu0 0
        %1745 = vmatpush2.bf16.msra.mxu0 0
        %1746 = vmatprep.mubr.bf16.mxu0 0
        %1747 = vmatmul.mubr.bf16.gmra.mxu0 %v1664
        %v1748 = vpop.f32.mrf.mxu0
        %v1749 = vadd.f32 0.0, %v1748
        %v1750 = vpop.f32.mrf.mxu0
        %v1751 = vpop.f32.mrf.mxu0
        %v1752 = vpop.f32.mrf.mxu0
        %1753 = vdwg.mxu0
        %v1754 = vld [vmem:[%s428] sm:$0xff]
        %v1755 = vadd.f32 %v1754, %v1749
        %1756 = vst.msk [vmem:[%s486] sm:$0xff] %vm497, %v1755
        %1757 = vst [vmem:[#allocation8] sm:$0xff] %v1379
        %1758 = vst [vmem:[#allocation8 + $0x8] sm:$0xff] %v1380
        %s1759 = sand.u32 %s291, 1
        %s1760 = scalar_lea.sflag [#allocation11], %s1759
        %s1761 = sand.u32 %s291, 1
        %s1762 = smul.addr %s1761, 8
        %s1763 = scalar_lea.vmem [#allocation20], %s1762
        // Predicated region
        $region93: #{tpu_custom_call.1} parent=63 // pred_check
          %p1764 = pneg %p301
        $region94: #{tpu_custom_call.1} parent=63 // pred_check_branch
          %1766 = sbr.rel (%p1764) target = $region96
        $region95: #{tpu_custom_call.1} parent=63 // pred_region
          %s1768 = ssub.s32 128, 128
          %1769 = vsyncadd %s1760, %s1768
          %s1770 = smul.addr %s35, 2
          %s1771 = sadd.s32 %s36, %s1770
          %s1772 = smul.addr %s1771, 128
          %s1773 = scalar_lea.hbm %s11, %s1772
          %s1775 = sshll.u32 %s1763, 4
          %s1776 = int_to_ptr.vmem [resolvable:$true] %s1775
          %1778 = dma.vmem_to_hbm [thread:$0]  %s1776, 128, %s1773, %s1760
        $region96: #{tpu_custom_call.1} parent=63 // pred_fallthru
          _
      $region64: #{tpu_custom_call.1} parent=5 // pred_fallthru
        _
      %p1779 = scmp.le.s32.totalorder 2, %s26
      // Predicated region
      $region97: #{tpu_custom_call.1} parent=5 // pred_check
        %p1780 = pneg %p1779
      $region98: #{tpu_custom_call.1} parent=5 // pred_check_branch
        %1782 = sbr.rel (%p1780) target = $region100
      $region99: #{tpu_custom_call.1} parent=5 // pred_region
        %s1783 = ssub.s32 %s26, 2
        // Predicated region
        $region101: #{tpu_custom_call.1} parent=99 // pred_check
          %p1784 = pneg %p307
        $region102: #{tpu_custom_call.1} parent=99 // pred_check_branch
          %1786 = sbr.rel (%p1784) target = $region104
        $region103: #{tpu_custom_call.1} parent=99 // pred_region
          %s1787 = sand.u32 %s292, 1
          %s1788 = scalar_lea.sflag [#allocation11], %s1787
          %s1789 = sand.u32 %s292, 1
          %s1790 = smul.addr %s1789, 8
          %s1791 = scalar_lea.vmem [#allocation20], %s1790
          %1792 = dma.done %s1788, 128
        $region104: #{tpu_custom_call.1} parent=99 // pred_fallthru
          _
      $region100: #{tpu_custom_call.1} parent=5 // pred_fallthru
        _
    $region6: #{tpu_custom_call.1} parent=1 // loop_footer
      %s30 = sadd.s32 1, %s26
    $region7: #{tpu_custom_call.1} parent=1 // loop_footer_branch
      %25 = sbr.rel target = $region3
    $region8: #{tpu_custom_call.1} parent=1 // loop_exit
      _
    %1793 = vsyncpa [#allocation10], 1
    %s1794 = scalar_lea.sflag [#allocation10], 1
    %1795 = vsyncpa %s1794, 1
    %1796 = vsyncpa [#allocation13], 1
    %1797 = vsyncpa [#allocation16], 1
    %1798 = vsyncpa [#allocation19], 1
    %1799 = vsyncpa [#allocation11], 1
    %s1800 = scalar_lea.sflag [#allocation11], 1
    %1801 = vsyncpa %s1800, 1

</llo_original>
